<compile_context>
chip_gen: v6e
topology: v6e:2x2x1
jax: 0.10.0
libtpu: 0.0.40
codegen_flags: <defaults>
</compile_context>

<pallas_src>
import functools
import math

import numpy as np
import jax
import jax.numpy as jnp
from jax.experimental import pallas as pl
from jax.experimental.pallas import tpu as pltpu


def _adaptive_bins(in_size, out_size):
    """PyTorch AdaptiveAvgPool bin boundaries: [floor(i*I/O), ceil((i+1)*I/O))."""
    return tuple(((i * in_size) // out_size,
                  ((i + 1) * in_size + out_size - 1) // out_size)
                 for i in range(out_size))


def _build_pool_matrices(H, W, h_bins, w_bins):
    """0/1 membership matrix for the adaptive 3x3 pool (9 bins, row-major)."""
    HW = H * W
    mat = np.zeros((HW, 9), np.float32)
    counts = np.zeros((1, 9), np.float32)
    col = 0
    for hs, he in h_bins:
        for ws, we in w_bins:
            m = np.zeros((H, W), np.float32)
            m[hs:he, ws:we] = 1.0
            mat[:, col] = m.reshape(HW)
            counts[0, col] = (he - hs) * (we - ws)
            col += 1
    return mat, (1.0 / counts)


def route_func_kernel(x_ref, poolg_ref, poolb_ref, invb_ref,
                      w1a_ref, w1b_ref, w2_ref, w3_ref, out_ref, *,
                      num_experts, out_channels, activation, temperature):
    hi = jax.lax.Precision.HIGHEST
    x = x_ref[0]                                    # (C, H*W), lanes = H*W
    hw = x.shape[-1]

    # Adaptive pooling as lane-dense MXU matmuls against 0/1 membership
    # matrices; 1/count normalization is applied in f32 afterwards.
    a1 = jax.lax.dot_general(x, poolg_ref[...], (((1,), (0,)), ((), ())),
                             preferred_element_type=jnp.float32,
                             precision=hi) * (1.0 / hw)            # (C, 1)
    a3 = jax.lax.dot_general(x, poolb_ref[...], (((1,), (0,)), ((), ())),
                             preferred_element_type=jnp.float32,
                             precision=hi) * invb_ref[...]         # (C, 9)

    # 1x1 conv (2C -> S) split into its a1 / a3 halves, + ReLU.      (S, 9)
    y = jax.lax.dot_general(w1b_ref[...], a3, (((1,), (0,)), ((), ())),
                            preferred_element_type=jnp.float32, precision=hi)
    y = y + jax.lax.dot_general(w1a_ref[...], a1, (((1,), (0,)), ((), ())),
                                preferred_element_type=jnp.float32,
                                precision=hi)                      # + (S, 1)
    y = jnp.maximum(y, 0.0)

    # Depthwise 3x3 conv (valid: 3x3 -> 1x1) + ReLU.                  (S, 1)
    z = jnp.maximum(jnp.sum(y * w2_ref[...], axis=1, keepdims=True), 0.0)

    # Final 1x1 conv (S -> E*O).                                      (E*O, 1)
    logits = jax.lax.dot_general(w3_ref[...], z, (((1,), (0,)), ((), ())),
                                 preferred_element_type=jnp.float32,
                                 precision=hi)

    if activation == 'sigmoid':
        att = jax.nn.sigmoid(logits)
    else:
        # Softmax(dim=2) of (logits * temperature); channel index = e*O + o,
        # so groups are contiguous runs of out_channels along the column.
        l = logits * temperature
        eid = jax.lax.broadcasted_iota(jnp.int32, l.shape, 0) // out_channels
        att = jnp.zeros_like(l)
        for e in range(num_experts):
            mask = eid == e
            m_e = jnp.max(jnp.where(mask, l, -jnp.inf), axis=0, keepdims=True)
            p = jnp.where(mask, jnp.exp(l - m_e), 0.0)
            att = att + p / jnp.sum(p, axis=0, keepdims=True)

    out_ref[0] = att.astype(out_ref.dtype)


def route_func_forward(x, w1, w2_dw, w3, *, num_experts, out_channels,
                       activation='sigmoid', temperature=16):
    """x: (B, C, H, W) NCHW.
       w1: (S, 2*C, 1, 1)   pointwise conv weight (first C inputs pair with a1)
       w2_dw: (S, 1, 3, 3)  depthwise conv weight
       w3: (E*O, S, 1, 1)   pointwise conv weight
       returns (B, E*O, 1, 1) float32."""
    B, C, H, W = x.shape
    S = w1.shape[0]
    EO = num_experts * out_channels
    HW = H * W

    h_bins = _adaptive_bins(H, 3)
    w_bins = _adaptive_bins(W, 3)
    poolb_np, invb_np = _build_pool_matrices(H, W, h_bins, w_bins)

    # Keep x and the exact 0/1 membership matrices in x's dtype (bf16 inputs
    # stay bf16 on the MXU); normalization / accumulation stays f32.
    x_flat = x.reshape(B, C, HW)                        # free view of NCHW
    pool_g = jnp.ones((HW, 1), x.dtype)                 # global-average column
    pool_b = jnp.asarray(poolb_np, x.dtype)             # (HW, 9) 3x3 bins
    inv_b = jnp.asarray(invb_np, jnp.float32)           # (1, 9)

    w1_m = w1.reshape(S, 2 * C).astype(jnp.float32)
    w1a = w1_m[:, :C]                                   # (S, C) pairs with a1
    w1b = w1_m[:, C:]                                   # (S, C) pairs with a3
    w2_m = w2_dw.reshape(S, 9).astype(jnp.float32)      # (S, 9)
    w3_m = w3.reshape(EO, S).astype(jnp.float32)        # (EO, S)

    kernel = functools.partial(
        route_func_kernel, num_experts=num_experts, out_channels=out_channels,
        activation=activation, temperature=temperature)

    # NOTE: for very large H*W, add a last "arbitrary" grid axis over spatial
    # chunks and accumulate bin sums in a small VMEM scratch; one image per
    # step is plenty for routing-sized inputs and fits v7x's 64 MiB VMEM.
    out = pl.pallas_call(
        kernel,
        out_shape=jax.ShapeDtypeStruct((B, EO, 1), jnp.float32),
        grid=(B,),
        in_specs=[
            pl.BlockSpec((1, C, HW), lambda b: (b, 0, 0)),   # x: one image/step
            pl.BlockSpec((HW, 1), lambda b: (0, 0)),
            pl.BlockSpec((HW, 9), lambda b: (0, 0)),
            pl.BlockSpec((1, 9), lambda b: (0, 0)),
            pl.BlockSpec((S, C), lambda b: (0, 0)),
            pl.BlockSpec((S, C), lambda b: (0, 0)),
            pl.BlockSpec((S, 9), lambda b: (0, 0)),
            pl.BlockSpec((EO, S), lambda b: (0, 0)),
        ],
        out_specs=pl.BlockSpec((1, EO, 1), lambda b: (b, 0, 0)),
        compiler_params=pltpu.CompilerParams(
            dimension_semantics=("parallel",),   # v7x: shard batch over 2 TCs
            vmem_limit_bytes=32 * 1024 * 1024,
        ),
    )(x_flat, pool_g, pool_b, inv_b, w1a, w1b, w2_m, w3_m)

    return out.reshape(B, EO, 1, 1)


def _reference_forward(x, w1, w2_dw, w3, *, num_experts, out_channels,
                       activation='sigmoid', temperature=16):
    """Pure-JAX reference of the PyTorch forward."""
    B, C, H, W = x.shape
    S = w1.shape[0]
    EO = num_experts * out_channels
    hi = jax.lax.Precision.HIGHEST
    h_bins = _adaptive_bins(H, 3)
    w_bins = _adaptive_bins(W, 3)
    a1 = jnp.mean(x, axis=(2, 3))
    a3 = jnp.stack([jnp.stack([jnp.mean(x[:, :, hs:he, ws:we], axis=(2, 3))
                               for (ws, we) in w_bins], axis=-1)
                    for (hs, he) in h_bins], axis=-2)               # (B,C,3,3)
    a1e = jnp.broadcast_to(a1[:, :, None, None], a3.shape)
    att = jnp.concatenate([a1e, a3], axis=1)                        # (B,2C,3,3)
    y = jnp.einsum('bchw,sc->bshw', att, w1.reshape(S, 2 * C), precision=hi)
    y = jnp.maximum(y, 0.0)
    z = jnp.einsum('bshw,shw->bs', y, w2_dw.reshape(S, 3, 3), precision=hi)
    z = jnp.maximum(z, 0.0)
    logits = jnp.einsum('bs,os->bo', z, w3.reshape(EO, S), precision=hi)
    if activation == 'sigmoid':
        att_out = jax.nn.sigmoid(logits)
    else:
        l = logits.reshape(B, num_experts, out_channels) * temperature
        att_out = jax.nn.softmax(l, axis=2).reshape(B, EO)
    return att_out.reshape(B, EO, 1, 1)


if __name__ == "__main__":
    # Module hyperparameters (small synthetic config).
    in_channels = 4
    out_channels = 4
    num_experts = 3
    reduction = 16
    squeeze_channels = max(in_channels // reduction, reduction)     # = 16
    EO = num_experts * out_channels                                 # = 12

    B, H, W = 2, 16, 16
    key = jax.random.PRNGKey(0)
    kx, k1, k2, k3 = jax.random.split(key, 4)

    x = jax.random.normal(kx, (B, in_channels, H, W), dtype=jnp.float32)

    # Deterministic synthetic conv weights (shapes match nn.Conv2d weights).
    def _init(k, shape):
        fan_in = 1
        for d in shape[1:]:
            fan_in *= d
        bound = 1.0 / math.sqrt(fan_in)
        return jax.random.uniform(k, shape, jnp.float32, -bound, bound)

    w1 = _init(k1, (squeeze_channels, 2 * in_channels, 1, 1))
    w2_dw = _init(k2, (squeeze_channels, 1, 3, 3))
    w3 = _init(k3, (EO, squeeze_channels, 1, 1))

    for act in ('sigmoid', 'softmax'):
        out = route_func_forward(x, w1, w2_dw, w3,
                                 num_experts=num_experts,
                                 out_channels=out_channels,
                                 activation=act)
        out = jax.block_until_ready(out)
        ref = _reference_forward(x, w1, w2_dw, w3,
                                 num_experts=num_experts,
                                 out_channels=out_channels,
                                 activation=act)
        assert out.shape == (B, EO, 1, 1)
        assert jnp.allclose(out, ref, rtol=1e-3, atol=1e-3), act

    print("KERNEL_OK")
</pallas_src>

<mosaic_0001>
module attributes {stable_mosaic.version = 11 : i64} {
  func.func @route_func_kernel(%arg0: i32, %arg1: memref<1x4x256xf32, #tpu.memory_space<vmem>>, %arg2: memref<256x1xf32, #tpu.memory_space<vmem>>, %arg3: memref<256x9xf32, #tpu.memory_space<vmem>>, %arg4: memref<1x9xf32, #tpu.memory_space<vmem>>, %arg5: memref<16x4xf32, #tpu.memory_space<vmem>>, %arg6: memref<16x4xf32, #tpu.memory_space<vmem>>, %arg7: memref<16x9xf32, #tpu.memory_space<vmem>>, %arg8: memref<12x16xf32, #tpu.memory_space<vmem>>, %arg9: memref<1x12x1xf32, #tpu.memory_space<vmem>>) attributes {dimension_semantics = [#tpu.dimension_semantics<parallel>], iteration_bounds = array<i64: 2>, scalar_prefetch = 0 : i64, scratch_operands = 0 : i64, tpu.core_type = #tpu.core_type<tc>, window_params = [{transform_indices = @transform_0, window_bounds = array<i64: 1, 4, 256>}, {pipeline_mode = #tpu.pipeline_mode<synchronous>, transform_indices = @transform_1, window_bounds = array<i64: 256, 1>}, {pipeline_mode = #tpu.pipeline_mode<synchronous>, transform_indices = @transform_2, window_bounds = array<i64: 256, 9>}, {pipeline_mode = #tpu.pipeline_mode<synchronous>, transform_indices = @transform_3, window_bounds = array<i64: 1, 9>}, {pipeline_mode = #tpu.pipeline_mode<synchronous>, transform_indices = @transform_4, window_bounds = array<i64: 16, 4>}, {pipeline_mode = #tpu.pipeline_mode<synchronous>, transform_indices = @transform_5, window_bounds = array<i64: 16, 4>}, {pipeline_mode = #tpu.pipeline_mode<synchronous>, transform_indices = @transform_6, window_bounds = array<i64: 16, 9>}, {pipeline_mode = #tpu.pipeline_mode<synchronous>, transform_indices = @transform_7, window_bounds = array<i64: 12, 16>}, {transform_indices = @transform_8, window_bounds = array<i64: 1, 12, 1>}]} {
    %c0 = arith.constant 0 : index
    %c0_0 = arith.constant 0 : index
    %c0_1 = arith.constant 0 : index
    %0 = vector.load %arg1[%c0, %c0_0, %c0_1] : memref<1x4x256xf32, #tpu.memory_space<vmem>>, vector<1x4x256xf32>
    %1 = vector.shape_cast %0 : vector<1x4x256xf32> to vector<4x256xf32>
    %c0_2 = arith.constant 0 : index
    %c0_3 = arith.constant 0 : index
    %2 = vector.load %arg2[%c0_2, %c0_3] : memref<256x1xf32, #tpu.memory_space<vmem>>, vector<256x1xf32>
    %cst = arith.constant dense<0.000000e+00> : vector<4x1xf32>
    %3 = tpu.matmul %1, %2, %cst {dimension_numbers = #tpu.dot_dimension_numbers<[1], [0], [0], [1], [0, 0, 1, 1], [], []>, precision = #tpu.contract_precision<fp32>} : vector<4x256xf32>, vector<256x1xf32>, vector<4x1xf32> -> vector<4x1xf32>
    %cst_4 = arith.constant 3.906250e-03 : f32
    %4 = vector.broadcast %cst_4 : f32 to vector<4x1xf32>
    %5 = arith.mulf %3, %4 : vector<4x1xf32>
    %c0_5 = arith.constant 0 : index
    %c0_6 = arith.constant 0 : index
    %6 = vector.load %arg3[%c0_5, %c0_6] : memref<256x9xf32, #tpu.memory_space<vmem>>, vector<256x9xf32>
    %cst_7 = arith.constant dense<0.000000e+00> : vector<4x9xf32>
    %7 = tpu.matmul %1, %6, %cst_7 {dimension_numbers = #tpu.dot_dimension_numbers<[1], [0], [0], [1], [0, 0, 1, 1], [], []>, precision = #tpu.contract_precision<fp32>} : vector<4x256xf32>, vector<256x9xf32>, vector<4x9xf32> -> vector<4x9xf32>
    %c0_8 = arith.constant 0 : index
    %c0_9 = arith.constant 0 : index
    %8 = vector.load %arg4[%c0_8, %c0_9] : memref<1x9xf32, #tpu.memory_space<vmem>>, vector<1x9xf32>
    %9 = vector.broadcast %8 : vector<1x9xf32> to vector<4x9xf32>
    %10 = arith.mulf %7, %9 : vector<4x9xf32>
    %c0_10 = arith.constant 0 : index
    %c0_11 = arith.constant 0 : index
    %11 = vector.load %arg6[%c0_10, %c0_11] : memref<16x4xf32, #tpu.memory_space<vmem>>, vector<16x4xf32>
    %cst_12 = arith.constant dense<0.000000e+00> : vector<16x9xf32>
    %12 = tpu.matmul %11, %10, %cst_12 {dimension_numbers = #tpu.dot_dimension_numbers<[1], [0], [0], [1], [0, 0, 1, 1], [], []>, precision = #tpu.contract_precision<fp32>} : vector<16x4xf32>, vector<4x9xf32>, vector<16x9xf32> -> vector<16x9xf32>
    %c0_13 = arith.constant 0 : index
    %c0_14 = arith.constant 0 : index
    %13 = vector.load %arg5[%c0_13, %c0_14] : memref<16x4xf32, #tpu.memory_space<vmem>>, vector<16x4xf32>
    %cst_15 = arith.constant dense<0.000000e+00> : vector<16x1xf32>
    %14 = tpu.matmul %13, %5, %cst_15 {dimension_numbers = #tpu.dot_dimension_numbers<[1], [0], [0], [1], [0, 0, 1, 1], [], []>, precision = #tpu.contract_precision<fp32>} : vector<16x4xf32>, vector<4x1xf32>, vector<16x1xf32> -> vector<16x1xf32>
    %15 = vector.broadcast %14 : vector<16x1xf32> to vector<16x9xf32>
    %16 = arith.addf %12, %15 : vector<16x9xf32>
    %cst_16 = arith.constant 0.000000e+00 : f32
    %17 = vector.broadcast %cst_16 : f32 to vector<16x9xf32>
    %18 = arith.maximumf %16, %17 : vector<16x9xf32>
    %c0_17 = arith.constant 0 : index
    %c0_18 = arith.constant 0 : index
    %19 = vector.load %arg7[%c0_17, %c0_18] : memref<16x9xf32, #tpu.memory_space<vmem>>, vector<16x9xf32>
    %20 = arith.mulf %18, %19 : vector<16x9xf32>
    %cst_19 = arith.constant dense<0.000000e+00> : vector<16xf32>
    %21 = vector.multi_reduction <add>, %20, %cst_19 [1] : vector<16x9xf32> to vector<16xf32>
    %22 = vector.shape_cast %21 : vector<16xf32> to vector<16x1xf32>
    %cst_20 = arith.constant 0.000000e+00 : f32
    %23 = vector.broadcast %cst_20 : f32 to vector<16x1xf32>
    %24 = arith.maximumf %22, %23 : vector<16x1xf32>
    %c0_21 = arith.constant 0 : index
    %c0_22 = arith.constant 0 : index
    %25 = vector.load %arg8[%c0_21, %c0_22] : memref<12x16xf32, #tpu.memory_space<vmem>>, vector<12x16xf32>
    %cst_23 = arith.constant dense<0.000000e+00> : vector<12x1xf32>
    %26 = tpu.matmul %25, %24, %cst_23 {dimension_numbers = #tpu.dot_dimension_numbers<[1], [0], [0], [1], [0, 0, 1, 1], [], []>, precision = #tpu.contract_precision<fp32>} : vector<12x16xf32>, vector<16x1xf32>, vector<12x1xf32> -> vector<12x1xf32>
    %27 = arith.negf %26 : vector<12x1xf32>
    %28 = math.exp %27 : vector<12x1xf32>
    %cst_24 = arith.constant 1.000000e+00 : f32
    %29 = vector.broadcast %cst_24 : f32 to vector<12x1xf32>
    %30 = arith.addf %29, %28 : vector<12x1xf32>
    %31 = arith.divf %29, %30 : vector<12x1xf32>
    %c0_25 = arith.constant 0 : index
    %c0_26 = arith.constant 0 : index
    %c0_27 = arith.constant 0 : index
    %32 = vector.load %arg9[%c0_25, %c0_26, %c0_27] : memref<1x12x1xf32, #tpu.memory_space<vmem>>, vector<1x12x1xf32>
    %33 = vector.shape_cast %32 : vector<1x12x1xf32> to vector<12x1xf32>
    %34 = vector.shape_cast %31 : vector<12x1xf32> to vector<1x12x1xf32>
    tpu.vector_store %arg9[%c0_25, %c0_26, %c0_27], %34 {strides = array<i32>} : memref<1x12x1xf32, #tpu.memory_space<vmem>>, vector<1x12x1xf32>,
    return
  }
  func.func @transform_0(%arg0: i32) -> (i32, i32, i32) {
    %c0_i32 = arith.constant 0 : i32
    %c0_i32_0 = arith.constant 0 : i32
    %c0_i32_1 = arith.constant 0 : i32
    return %arg0, %c0_i32, %c0_i32_0 : i32, i32, i32
  }
  func.func @transform_1(%arg0: i32) -> (i32, i32) {
    %c0_i32 = arith.constant 0 : i32
    %c0_i32_0 = arith.constant 0 : i32
    %c0_i32_1 = arith.constant 0 : i32
    return %c0_i32, %c0_i32_0 : i32, i32
  }
  func.func @transform_2(%arg0: i32) -> (i32, i32) {
    %c0_i32 = arith.constant 0 : i32
    %c0_i32_0 = arith.constant 0 : i32
    %c0_i32_1 = arith.constant 0 : i32
    return %c0_i32, %c0_i32_0 : i32, i32
  }
  func.func @transform_3(%arg0: i32) -> (i32, i32) {
    %c0_i32 = arith.constant 0 : i32
    %c0_i32_0 = arith.constant 0 : i32
    %c0_i32_1 = arith.constant 0 : i32
    return %c0_i32, %c0_i32_0 : i32, i32
  }
  func.func @transform_4(%arg0: i32) -> (i32, i32) {
    %c0_i32 = arith.constant 0 : i32
    %c0_i32_0 = arith.constant 0 : i32
    %c0_i32_1 = arith.constant 0 : i32
    return %c0_i32, %c0_i32_0 : i32, i32
  }
  func.func @transform_5(%arg0: i32) -> (i32, i32) {
    %c0_i32 = arith.constant 0 : i32
    %c0_i32_0 = arith.constant 0 : i32
    %c0_i32_1 = arith.constant 0 : i32
    return %c0_i32, %c0_i32_0 : i32, i32
  }
  func.func @transform_6(%arg0: i32) -> (i32, i32) {
    %c0_i32 = arith.constant 0 : i32
    %c0_i32_0 = arith.constant 0 : i32
    %c0_i32_1 = arith.constant 0 : i32
    return %c0_i32, %c0_i32_0 : i32, i32
  }
  func.func @transform_7(%arg0: i32) -> (i32, i32) {
    %c0_i32 = arith.constant 0 : i32
    %c0_i32_0 = arith.constant 0 : i32
    %c0_i32_1 = arith.constant 0 : i32
    return %c0_i32, %c0_i32_0 : i32, i32
  }
  func.func @transform_8(%arg0: i32) -> (i32, i32, i32) {
    %c0_i32 = arith.constant 0 : i32
    %c0_i32_0 = arith.constant 0 : i32
    %c0_i32_1 = arith.constant 0 : i32
    return %arg0, %c0_i32, %c0_i32_0 : i32, i32, i32
  }
}

</mosaic_0001>

<llo_original>
// kernel: tpu_custom_call.1
$region0: #{tpu_custom_call.1}
  #allocation0 [shape = 'u32[]', space=smem, size = 0x4, offset = 0x4, fixed_abs, tag = 'smem constant byte address 0x4 - core index']
  #allocation1 [shape = 'u32[144,128]{1,0:T(1,128)}', space=vmem, size = 0x12000, scoped, tag = 'internal scratch']
  %s0 = inlined_call_operand.vmem [shape: f32[2,4,256], index: 0, kind: input, shape index: {}]
  %s1 = inlined_call_operand.vmem [shape: f32[256,1], index: 1, kind: input, shape index: {}]
  %s2 = inlined_call_operand.vmem [shape: f32[256,9], index: 2, kind: input, shape index: {}]
  %s3 = inlined_call_operand.vmem [shape: f32[1,9], index: 3, kind: input, shape index: {}]
  %s4 = inlined_call_operand.vmem [shape: f32[16,4], index: 4, kind: input, shape index: {}]
  %s5 = inlined_call_operand.vmem [shape: f32[16,4], index: 5, kind: input, shape index: {}]
  %s6 = inlined_call_operand.vmem [shape: f32[16,9], index: 6, kind: input, shape index: {}]
  %s7 = inlined_call_operand.vmem [shape: f32[12,16], index: 7, kind: input, shape index: {}]
  %s8 = inlined_call_operand.vmem [shape: f32[2,12,1], index: 8, kind: output, shape index: {}]
  %s9 = sld [smem:[#allocation0]]
  $region65: #{tpu_custom_call.1} parent=0
    _
  %s11 = ssub.s32 1, %s9
  %s12 = scalar_select 0, %s11, %s9
  loop: start=0, step=1, limit=4
  $region2: #{tpu_custom_call.1} parent=0 // loop_pre_header
    _
  $region3: #{tpu_custom_call.1} parent=0 // loop_header
    %s14 = sphi 0, %s18
    %p15 = scmp.ge.s32.totalorder %s14, 4
    %s24 = sphi 0, %s26
    %s27 = sphi 0, %s24
    %s28 = sphi 0, %s27
    %s44 = sphi 0, %s28
    %s48 = sphi 0, %s48
    %s50 = sphi 0, %s48
    %s51 = sphi 0, %s50
    %s65 = sphi 0, %s51
    %s69 = sphi 0, %s69
    %s71 = sphi 0, %s69
    %s72 = sphi 0, %s71
    %s86 = sphi 0, %s72
    %s90 = sphi 0, %s90
    %s92 = sphi 0, %s90
    %s93 = sphi 0, %s92
    %s107 = sphi 0, %s93
    %s111 = sphi 0, %s111
    %s113 = sphi 0, %s111
    %s114 = sphi 0, %s113
    %s128 = sphi 0, %s114
    %s132 = sphi 0, %s132
    %s134 = sphi 0, %s132
    %s135 = sphi 0, %s134
    %s149 = sphi 0, %s135
    %s153 = sphi 0, %s153
    %s155 = sphi 0, %s153
    %s156 = sphi 0, %s155
    %s170 = sphi 0, %s156
    %s174 = sphi 0, %s174
    %s176 = sphi 0, %s174
    %s177 = sphi 0, %s176
    %s191 = sphi 0, %s177
    %s197 = sphi 0, %s199
    %s200 = sphi 0, %s197
    %s201 = sphi 0, %s200
    %s217 = sphi 0, %s201
  $region4: #{tpu_custom_call.1} parent=0 // loop_header_branch
    %17 = sbr.rel (%p15) target = $region8
  $region5: #{tpu_custom_call.1} parent=0 // loop_body
    %s19 = ssub.s32 %s14, 1
    %s20 = ssub.s32 %s14, 2
    %s21 = sadd.s32 %s14, 1
    %s22 = ssub.s32 %s14, %s21
    %p23 = scmp.eq.s32.totalorder %s22, 0
    %s25 = sadd.s32 %s24, 1
    %s26 = scalar_select %p23, %s24, %s25
    %p29 = pneg %p23
    %p30 = scmp.eq.s32.totalorder %s14, 1
    %p31 = por %p29, %p30
    %p32 = scmp.ne.s32.totalorder %s24, %s27
    %p33 = scmp.eq.s32.totalorder %s14, 0
    %p34 = por %p32, %p33
    %p35 = scmp.ne.s32.totalorder %s24, %s27
    %p36 = scmp.eq.s32.totalorder %s19, 1
    %p37 = por %p35, %p36
    %p38 = scmp.ne.s32.totalorder %s27, %s28
    %p39 = scmp.eq.s32.totalorder %s19, 0
    %p40 = por %p38, %p39
    %p41 = scmp.ne.s32.totalorder %s27, %s28
    %p42 = scmp.eq.s32.totalorder %s20, 1
    %p43 = por %p41, %p42
    %p45 = scmp.ne.s32.totalorder %s28, %s44
    %p46 = scmp.eq.s32.totalorder %s20, 0
    %p47 = por %p45, %p46
    %s49 = sadd.s32 %s48, 1
    %p52 = scmp.eq.s32.totalorder %s14, 1
    %p53 = scmp.ne.s32.totalorder %s48, %s50
    %p54 = scmp.eq.s32.totalorder %s14, 0
    %p55 = por %p53, %p54
    %p56 = scmp.ne.s32.totalorder %s48, %s50
    %p57 = scmp.eq.s32.totalorder %s19, 1
    %p58 = por %p56, %p57
    %p59 = scmp.ne.s32.totalorder %s50, %s51
    %p60 = scmp.eq.s32.totalorder %s19, 0
    %p61 = por %p59, %p60
    %p62 = scmp.ne.s32.totalorder %s50, %s51
    %p63 = scmp.eq.s32.totalorder %s20, 1
    %p64 = por %p62, %p63
    %p66 = scmp.ne.s32.totalorder %s51, %s65
    %p67 = scmp.eq.s32.totalorder %s20, 0
    %p68 = por %p66, %p67
    %s70 = sadd.s32 %s69, 1
    %p73 = scmp.eq.s32.totalorder %s14, 1
    %p74 = scmp.ne.s32.totalorder %s69, %s71
    %p75 = scmp.eq.s32.totalorder %s14, 0
    %p76 = por %p74, %p75
    %p77 = scmp.ne.s32.totalorder %s69, %s71
    %p78 = scmp.eq.s32.totalorder %s19, 1
    %p79 = por %p77, %p78
    %p80 = scmp.ne.s32.totalorder %s71, %s72
    %p81 = scmp.eq.s32.totalorder %s19, 0
    %p82 = por %p80, %p81
    %p83 = scmp.ne.s32.totalorder %s71, %s72
    %p84 = scmp.eq.s32.totalorder %s20, 1
    %p85 = por %p83, %p84
    %p87 = scmp.ne.s32.totalorder %s72, %s86
    %p88 = scmp.eq.s32.totalorder %s20, 0
    %p89 = por %p87, %p88
    %s91 = sadd.s32 %s90, 1
    %p94 = scmp.eq.s32.totalorder %s14, 1
    %p95 = scmp.ne.s32.totalorder %s90, %s92
    %p96 = scmp.eq.s32.totalorder %s14, 0
    %p97 = por %p95, %p96
    %p98 = scmp.ne.s32.totalorder %s90, %s92
    %p99 = scmp.eq.s32.totalorder %s19, 1
    %p100 = por %p98, %p99
    %p101 = scmp.ne.s32.totalorder %s92, %s93
    %p102 = scmp.eq.s32.totalorder %s19, 0
    %p103 = por %p101, %p102
    %p104 = scmp.ne.s32.totalorder %s92, %s93
    %p105 = scmp.eq.s32.totalorder %s20, 1
    %p106 = por %p104, %p105
    %p108 = scmp.ne.s32.totalorder %s93, %s107
    %p109 = scmp.eq.s32.totalorder %s20, 0
    %p110 = por %p108, %p109
    %s112 = sadd.s32 %s111, 1
    %p115 = scmp.eq.s32.totalorder %s14, 1
    %p116 = scmp.ne.s32.totalorder %s111, %s113
    %p117 = scmp.eq.s32.totalorder %s14, 0
    %p118 = por %p116, %p117
    %p119 = scmp.ne.s32.totalorder %s111, %s113
    %p120 = scmp.eq.s32.totalorder %s19, 1
    %p121 = por %p119, %p120
    %p122 = scmp.ne.s32.totalorder %s113, %s114
    %p123 = scmp.eq.s32.totalorder %s19, 0
    %p124 = por %p122, %p123
    %p125 = scmp.ne.s32.totalorder %s113, %s114
    %p126 = scmp.eq.s32.totalorder %s20, 1
    %p127 = por %p125, %p126
    %p129 = scmp.ne.s32.totalorder %s114, %s128
    %p130 = scmp.eq.s32.totalorder %s20, 0
    %p131 = por %p129, %p130
    %s133 = sadd.s32 %s132, 1
    %p136 = scmp.eq.s32.totalorder %s14, 1
    %p137 = scmp.ne.s32.totalorder %s132, %s134
    %p138 = scmp.eq.s32.totalorder %s14, 0
    %p139 = por %p137, %p138
    %p140 = scmp.ne.s32.totalorder %s132, %s134
    %p141 = scmp.eq.s32.totalorder %s19, 1
    %p142 = por %p140, %p141
    %p143 = scmp.ne.s32.totalorder %s134, %s135
    %p144 = scmp.eq.s32.totalorder %s19, 0
    %p145 = por %p143, %p144
    %p146 = scmp.ne.s32.totalorder %s134, %s135
    %p147 = scmp.eq.s32.totalorder %s20, 1
    %p148 = por %p146, %p147
    %p150 = scmp.ne.s32.totalorder %s135, %s149
    %p151 = scmp.eq.s32.totalorder %s20, 0
    %p152 = por %p150, %p151
    %s154 = sadd.s32 %s153, 1
    %p157 = scmp.eq.s32.totalorder %s14, 1
    %p158 = scmp.ne.s32.totalorder %s153, %s155
    %p159 = scmp.eq.s32.totalorder %s14, 0
    %p160 = por %p158, %p159
    %p161 = scmp.ne.s32.totalorder %s153, %s155
    %p162 = scmp.eq.s32.totalorder %s19, 1
    %p163 = por %p161, %p162
    %p164 = scmp.ne.s32.totalorder %s155, %s156
    %p165 = scmp.eq.s32.totalorder %s19, 0
    %p166 = por %p164, %p165
    %p167 = scmp.ne.s32.totalorder %s155, %s156
    %p168 = scmp.eq.s32.totalorder %s20, 1
    %p169 = por %p167, %p168
    %p171 = scmp.ne.s32.totalorder %s156, %s170
    %p172 = scmp.eq.s32.totalorder %s20, 0
    %p173 = por %p171, %p172
    %s175 = sadd.s32 %s174, 1
    %p178 = scmp.eq.s32.totalorder %s14, 1
    %p179 = scmp.ne.s32.totalorder %s174, %s176
    %p180 = scmp.eq.s32.totalorder %s14, 0
    %p181 = por %p179, %p180
    %p182 = scmp.ne.s32.totalorder %s174, %s176
    %p183 = scmp.eq.s32.totalorder %s19, 1
    %p184 = por %p182, %p183
    %p185 = scmp.ne.s32.totalorder %s176, %s177
    %p186 = scmp.eq.s32.totalorder %s19, 0
    %p187 = por %p185, %p186
    %p188 = scmp.ne.s32.totalorder %s176, %s177
    %p189 = scmp.eq.s32.totalorder %s20, 1
    %p190 = por %p188, %p189
    %p192 = scmp.ne.s32.totalorder %s177, %s191
    %p193 = scmp.eq.s32.totalorder %s20, 0
    %p194 = por %p192, %p193
    %s195 = ssub.s32 %s14, %s21
    %p196 = scmp.eq.s32.totalorder %s195, 0
    %s198 = sadd.s32 %s197, 1
    %s199 = scalar_select %p196, %s197, %s198
    %p202 = pneg %p196
    %p203 = scmp.eq.s32.totalorder %s14, 1
    %p204 = por %p202, %p203
    %p205 = scmp.ne.s32.totalorder %s197, %s200
    %p206 = scmp.eq.s32.totalorder %s14, 0
    %p207 = por %p205, %p206
    %p208 = scmp.ne.s32.totalorder %s197, %s200
    %p209 = scmp.eq.s32.totalorder %s19, 1
    %p210 = por %p208, %p209
    %p211 = scmp.ne.s32.totalorder %s200, %s201
    %p212 = scmp.eq.s32.totalorder %s19, 0
    %p213 = por %p211, %p212
    %p214 = scmp.ne.s32.totalorder %s200, %s201
    %p215 = scmp.eq.s32.totalorder %s20, 1
    %p216 = por %p214, %p215
    %p218 = scmp.ne.s32.totalorder %s201, %s217
    %p219 = scmp.eq.s32.totalorder %s20, 0
    %p220 = por %p218, %p219
    %p221 = scmp.le.s32.totalorder 1, %s14
    %p222 = scmp.lt.s32.totalorder %s14, 3
    %p223 = pnand %p221, %p222
    %p224 = pneg %p223
    // Predicated region
    $region9: #{tpu_custom_call.1} parent=5 // pred_check
      _
    $region10: #{tpu_custom_call.1} parent=5 // pred_check_branch
      %226 = sbr.rel (%p223) target = $region12
    $region11: #{tpu_custom_call.1} parent=5 // pred_region
      %s227 = ssub.s32 %s14, 1
      // Predicated region
      $region13: #{tpu_custom_call.1} parent=11 // pred_check
        %p228 = pneg %p61
      $region14: #{tpu_custom_call.1} parent=11 // pred_check_branch
        %230 = sbr.rel (%p228) target = $region16
      $region15: #{tpu_custom_call.1} parent=11 // pred_region
        _
      $region16: #{tpu_custom_call.1} parent=11 // pred_fallthru
        _
      // Predicated region
      $region17: #{tpu_custom_call.1} parent=11 // pred_check
        %p231 = pneg %p82
      $region18: #{tpu_custom_call.1} parent=11 // pred_check_branch
        %233 = sbr.rel (%p231) target = $region20
      $region19: #{tpu_custom_call.1} parent=11 // pred_region
        _
      $region20: #{tpu_custom_call.1} parent=11 // pred_fallthru
        _
      // Predicated region
      $region21: #{tpu_custom_call.1} parent=11 // pred_check
        %p234 = pneg %p103
      $region22: #{tpu_custom_call.1} parent=11 // pred_check_branch
        %236 = sbr.rel (%p234) target = $region24
      $region23: #{tpu_custom_call.1} parent=11 // pred_region
        _
      $region24: #{tpu_custom_call.1} parent=11 // pred_fallthru
        _
      // Predicated region
      $region25: #{tpu_custom_call.1} parent=11 // pred_check
        %p237 = pneg %p124
      $region26: #{tpu_custom_call.1} parent=11 // pred_check_branch
        %239 = sbr.rel (%p237) target = $region28
      $region27: #{tpu_custom_call.1} parent=11 // pred_region
        _
      $region28: #{tpu_custom_call.1} parent=11 // pred_fallthru
        _
      // Predicated region
      $region29: #{tpu_custom_call.1} parent=11 // pred_check
        %p240 = pneg %p145
      $region30: #{tpu_custom_call.1} parent=11 // pred_check_branch
        %242 = sbr.rel (%p240) target = $region32
      $region31: #{tpu_custom_call.1} parent=11 // pred_region
        _
      $region32: #{tpu_custom_call.1} parent=11 // pred_fallthru
        _
      // Predicated region
      $region33: #{tpu_custom_call.1} parent=11 // pred_check
        %p243 = pneg %p166
      $region34: #{tpu_custom_call.1} parent=11 // pred_check_branch
        %245 = sbr.rel (%p243) target = $region36
      $region35: #{tpu_custom_call.1} parent=11 // pred_region
        _
      $region36: #{tpu_custom_call.1} parent=11 // pred_fallthru
        _
      // Predicated region
      $region37: #{tpu_custom_call.1} parent=11 // pred_check
        %p246 = pneg %p187
      $region38: #{tpu_custom_call.1} parent=11 // pred_check_branch
        %248 = sbr.rel (%p246) target = $region40
      $region39: #{tpu_custom_call.1} parent=11 // pred_region
        _
      $region40: #{tpu_custom_call.1} parent=11 // pred_fallthru
        _
    $region12: #{tpu_custom_call.1} parent=5 // pred_fallthru
      _
    %p249 = scmp.lt.s32.totalorder %s14, 2
    // Predicated region
    $region41: #{tpu_custom_call.1} parent=5 // pred_check
      %p250 = pneg %p249
    $region42: #{tpu_custom_call.1} parent=5 // pred_check_branch
      %252 = sbr.rel (%p250) target = $region44
    $region43: #{tpu_custom_call.1} parent=5 // pred_region
      // Predicated region
      $region45: #{tpu_custom_call.1} parent=43 // pred_check
        %p253 = pneg %p34
      $region46: #{tpu_custom_call.1} parent=43 // pred_check_branch
        %255 = sbr.rel (%p253) target = $region48
      $region47: #{tpu_custom_call.1} parent=43 // pred_region
        %p256 = scmp.lt.s32.totalorder %s14, 1
        %s257 = scalar_select %p256, %s14, 1
        %s258 = smul.addr %s257, 2
        %s259 = smul.addr %s258, 4
        %s260 = scalar_lea.vmem %s0, %s259
      $region48: #{tpu_custom_call.1} parent=43 // pred_fallthru
        _
    $region44: #{tpu_custom_call.1} parent=5 // pred_fallthru
      _
    %p261 = scmp.le.s32.totalorder 1, %s14
    %p262 = scmp.lt.s32.totalorder %s14, 3
    %p263 = pnand %p261, %p262
    %p264 = pneg %p263
    // Predicated region
    $region49: #{tpu_custom_call.1} parent=5 // pred_check
      _
    $region50: #{tpu_custom_call.1} parent=5 // pred_check_branch
      %266 = sbr.rel (%p263) target = $region52
    $region51: #{tpu_custom_call.1} parent=5 // pred_region
      %s267 = ssub.s32 %s14, 1
      %p268 = scmp.lt.s32.totalorder %s19, 1
      %s269 = scalar_select %p268, %s19, 1
      %s270 = smul.addr %s269, 2
      %s271 = smul.addr %s270, 4
      %s272 = scalar_lea.vmem %s0, %s271
      %p273 = pneg %p40
      %p274 = pneg %p37
      %p275 = pneg %p61
      %p276 = pneg %p58
      %p277 = pneg %p82
      %p278 = pneg %p79
      %p279 = pneg %p103
      %p280 = pneg %p100
      %p281 = pneg %p124
      %p282 = pneg %p121
      %p283 = pneg %p145
      %p284 = pneg %p142
      %p285 = pneg %p166
      %p286 = pneg %p163
      %p287 = pneg %p187
      %p288 = pneg %p184
      %p289 = pneg %p213
      %p290 = pneg %p210
      %p291 = scmp.lt.s32.totalorder %s19, 1
      %s292 = scalar_select %p291, %s19, 1
      %s293 = smul.addr %s292, 2
      %s294 = smul.addr %s293, 8
      %s295 = scalar_lea.vmem %s8, %s294
      %p296 = scmp.lt.s32.totalorder %s19, 1
      %s297 = scalar_select %p296, %s19, 1
      %s298 = smul.addr %s297, 2
      %s299 = smul.addr %s298, 4
      %s300 = scalar_lea.vmem %s0, %s299
      %p301 = scmp.lt.s32.totalorder %s19, 1
      %s302 = scalar_select %p301, %s19, 1
      %s303 = smul.addr %s302, 2
      %s304 = smul.addr %s303, 8
      %s305 = scalar_lea.vmem %s8, %s304
      %v306 = vld [vmem:[%s300] sm:$0xff]
      %v307 = vld [vmem:[%s1] sm:$0xff]
      %v308 = vld [vmem:[%s1 + $0x8] sm:$0xff]
      %v309 = vld [vmem:[%s1 + $0x10] sm:$0xff]
      %v310 = vld [vmem:[%s1 + $0x18] sm:$0xff]
      %v311 = vld [vmem:[%s1 + $0x20] sm:$0xff]
      %v312 = vld [vmem:[%s1 + $0x28] sm:$0xff]
      %v313 = vld [vmem:[%s1 + $0x30] sm:$0xff]
      %v314 = vld [vmem:[%s1 + $0x38] sm:$0xff]
      %v315 = vld [vmem:[%s1 + $0x40] sm:$0xff]
      %v316 = vld [vmem:[%s1 + $0x48] sm:$0xff]
      %v317 = vld [vmem:[%s1 + $0x50] sm:$0xff]
      %v318 = vld [vmem:[%s1 + $0x58] sm:$0xff]
      %v319 = vld [vmem:[%s1 + $0x60] sm:$0xff]
      %v320 = vld [vmem:[%s1 + $0x68] sm:$0xff]
      %v321 = vld [vmem:[%s1 + $0x70] sm:$0xff]
      %v322 = vld [vmem:[%s1 + $0x78] sm:$0xff]
      %v323 = vld [vmem:[%s1 + $0x80] sm:$0xff]
      %v324 = vld [vmem:[%s1 + $0x88] sm:$0xff]
      %v325 = vld [vmem:[%s1 + $0x90] sm:$0xff]
      %v326 = vld [vmem:[%s1 + $0x98] sm:$0xff]
      %v327 = vld [vmem:[%s1 + $0xa0] sm:$0xff]
      %v328 = vld [vmem:[%s1 + $0xa8] sm:$0xff]
      %v329 = vld [vmem:[%s1 + $0xb0] sm:$0xff]
      %v330 = vld [vmem:[%s1 + $0xb8] sm:$0xff]
      %v331 = vld [vmem:[%s1 + $0xc0] sm:$0xff]
      %v332 = vld [vmem:[%s1 + $0xc8] sm:$0xff]
      %v333 = vld [vmem:[%s1 + $0xd0] sm:$0xff]
      %v334 = vld [vmem:[%s1 + $0xd8] sm:$0xff]
      %v335 = vld [vmem:[%s1 + $0xe0] sm:$0xff]
      %v336 = vld [vmem:[%s1 + $0xe8] sm:$0xff]
      %v337 = vld [vmem:[%s1 + $0xf0] sm:$0xff]
      %v338 = vld [vmem:[%s1 + $0xf8] sm:$0xff]
      %v340 = vcombine.high %v306, %v306
      %342 = vmatprep.subr.mxu0 0.0
      %v343 = vand.u32 %v322, 4294901760
      %344 = vmatpush1.msra.mxu0 %v343
      %345 = vmatprep.subr.mxu0 0.0
      %v346 = vand.u32 %v321, 4294901760
      %347 = vmatpush1.msra.mxu0 %v346
      %348 = vmatprep.subr.mxu0 0.0
      %v349 = vand.u32 %v320, 4294901760
      %350 = vmatpush1.msra.mxu0 %v349
      %351 = vmatprep.subr.mxu0 0.0
      %v352 = vand.u32 %v319, 4294901760
      %353 = vmatpush1.msra.mxu0 %v352
      %354 = vmatprep.subr.mxu0 0.0
      %v355 = vand.u32 %v318, 4294901760
      %356 = vmatpush1.msra.mxu0 %v355
      %357 = vmatprep.subr.mxu0 0.0
      %v358 = vand.u32 %v317, 4294901760
      %359 = vmatpush1.msra.mxu0 %v358
      %360 = vmatprep.subr.mxu0 0.0
      %v361 = vand.u32 %v316, 4294901760
      %362 = vmatpush1.msra.mxu0 %v361
      %363 = vmatprep.subr.mxu0 0.0
      %v364 = vand.u32 %v315, 4294901760
      %365 = vmatpush1.msra.mxu0 %v364
      %366 = vmatprep.subr.mxu0 0.0
      %v367 = vand.u32 %v314, 4294901760
      %368 = vmatpush1.msra.mxu0 %v367
      %369 = vmatprep.subr.mxu0 0.0
      %v370 = vand.u32 %v313, 4294901760
      %371 = vmatpush1.msra.mxu0 %v370
      %372 = vmatprep.subr.mxu0 0.0
      %v373 = vand.u32 %v312, 4294901760
      %374 = vmatpush1.msra.mxu0 %v373
      %375 = vmatprep.subr.mxu0 0.0
      %v376 = vand.u32 %v311, 4294901760
      %377 = vmatpush1.msra.mxu0 %v376
      %378 = vmatprep.subr.mxu0 0.0
      %v379 = vand.u32 %v310, 4294901760
      %380 = vmatpush1.msra.mxu0 %v379
      %381 = vmatprep.subr.mxu0 0.0
      %v382 = vand.u32 %v309, 4294901760
      %383 = vmatpush1.msra.mxu0 %v382
      %384 = vmatprep.subr.mxu0 0.0
      %v385 = vand.u32 %v308, 4294901760
      %386 = vmatpush1.msra.mxu0 %v385
      %387 = vmatprep.subr.mxu0 0.0
      %v388 = vand.u32 %v307, 4294901760
      %389 = vmatpush1.msra.mxu0 %v388
      %390 = vmatprep.subr.mxu0 0.0
      %v391 = vand.u32 %v338, 4294901760
      %392 = vmatpush2.msra.mxu0 %v391
      %393 = vmatprep.subr.mxu0 0.0
      %v394 = vand.u32 %v337, 4294901760
      %395 = vmatpush2.msra.mxu0 %v394
      %396 = vmatprep.subr.mxu0 0.0
      %v397 = vand.u32 %v336, 4294901760
      %398 = vmatpush2.msra.mxu0 %v397
      %399 = vmatprep.subr.mxu0 0.0
      %v400 = vand.u32 %v335, 4294901760
      %401 = vmatpush2.msra.mxu0 %v400
      %402 = vmatprep.subr.mxu0 0.0
      %v403 = vand.u32 %v334, 4294901760
      %404 = vmatpush2.msra.mxu0 %v403
      %405 = vmatprep.subr.mxu0 0.0
      %v406 = vand.u32 %v333, 4294901760
      %407 = vmatpush2.msra.mxu0 %v406
      %408 = vmatprep.subr.mxu0 0.0
      %v409 = vand.u32 %v332, 4294901760
      %410 = vmatpush2.msra.mxu0 %v409
      %411 = vmatprep.subr.mxu0 0.0
      %v412 = vand.u32 %v331, 4294901760
      %413 = vmatpush2.msra.mxu0 %v412
      %414 = vmatprep.subr.mxu0 0.0
      %v415 = vand.u32 %v330, 4294901760
      %416 = vmatpush2.msra.mxu0 %v415
      %417 = vmatprep.subr.mxu0 0.0
      %v418 = vand.u32 %v329, 4294901760
      %419 = vmatpush2.msra.mxu0 %v418
      %420 = vmatprep.subr.mxu0 0.0
      %v421 = vand.u32 %v328, 4294901760
      %422 = vmatpush2.msra.mxu0 %v421
      %423 = vmatprep.subr.mxu0 0.0
      %v424 = vand.u32 %v327, 4294901760
      %425 = vmatpush2.msra.mxu0 %v424
      %426 = vmatprep.subr.mxu0 0.0
      %v427 = vand.u32 %v326, 4294901760
      %428 = vmatpush2.msra.mxu0 %v427
      %429 = vmatprep.subr.mxu0 0.0
      %v430 = vand.u32 %v325, 4294901760
      %431 = vmatpush2.msra.mxu0 %v430
      %432 = vmatprep.subr.mxu0 0.0
      %v433 = vand.u32 %v324, 4294901760
      %434 = vmatpush2.msra.mxu0 %v433
      %435 = vmatprep.subr.mxu0 0.0
      %v436 = vand.u32 %v323, 4294901760
      %437 = vmatpush2.msra.mxu0 %v436
      %v438 = vand.u32 %v340, 4294901760
      %v439 = vsub.f32 %v340, %v438
      %v440 = vand.u32 %v439, 4294901760
      %v441 = vsub.f32 %v439, %v440
      %v442 = vand.u32 %v441, 4294901760
      %443 = vmatprep.mubr.f32.mxu0 %v442
      %v444 = vand.u32 %v306, 4294901760
      %v445 = vsub.f32 %v306, %v444
      %v446 = vand.u32 %v445, 4294901760
      %v447 = vsub.f32 %v445, %v446
      %v448 = vand.u32 %v447, 4294901760
      %449 = vmatmul.mubr.f32.gmra.mxu0 %v448
      %v450 = vpop.f32.mrf.mxu0
      %v451 = vadd.f32 0.0, %v450
      %v452 = vpop.f32.mrf.mxu0
      %453 = vdwg.mxu0
      %454 = vmatprep.subr.mxu0 0.0
      %v455 = vand.u32 %v322, 4294901760
      %v456 = vsub.f32 %v322, %v455
      %v457 = vand.u32 %v456, 4294901760
      %v458 = vsub.f32 %v456, %v457
      %v459 = vand.u32 %v458, 4294901760
      %460 = vmatpush1.msra.mxu0 %v459
      %461 = vmatprep.subr.mxu0 0.0
      %v462 = vand.u32 %v321, 4294901760
      %v463 = vsub.f32 %v321, %v462
      %v464 = vand.u32 %v463, 4294901760
      %v465 = vsub.f32 %v463, %v464
      %v466 = vand.u32 %v465, 4294901760
      %467 = vmatpush1.msra.mxu0 %v466
      %468 = vmatprep.subr.mxu0 0.0
      %v469 = vand.u32 %v320, 4294901760
      %v470 = vsub.f32 %v320, %v469
      %v471 = vand.u32 %v470, 4294901760
      %v472 = vsub.f32 %v470, %v471
      %v473 = vand.u32 %v472, 4294901760
      %474 = vmatpush1.msra.mxu0 %v473
      %475 = vmatprep.subr.mxu0 0.0
      %v476 = vand.u32 %v319, 4294901760
      %v477 = vsub.f32 %v319, %v476
      %v478 = vand.u32 %v477, 4294901760
      %v479 = vsub.f32 %v477, %v478
      %v480 = vand.u32 %v479, 4294901760
      %481 = vmatpush1.msra.mxu0 %v480
      %482 = vmatprep.subr.mxu0 0.0
      %v483 = vand.u32 %v318, 4294901760
      %v484 = vsub.f32 %v318, %v483
      %v485 = vand.u32 %v484, 4294901760
      %v486 = vsub.f32 %v484, %v485
      %v487 = vand.u32 %v486, 4294901760
      %488 = vmatpush1.msra.mxu0 %v487
      %489 = vmatprep.subr.mxu0 0.0
      %v490 = vand.u32 %v317, 4294901760
      %v491 = vsub.f32 %v317, %v490
      %v492 = vand.u32 %v491, 4294901760
      %v493 = vsub.f32 %v491, %v492
      %v494 = vand.u32 %v493, 4294901760
      %495 = vmatpush1.msra.mxu0 %v494
      %496 = vmatprep.subr.mxu0 0.0
      %v497 = vand.u32 %v316, 4294901760
      %v498 = vsub.f32 %v316, %v497
      %v499 = vand.u32 %v498, 4294901760
      %v500 = vsub.f32 %v498, %v499
      %v501 = vand.u32 %v500, 4294901760
      %502 = vmatpush1.msra.mxu0 %v501
      %503 = vmatprep.subr.mxu0 0.0
      %v504 = vand.u32 %v315, 4294901760
      %v505 = vsub.f32 %v315, %v504
      %v506 = vand.u32 %v505, 4294901760
      %v507 = vsub.f32 %v505, %v506
      %v508 = vand.u32 %v507, 4294901760
      %509 = vmatpush1.msra.mxu0 %v508
      %510 = vmatprep.subr.mxu0 0.0
      %v511 = vand.u32 %v314, 4294901760
      %v512 = vsub.f32 %v314, %v511
      %v513 = vand.u32 %v512, 4294901760
      %v514 = vsub.f32 %v512, %v513
      %v515 = vand.u32 %v514, 4294901760
      %516 = vmatpush1.msra.mxu0 %v515
      %517 = vmatprep.subr.mxu0 0.0
      %v518 = vand.u32 %v313, 4294901760
      %v519 = vsub.f32 %v313, %v518
      %v520 = vand.u32 %v519, 4294901760
      %v521 = vsub.f32 %v519, %v520
      %v522 = vand.u32 %v521, 4294901760
      %523 = vmatpush1.msra.mxu0 %v522
      %524 = vmatprep.subr.mxu0 0.0
      %v525 = vand.u32 %v312, 4294901760
      %v526 = vsub.f32 %v312, %v525
      %v527 = vand.u32 %v526, 4294901760
      %v528 = vsub.f32 %v526, %v527
      %v529 = vand.u32 %v528, 4294901760
      %530 = vmatpush1.msra.mxu0 %v529
      %531 = vmatprep.subr.mxu0 0.0
      %v532 = vand.u32 %v311, 4294901760
      %v533 = vsub.f32 %v311, %v532
      %v534 = vand.u32 %v533, 4294901760
      %v535 = vsub.f32 %v533, %v534
      %v536 = vand.u32 %v535, 4294901760
      %537 = vmatpush1.msra.mxu0 %v536
      %538 = vmatprep.subr.mxu0 0.0
      %v539 = vand.u32 %v310, 4294901760
      %v540 = vsub.f32 %v310, %v539
      %v541 = vand.u32 %v540, 4294901760
      %v542 = vsub.f32 %v540, %v541
      %v543 = vand.u32 %v542, 4294901760
      %544 = vmatpush1.msra.mxu0 %v543
      %545 = vmatprep.subr.mxu0 0.0
      %v546 = vand.u32 %v309, 4294901760
      %v547 = vsub.f32 %v309, %v546
      %v548 = vand.u32 %v547, 4294901760
      %v549 = vsub.f32 %v547, %v548
      %v550 = vand.u32 %v549, 4294901760
      %551 = vmatpush1.msra.mxu0 %v550
      %552 = vmatprep.subr.mxu0 0.0
      %v553 = vand.u32 %v308, 4294901760
      %v554 = vsub.f32 %v308, %v553
      %v555 = vand.u32 %v554, 4294901760
      %v556 = vsub.f32 %v554, %v555
      %v557 = vand.u32 %v556, 4294901760
      %558 = vmatpush1.msra.mxu0 %v557
      %559 = vmatprep.subr.mxu0 0.0
      %v560 = vand.u32 %v307, 4294901760
      %v561 = vsub.f32 %v307, %v560
      %v562 = vand.u32 %v561, 4294901760
      %v563 = vsub.f32 %v561, %v562
      %v564 = vand.u32 %v563, 4294901760
      %565 = vmatpush1.msra.mxu0 %v564
      %566 = vmatprep.subr.mxu0 0.0
      %v567 = vand.u32 %v338, 4294901760
      %v568 = vsub.f32 %v338, %v567
      %v569 = vand.u32 %v568, 4294901760
      %v570 = vsub.f32 %v568, %v569
      %v571 = vand.u32 %v570, 4294901760
      %572 = vmatpush2.msra.mxu0 %v571
      %573 = vmatprep.subr.mxu0 0.0
      %v574 = vand.u32 %v337, 4294901760
      %v575 = vsub.f32 %v337, %v574
      %v576 = vand.u32 %v575, 4294901760
      %v577 = vsub.f32 %v575, %v576
      %v578 = vand.u32 %v577, 4294901760
      %579 = vmatpush2.msra.mxu0 %v578
      %580 = vmatprep.subr.mxu0 0.0
      %v581 = vand.u32 %v336, 4294901760
      %v582 = vsub.f32 %v336, %v581
      %v583 = vand.u32 %v582, 4294901760
      %v584 = vsub.f32 %v582, %v583
      %v585 = vand.u32 %v584, 4294901760
      %586 = vmatpush2.msra.mxu0 %v585
      %587 = vmatprep.subr.mxu0 0.0
      %v588 = vand.u32 %v335, 4294901760
      %v589 = vsub.f32 %v335, %v588
      %v590 = vand.u32 %v589, 4294901760
      %v591 = vsub.f32 %v589, %v590
      %v592 = vand.u32 %v591, 4294901760
      %593 = vmatpush2.msra.mxu0 %v592
      %594 = vmatprep.subr.mxu0 0.0
      %v595 = vand.u32 %v334, 4294901760
      %v596 = vsub.f32 %v334, %v595
      %v597 = vand.u32 %v596, 4294901760
      %v598 = vsub.f32 %v596, %v597
      %v599 = vand.u32 %v598, 4294901760
      %600 = vmatpush2.msra.mxu0 %v599
      %601 = vmatprep.subr.mxu0 0.0
      %v602 = vand.u32 %v333, 4294901760
      %v603 = vsub.f32 %v333, %v602
      %v604 = vand.u32 %v603, 4294901760
      %v605 = vsub.f32 %v603, %v604
      %v606 = vand.u32 %v605, 4294901760
      %607 = vmatpush2.msra.mxu0 %v606
      %608 = vmatprep.subr.mxu0 0.0
      %v609 = vand.u32 %v332, 4294901760
      %v610 = vsub.f32 %v332, %v609
      %v611 = vand.u32 %v610, 4294901760
      %v612 = vsub.f32 %v610, %v611
      %v613 = vand.u32 %v612, 4294901760
      %614 = vmatpush2.msra.mxu0 %v613
      %615 = vmatprep.subr.mxu0 0.0
      %v616 = vand.u32 %v331, 4294901760
      %v617 = vsub.f32 %v331, %v616
      %v618 = vand.u32 %v617, 4294901760
      %v619 = vsub.f32 %v617, %v618
      %v620 = vand.u32 %v619, 4294901760
      %621 = vmatpush2.msra.mxu0 %v620
      %622 = vmatprep.subr.mxu0 0.0
      %v623 = vand.u32 %v330, 4294901760
      %v624 = vsub.f32 %v330, %v623
      %v625 = vand.u32 %v624, 4294901760
      %v626 = vsub.f32 %v624, %v625
      %v627 = vand.u32 %v626, 4294901760
      %628 = vmatpush2.msra.mxu0 %v627
      %629 = vmatprep.subr.mxu0 0.0
      %v630 = vand.u32 %v329, 4294901760
      %v631 = vsub.f32 %v329, %v630
      %v632 = vand.u32 %v631, 4294901760
      %v633 = vsub.f32 %v631, %v632
      %v634 = vand.u32 %v633, 4294901760
      %635 = vmatpush2.msra.mxu0 %v634
      %636 = vmatprep.subr.mxu0 0.0
      %v637 = vand.u32 %v328, 4294901760
      %v638 = vsub.f32 %v328, %v637
      %v639 = vand.u32 %v638, 4294901760
      %v640 = vsub.f32 %v638, %v639
      %v641 = vand.u32 %v640, 4294901760
      %642 = vmatpush2.msra.mxu0 %v641
      %643 = vmatprep.subr.mxu0 0.0
      %v644 = vand.u32 %v327, 4294901760
      %v645 = vsub.f32 %v327, %v644
      %v646 = vand.u32 %v645, 4294901760
      %v647 = vsub.f32 %v645, %v646
      %v648 = vand.u32 %v647, 4294901760
      %649 = vmatpush2.msra.mxu0 %v648
      %650 = vmatprep.subr.mxu0 0.0
      %v651 = vand.u32 %v326, 4294901760
      %v652 = vsub.f32 %v326, %v651
      %v653 = vand.u32 %v652, 4294901760
      %v654 = vsub.f32 %v652, %v653
      %v655 = vand.u32 %v654, 4294901760
      %656 = vmatpush2.msra.mxu0 %v655
      %657 = vmatprep.subr.mxu0 0.0
      %v658 = vand.u32 %v325, 4294901760
      %v659 = vsub.f32 %v325, %v658
      %v660 = vand.u32 %v659, 4294901760
      %v661 = vsub.f32 %v659, %v660
      %v662 = vand.u32 %v661, 4294901760
      %663 = vmatpush2.msra.mxu0 %v662
      %664 = vmatprep.subr.mxu0 0.0
      %v665 = vand.u32 %v324, 4294901760
      %v666 = vsub.f32 %v324, %v665
      %v667 = vand.u32 %v666, 4294901760
      %v668 = vsub.f32 %v666, %v667
      %v669 = vand.u32 %v668, 4294901760
      %670 = vmatpush2.msra.mxu0 %v669
      %671 = vmatprep.subr.mxu0 0.0
      %v672 = vand.u32 %v323, 4294901760
      %v673 = vsub.f32 %v323, %v672
      %v674 = vand.u32 %v673, 4294901760
      %v675 = vsub.f32 %v673, %v674
      %v676 = vand.u32 %v675, 4294901760
      %677 = vmatpush2.msra.mxu0 %v676
      %v678 = vand.u32 %v340, 4294901760
      %679 = vmatprep.mubr.f32.mxu0 %v678
      %v680 = vand.u32 %v306, 4294901760
      %681 = vmatmul.mubr.f32.gmra.mxu0 %v680
      %v682 = vpop.f32.mrf.mxu0
      %v683 = vadd.f32 %v451, %v682
      %v684 = vpop.f32.mrf.mxu0
      %685 = vdwg.mxu0
      %686 = vmatprep.subr.mxu0 0.0
      %v687 = vand.u32 %v322, 4294901760
      %v688 = vsub.f32 %v322, %v687
      %689 = vmatpush1.msra.mxu0 %v688
      %690 = vmatprep.subr.mxu0 0.0
      %v691 = vand.u32 %v321, 4294901760
      %v692 = vsub.f32 %v321, %v691
      %693 = vmatpush1.msra.mxu0 %v692
      %694 = vmatprep.subr.mxu0 0.0
      %v695 = vand.u32 %v320, 4294901760
      %v696 = vsub.f32 %v320, %v695
      %697 = vmatpush1.msra.mxu0 %v696
      %698 = vmatprep.subr.mxu0 0.0
      %v699 = vand.u32 %v319, 4294901760
      %v700 = vsub.f32 %v319, %v699
      %701 = vmatpush1.msra.mxu0 %v700
      %702 = vmatprep.subr.mxu0 0.0
      %v703 = vand.u32 %v318, 4294901760
      %v704 = vsub.f32 %v318, %v703
      %705 = vmatpush1.msra.mxu0 %v704
      %706 = vmatprep.subr.mxu0 0.0
      %v707 = vand.u32 %v317, 4294901760
      %v708 = vsub.f32 %v317, %v707
      %709 = vmatpush1.msra.mxu0 %v708
      %710 = vmatprep.subr.mxu0 0.0
      %v711 = vand.u32 %v316, 4294901760
      %v712 = vsub.f32 %v316, %v711
      %713 = vmatpush1.msra.mxu0 %v712
      %714 = vmatprep.subr.mxu0 0.0
      %v715 = vand.u32 %v315, 4294901760
      %v716 = vsub.f32 %v315, %v715
      %717 = vmatpush1.msra.mxu0 %v716
      %718 = vmatprep.subr.mxu0 0.0
      %v719 = vand.u32 %v314, 4294901760
      %v720 = vsub.f32 %v314, %v719
      %721 = vmatpush1.msra.mxu0 %v720
      %722 = vmatprep.subr.mxu0 0.0
      %v723 = vand.u32 %v313, 4294901760
      %v724 = vsub.f32 %v313, %v723
      %725 = vmatpush1.msra.mxu0 %v724
      %726 = vmatprep.subr.mxu0 0.0
      %v727 = vand.u32 %v312, 4294901760
      %v728 = vsub.f32 %v312, %v727
      %729 = vmatpush1.msra.mxu0 %v728
      %730 = vmatprep.subr.mxu0 0.0
      %v731 = vand.u32 %v311, 4294901760
      %v732 = vsub.f32 %v311, %v731
      %733 = vmatpush1.msra.mxu0 %v732
      %734 = vmatprep.subr.mxu0 0.0
      %v735 = vand.u32 %v310, 4294901760
      %v736 = vsub.f32 %v310, %v735
      %737 = vmatpush1.msra.mxu0 %v736
      %738 = vmatprep.subr.mxu0 0.0
      %v739 = vand.u32 %v309, 4294901760
      %v740 = vsub.f32 %v309, %v739
      %741 = vmatpush1.msra.mxu0 %v740
      %742 = vmatprep.subr.mxu0 0.0
      %v743 = vand.u32 %v308, 4294901760
      %v744 = vsub.f32 %v308, %v743
      %745 = vmatpush1.msra.mxu0 %v744
      %746 = vmatprep.subr.mxu0 0.0
      %v747 = vand.u32 %v307, 4294901760
      %v748 = vsub.f32 %v307, %v747
      %749 = vmatpush1.msra.mxu0 %v748
      %750 = vmatprep.subr.mxu0 0.0
      %v751 = vand.u32 %v338, 4294901760
      %v752 = vsub.f32 %v338, %v751
      %753 = vmatpush2.msra.mxu0 %v752
      %754 = vmatprep.subr.mxu0 0.0
      %v755 = vand.u32 %v337, 4294901760
      %v756 = vsub.f32 %v337, %v755
      %757 = vmatpush2.msra.mxu0 %v756
      %758 = vmatprep.subr.mxu0 0.0
      %v759 = vand.u32 %v336, 4294901760
      %v760 = vsub.f32 %v336, %v759
      %761 = vmatpush2.msra.mxu0 %v760
      %762 = vmatprep.subr.mxu0 0.0
      %v763 = vand.u32 %v335, 4294901760
      %v764 = vsub.f32 %v335, %v763
      %765 = vmatpush2.msra.mxu0 %v764
      %766 = vmatprep.subr.mxu0 0.0
      %v767 = vand.u32 %v334, 4294901760
      %v768 = vsub.f32 %v334, %v767
      %769 = vmatpush2.msra.mxu0 %v768
      %770 = vmatprep.subr.mxu0 0.0
      %v771 = vand.u32 %v333, 4294901760
      %v772 = vsub.f32 %v333, %v771
      %773 = vmatpush2.msra.mxu0 %v772
      %774 = vmatprep.subr.mxu0 0.0
      %v775 = vand.u32 %v332, 4294901760
      %v776 = vsub.f32 %v332, %v775
      %777 = vmatpush2.msra.mxu0 %v776
      %778 = vmatprep.subr.mxu0 0.0
      %v779 = vand.u32 %v331, 4294901760
      %v780 = vsub.f32 %v331, %v779
      %781 = vmatpush2.msra.mxu0 %v780
      %782 = vmatprep.subr.mxu0 0.0
      %v783 = vand.u32 %v330, 4294901760
      %v784 = vsub.f32 %v330, %v783
      %785 = vmatpush2.msra.mxu0 %v784
      %786 = vmatprep.subr.mxu0 0.0
      %v787 = vand.u32 %v329, 4294901760
      %v788 = vsub.f32 %v329, %v787
      %789 = vmatpush2.msra.mxu0 %v788
      %790 = vmatprep.subr.mxu0 0.0
      %v791 = vand.u32 %v328, 4294901760
      %v792 = vsub.f32 %v328, %v791
      %793 = vmatpush2.msra.mxu0 %v792
      %794 = vmatprep.subr.mxu0 0.0
      %v795 = vand.u32 %v327, 4294901760
      %v796 = vsub.f32 %v327, %v795
      %797 = vmatpush2.msra.mxu0 %v796
      %798 = vmatprep.subr.mxu0 0.0
      %v799 = vand.u32 %v326, 4294901760
      %v800 = vsub.f32 %v326, %v799
      %801 = vmatpush2.msra.mxu0 %v800
      %802 = vmatprep.subr.mxu0 0.0
      %v803 = vand.u32 %v325, 4294901760
      %v804 = vsub.f32 %v325, %v803
      %805 = vmatpush2.msra.mxu0 %v804
      %806 = vmatprep.subr.mxu0 0.0
      %v807 = vand.u32 %v324, 4294901760
      %v808 = vsub.f32 %v324, %v807
      %809 = vmatpush2.msra.mxu0 %v808
      %810 = vmatprep.subr.mxu0 0.0
      %v811 = vand.u32 %v323, 4294901760
      %v812 = vsub.f32 %v323, %v811
      %813 = vmatpush2.msra.mxu0 %v812
      %v814 = vand.u32 %v340, 4294901760
      %v815 = vsub.f32 %v340, %v814
      %816 = vmatprep.mubr.f32.mxu0 %v815
      %v817 = vand.u32 %v306, 4294901760
      %v818 = vsub.f32 %v306, %v817
      %819 = vmatmul.mubr.f32.gmra.mxu0 %v818
      %v820 = vpop.f32.mrf.mxu0
      %v821 = vadd.f32 %v683, %v820
      %v822 = vpop.f32.mrf.mxu0
      %823 = vdwg.mxu0
      %824 = vmatprep.subr.mxu0 0.0
      %v825 = vand.u32 %v322, 4294901760
      %826 = vmatpush1.msra.mxu0 %v825
      %827 = vmatprep.subr.mxu0 0.0
      %v828 = vand.u32 %v321, 4294901760
      %829 = vmatpush1.msra.mxu0 %v828
      %830 = vmatprep.subr.mxu0 0.0
      %v831 = vand.u32 %v320, 4294901760
      %832 = vmatpush1.msra.mxu0 %v831
      %833 = vmatprep.subr.mxu0 0.0
      %v834 = vand.u32 %v319, 4294901760
      %835 = vmatpush1.msra.mxu0 %v834
      %836 = vmatprep.subr.mxu0 0.0
      %v837 = vand.u32 %v318, 4294901760
      %838 = vmatpush1.msra.mxu0 %v837
      %839 = vmatprep.subr.mxu0 0.0
      %v840 = vand.u32 %v317, 4294901760
      %841 = vmatpush1.msra.mxu0 %v840
      %842 = vmatprep.subr.mxu0 0.0
      %v843 = vand.u32 %v316, 4294901760
      %844 = vmatpush1.msra.mxu0 %v843
      %845 = vmatprep.subr.mxu0 0.0
      %v846 = vand.u32 %v315, 4294901760
      %847 = vmatpush1.msra.mxu0 %v846
      %848 = vmatprep.subr.mxu0 0.0
      %v849 = vand.u32 %v314, 4294901760
      %850 = vmatpush1.msra.mxu0 %v849
      %851 = vmatprep.subr.mxu0 0.0
      %v852 = vand.u32 %v313, 4294901760
      %853 = vmatpush1.msra.mxu0 %v852
      %854 = vmatprep.subr.mxu0 0.0
      %v855 = vand.u32 %v312, 4294901760
      %856 = vmatpush1.msra.mxu0 %v855
      %857 = vmatprep.subr.mxu0 0.0
      %v858 = vand.u32 %v311, 4294901760
      %859 = vmatpush1.msra.mxu0 %v858
      %860 = vmatprep.subr.mxu0 0.0
      %v861 = vand.u32 %v310, 4294901760
      %862 = vmatpush1.msra.mxu0 %v861
      %863 = vmatprep.subr.mxu0 0.0
      %v864 = vand.u32 %v309, 4294901760
      %865 = vmatpush1.msra.mxu0 %v864
      %866 = vmatprep.subr.mxu0 0.0
      %v867 = vand.u32 %v308, 4294901760
      %868 = vmatpush1.msra.mxu0 %v867
      %869 = vmatprep.subr.mxu0 0.0
      %v870 = vand.u32 %v307, 4294901760
      %871 = vmatpush1.msra.mxu0 %v870
      %872 = vmatprep.subr.mxu0 0.0
      %v873 = vand.u32 %v338, 4294901760
      %874 = vmatpush2.msra.mxu0 %v873
      %875 = vmatprep.subr.mxu0 0.0
      %v876 = vand.u32 %v337, 4294901760
      %877 = vmatpush2.msra.mxu0 %v876
      %878 = vmatprep.subr.mxu0 0.0
      %v879 = vand.u32 %v336, 4294901760
      %880 = vmatpush2.msra.mxu0 %v879
      %881 = vmatprep.subr.mxu0 0.0
      %v882 = vand.u32 %v335, 4294901760
      %883 = vmatpush2.msra.mxu0 %v882
      %884 = vmatprep.subr.mxu0 0.0
      %v885 = vand.u32 %v334, 4294901760
      %886 = vmatpush2.msra.mxu0 %v885
      %887 = vmatprep.subr.mxu0 0.0
      %v888 = vand.u32 %v333, 4294901760
      %889 = vmatpush2.msra.mxu0 %v888
      %890 = vmatprep.subr.mxu0 0.0
      %v891 = vand.u32 %v332, 4294901760
      %892 = vmatpush2.msra.mxu0 %v891
      %893 = vmatprep.subr.mxu0 0.0
      %v894 = vand.u32 %v331, 4294901760
      %895 = vmatpush2.msra.mxu0 %v894
      %896 = vmatprep.subr.mxu0 0.0
      %v897 = vand.u32 %v330, 4294901760
      %898 = vmatpush2.msra.mxu0 %v897
      %899 = vmatprep.subr.mxu0 0.0
      %v900 = vand.u32 %v329, 4294901760
      %901 = vmatpush2.msra.mxu0 %v900
      %902 = vmatprep.subr.mxu0 0.0
      %v903 = vand.u32 %v328, 4294901760
      %904 = vmatpush2.msra.mxu0 %v903
      %905 = vmatprep.subr.mxu0 0.0
      %v906 = vand.u32 %v327, 4294901760
      %907 = vmatpush2.msra.mxu0 %v906
      %908 = vmatprep.subr.mxu0 0.0
      %v909 = vand.u32 %v326, 4294901760
      %910 = vmatpush2.msra.mxu0 %v909
      %911 = vmatprep.subr.mxu0 0.0
      %v912 = vand.u32 %v325, 4294901760
      %913 = vmatpush2.msra.mxu0 %v912
      %914 = vmatprep.subr.mxu0 0.0
      %v915 = vand.u32 %v324, 4294901760
      %916 = vmatpush2.msra.mxu0 %v915
      %917 = vmatprep.subr.mxu0 0.0
      %v918 = vand.u32 %v323, 4294901760
      %919 = vmatpush2.msra.mxu0 %v918
      %v920 = vand.u32 %v340, 4294901760
      %v921 = vsub.f32 %v340, %v920
      %v922 = vand.u32 %v921, 4294901760
      %923 = vmatprep.mubr.f32.mxu0 %v922
      %v924 = vand.u32 %v306, 4294901760
      %v925 = vsub.f32 %v306, %v924
      %v926 = vand.u32 %v925, 4294901760
      %927 = vmatmul.mubr.f32.gmra.mxu0 %v926
      %v928 = vpop.f32.mrf.mxu0
      %v929 = vadd.f32 %v821, %v928
      %v930 = vpop.f32.mrf.mxu0
      %931 = vdwg.mxu0
      %932 = vmatprep.subr.mxu0 0.0
      %v933 = vand.u32 %v322, 4294901760
      %v934 = vsub.f32 %v322, %v933
      %v935 = vand.u32 %v934, 4294901760
      %936 = vmatpush1.msra.mxu0 %v935
      %937 = vmatprep.subr.mxu0 0.0
      %v938 = vand.u32 %v321, 4294901760
      %v939 = vsub.f32 %v321, %v938
      %v940 = vand.u32 %v939, 4294901760
      %941 = vmatpush1.msra.mxu0 %v940
      %942 = vmatprep.subr.mxu0 0.0
      %v943 = vand.u32 %v320, 4294901760
      %v944 = vsub.f32 %v320, %v943
      %v945 = vand.u32 %v944, 4294901760
      %946 = vmatpush1.msra.mxu0 %v945
      %947 = vmatprep.subr.mxu0 0.0
      %v948 = vand.u32 %v319, 4294901760
      %v949 = vsub.f32 %v319, %v948
      %v950 = vand.u32 %v949, 4294901760
      %951 = vmatpush1.msra.mxu0 %v950
      %952 = vmatprep.subr.mxu0 0.0
      %v953 = vand.u32 %v318, 4294901760
      %v954 = vsub.f32 %v318, %v953
      %v955 = vand.u32 %v954, 4294901760
      %956 = vmatpush1.msra.mxu0 %v955
      %957 = vmatprep.subr.mxu0 0.0
      %v958 = vand.u32 %v317, 4294901760
      %v959 = vsub.f32 %v317, %v958
      %v960 = vand.u32 %v959, 4294901760
      %961 = vmatpush1.msra.mxu0 %v960
      %962 = vmatprep.subr.mxu0 0.0
      %v963 = vand.u32 %v316, 4294901760
      %v964 = vsub.f32 %v316, %v963
      %v965 = vand.u32 %v964, 4294901760
      %966 = vmatpush1.msra.mxu0 %v965
      %967 = vmatprep.subr.mxu0 0.0
      %v968 = vand.u32 %v315, 4294901760
      %v969 = vsub.f32 %v315, %v968
      %v970 = vand.u32 %v969, 4294901760
      %971 = vmatpush1.msra.mxu0 %v970
      %972 = vmatprep.subr.mxu0 0.0
      %v973 = vand.u32 %v314, 4294901760
      %v974 = vsub.f32 %v314, %v973
      %v975 = vand.u32 %v974, 4294901760
      %976 = vmatpush1.msra.mxu0 %v975
      %977 = vmatprep.subr.mxu0 0.0
      %v978 = vand.u32 %v313, 4294901760
      %v979 = vsub.f32 %v313, %v978
      %v980 = vand.u32 %v979, 4294901760
      %981 = vmatpush1.msra.mxu0 %v980
      %982 = vmatprep.subr.mxu0 0.0
      %v983 = vand.u32 %v312, 4294901760
      %v984 = vsub.f32 %v312, %v983
      %v985 = vand.u32 %v984, 4294901760
      %986 = vmatpush1.msra.mxu0 %v985
      %987 = vmatprep.subr.mxu0 0.0
      %v988 = vand.u32 %v311, 4294901760
      %v989 = vsub.f32 %v311, %v988
      %v990 = vand.u32 %v989, 4294901760
      %991 = vmatpush1.msra.mxu0 %v990
      %992 = vmatprep.subr.mxu0 0.0
      %v993 = vand.u32 %v310, 4294901760
      %v994 = vsub.f32 %v310, %v993
      %v995 = vand.u32 %v994, 4294901760
      %996 = vmatpush1.msra.mxu0 %v995
      %997 = vmatprep.subr.mxu0 0.0
      %v998 = vand.u32 %v309, 4294901760
      %v999 = vsub.f32 %v309, %v998
      %v1000 = vand.u32 %v999, 4294901760
      %1001 = vmatpush1.msra.mxu0 %v1000
      %1002 = vmatprep.subr.mxu0 0.0
      %v1003 = vand.u32 %v308, 4294901760
      %v1004 = vsub.f32 %v308, %v1003
      %v1005 = vand.u32 %v1004, 4294901760
      %1006 = vmatpush1.msra.mxu0 %v1005
      %1007 = vmatprep.subr.mxu0 0.0
      %v1008 = vand.u32 %v307, 4294901760
      %v1009 = vsub.f32 %v307, %v1008
      %v1010 = vand.u32 %v1009, 4294901760
      %1011 = vmatpush1.msra.mxu0 %v1010
      %1012 = vmatprep.subr.mxu0 0.0
      %v1013 = vand.u32 %v338, 4294901760
      %v1014 = vsub.f32 %v338, %v1013
      %v1015 = vand.u32 %v1014, 4294901760
      %1016 = vmatpush2.msra.mxu0 %v1015
      %1017 = vmatprep.subr.mxu0 0.0
      %v1018 = vand.u32 %v337, 4294901760
      %v1019 = vsub.f32 %v337, %v1018
      %v1020 = vand.u32 %v1019, 4294901760
      %1021 = vmatpush2.msra.mxu0 %v1020
      %1022 = vmatprep.subr.mxu0 0.0
      %v1023 = vand.u32 %v336, 4294901760
      %v1024 = vsub.f32 %v336, %v1023
      %v1025 = vand.u32 %v1024, 4294901760
      %1026 = vmatpush2.msra.mxu0 %v1025
      %1027 = vmatprep.subr.mxu0 0.0
      %v1028 = vand.u32 %v335, 4294901760
      %v1029 = vsub.f32 %v335, %v1028
      %v1030 = vand.u32 %v1029, 4294901760
      %1031 = vmatpush2.msra.mxu0 %v1030
      %1032 = vmatprep.subr.mxu0 0.0
      %v1033 = vand.u32 %v334, 4294901760
      %v1034 = vsub.f32 %v334, %v1033
      %v1035 = vand.u32 %v1034, 4294901760
      %1036 = vmatpush2.msra.mxu0 %v1035
      %1037 = vmatprep.subr.mxu0 0.0
      %v1038 = vand.u32 %v333, 4294901760
      %v1039 = vsub.f32 %v333, %v1038
      %v1040 = vand.u32 %v1039, 4294901760
      %1041 = vmatpush2.msra.mxu0 %v1040
      %1042 = vmatprep.subr.mxu0 0.0
      %v1043 = vand.u32 %v332, 4294901760
      %v1044 = vsub.f32 %v332, %v1043
      %v1045 = vand.u32 %v1044, 4294901760
      %1046 = vmatpush2.msra.mxu0 %v1045
      %1047 = vmatprep.subr.mxu0 0.0
      %v1048 = vand.u32 %v331, 4294901760
      %v1049 = vsub.f32 %v331, %v1048
      %v1050 = vand.u32 %v1049, 4294901760
      %1051 = vmatpush2.msra.mxu0 %v1050
      %1052 = vmatprep.subr.mxu0 0.0
      %v1053 = vand.u32 %v330, 4294901760
      %v1054 = vsub.f32 %v330, %v1053
      %v1055 = vand.u32 %v1054, 4294901760
      %1056 = vmatpush2.msra.mxu0 %v1055
      %1057 = vmatprep.subr.mxu0 0.0
      %v1058 = vand.u32 %v329, 4294901760
      %v1059 = vsub.f32 %v329, %v1058
      %v1060 = vand.u32 %v1059, 4294901760
      %1061 = vmatpush2.msra.mxu0 %v1060
      %1062 = vmatprep.subr.mxu0 0.0
      %v1063 = vand.u32 %v328, 4294901760
      %v1064 = vsub.f32 %v328, %v1063
      %v1065 = vand.u32 %v1064, 4294901760
      %1066 = vmatpush2.msra.mxu0 %v1065
      %1067 = vmatprep.subr.mxu0 0.0
      %v1068 = vand.u32 %v327, 4294901760
      %v1069 = vsub.f32 %v327, %v1068
      %v1070 = vand.u32 %v1069, 4294901760
      %1071 = vmatpush2.msra.mxu0 %v1070
      %1072 = vmatprep.subr.mxu0 0.0
      %v1073 = vand.u32 %v326, 4294901760
      %v1074 = vsub.f32 %v326, %v1073
      %v1075 = vand.u32 %v1074, 4294901760
      %1076 = vmatpush2.msra.mxu0 %v1075
      %1077 = vmatprep.subr.mxu0 0.0
      %v1078 = vand.u32 %v325, 4294901760
      %v1079 = vsub.f32 %v325, %v1078
      %v1080 = vand.u32 %v1079, 4294901760
      %1081 = vmatpush2.msra.mxu0 %v1080
      %1082 = vmatprep.subr.mxu0 0.0
      %v1083 = vand.u32 %v324, 4294901760
      %v1084 = vsub.f32 %v324, %v1083
      %v1085 = vand.u32 %v1084, 4294901760
      %1086 = vmatpush2.msra.mxu0 %v1085
      %1087 = vmatprep.subr.mxu0 0.0
      %v1088 = vand.u32 %v323, 4294901760
      %v1089 = vsub.f32 %v323, %v1088
      %v1090 = vand.u32 %v1089, 4294901760
      %1091 = vmatpush2.msra.mxu0 %v1090
      %v1092 = vand.u32 %v340, 4294901760
      %1093 = vmatprep.mubr.f32.mxu0 %v1092
      %v1094 = vand.u32 %v306, 4294901760
      %1095 = vmatmul.mubr.f32.gmra.mxu0 %v1094
      %v1096 = vpop.f32.mrf.mxu0
      %v1097 = vadd.f32 %v929, %v1096
      %v1098 = vpop.f32.mrf.mxu0
      %1099 = vdwg.mxu0
      %1100 = vmatprep.subr.mxu0 0.0
      %v1101 = vand.u32 %v322, 4294901760
      %1102 = vmatpush1.msra.mxu0 %v1101
      %1103 = vmatprep.subr.mxu0 0.0
      %v1104 = vand.u32 %v321, 4294901760
      %1105 = vmatpush1.msra.mxu0 %v1104
      %1106 = vmatprep.subr.mxu0 0.0
      %v1107 = vand.u32 %v320, 4294901760
      %1108 = vmatpush1.msra.mxu0 %v1107
      %1109 = vmatprep.subr.mxu0 0.0
      %v1110 = vand.u32 %v319, 4294901760
      %1111 = vmatpush1.msra.mxu0 %v1110
      %1112 = vmatprep.subr.mxu0 0.0
      %v1113 = vand.u32 %v318, 4294901760
      %1114 = vmatpush1.msra.mxu0 %v1113
      %1115 = vmatprep.subr.mxu0 0.0
      %v1116 = vand.u32 %v317, 4294901760
      %1117 = vmatpush1.msra.mxu0 %v1116
      %1118 = vmatprep.subr.mxu0 0.0
      %v1119 = vand.u32 %v316, 4294901760
      %1120 = vmatpush1.msra.mxu0 %v1119
      %1121 = vmatprep.subr.mxu0 0.0
      %v1122 = vand.u32 %v315, 4294901760
      %1123 = vmatpush1.msra.mxu0 %v1122
      %1124 = vmatprep.subr.mxu0 0.0
      %v1125 = vand.u32 %v314, 4294901760
      %1126 = vmatpush1.msra.mxu0 %v1125
      %1127 = vmatprep.subr.mxu0 0.0
      %v1128 = vand.u32 %v313, 4294901760
      %1129 = vmatpush1.msra.mxu0 %v1128
      %1130 = vmatprep.subr.mxu0 0.0
      %v1131 = vand.u32 %v312, 4294901760
      %1132 = vmatpush1.msra.mxu0 %v1131
      %1133 = vmatprep.subr.mxu0 0.0
      %v1134 = vand.u32 %v311, 4294901760
      %1135 = vmatpush1.msra.mxu0 %v1134
      %1136 = vmatprep.subr.mxu0 0.0
      %v1137 = vand.u32 %v310, 4294901760
      %1138 = vmatpush1.msra.mxu0 %v1137
      %1139 = vmatprep.subr.mxu0 0.0
      %v1140 = vand.u32 %v309, 4294901760
      %1141 = vmatpush1.msra.mxu0 %v1140
      %1142 = vmatprep.subr.mxu0 0.0
      %v1143 = vand.u32 %v308, 4294901760
      %1144 = vmatpush1.msra.mxu0 %v1143
      %1145 = vmatprep.subr.mxu0 0.0
      %v1146 = vand.u32 %v307, 4294901760
      %1147 = vmatpush1.msra.mxu0 %v1146
      %1148 = vmatprep.subr.mxu0 0.0
      %v1149 = vand.u32 %v338, 4294901760
      %1150 = vmatpush2.msra.mxu0 %v1149
      %1151 = vmatprep.subr.mxu0 0.0
      %v1152 = vand.u32 %v337, 4294901760
      %1153 = vmatpush2.msra.mxu0 %v1152
      %1154 = vmatprep.subr.mxu0 0.0
      %v1155 = vand.u32 %v336, 4294901760
      %1156 = vmatpush2.msra.mxu0 %v1155
      %1157 = vmatprep.subr.mxu0 0.0
      %v1158 = vand.u32 %v335, 4294901760
      %1159 = vmatpush2.msra.mxu0 %v1158
      %1160 = vmatprep.subr.mxu0 0.0
      %v1161 = vand.u32 %v334, 4294901760
      %1162 = vmatpush2.msra.mxu0 %v1161
      %1163 = vmatprep.subr.mxu0 0.0
      %v1164 = vand.u32 %v333, 4294901760
      %1165 = vmatpush2.msra.mxu0 %v1164
      %1166 = vmatprep.subr.mxu0 0.0
      %v1167 = vand.u32 %v332, 4294901760
      %1168 = vmatpush2.msra.mxu0 %v1167
      %1169 = vmatprep.subr.mxu0 0.0
      %v1170 = vand.u32 %v331, 4294901760
      %1171 = vmatpush2.msra.mxu0 %v1170
      %1172 = vmatprep.subr.mxu0 0.0
      %v1173 = vand.u32 %v330, 4294901760
      %1174 = vmatpush2.msra.mxu0 %v1173
      %1175 = vmatprep.subr.mxu0 0.0
      %v1176 = vand.u32 %v329, 4294901760
      %1177 = vmatpush2.msra.mxu0 %v1176
      %1178 = vmatprep.subr.mxu0 0.0
      %v1179 = vand.u32 %v328, 4294901760
      %1180 = vmatpush2.msra.mxu0 %v1179
      %1181 = vmatprep.subr.mxu0 0.0
      %v1182 = vand.u32 %v327, 4294901760
      %1183 = vmatpush2.msra.mxu0 %v1182
      %1184 = vmatprep.subr.mxu0 0.0
      %v1185 = vand.u32 %v326, 4294901760
      %1186 = vmatpush2.msra.mxu0 %v1185
      %1187 = vmatprep.subr.mxu0 0.0
      %v1188 = vand.u32 %v325, 4294901760
      %1189 = vmatpush2.msra.mxu0 %v1188
      %1190 = vmatprep.subr.mxu0 0.0
      %v1191 = vand.u32 %v324, 4294901760
      %1192 = vmatpush2.msra.mxu0 %v1191
      %1193 = vmatprep.subr.mxu0 0.0
      %v1194 = vand.u32 %v323, 4294901760
      %1195 = vmatpush2.msra.mxu0 %v1194
      %v1196 = vand.u32 %v340, 4294901760
      %1197 = vmatprep.mubr.f32.mxu0 %v1196
      %v1198 = vand.u32 %v306, 4294901760
      %1199 = vmatmul.mubr.f32.gmra.mxu0 %v1198
      %v1200 = vpop.f32.mrf.mxu0
      %v1201 = vadd.f32 %v1097, %v1200
      %v1202 = vpop.f32.mrf.mxu0
      %1203 = vdwg.mxu0
      %v1204 = vmul.f32 %v1201, 0.00390625
      %v1205 = vld [vmem:[%s2] sm:$0xff]
      %v1206 = vld [vmem:[%s2 + $0x8] sm:$0xff]
      %v1207 = vld [vmem:[%s2 + $0x10] sm:$0xff]
      %v1208 = vld [vmem:[%s2 + $0x18] sm:$0xff]
      %v1209 = vld [vmem:[%s2 + $0x20] sm:$0xff]
      %v1210 = vld [vmem:[%s2 + $0x28] sm:$0xff]
      %v1211 = vld [vmem:[%s2 + $0x30] sm:$0xff]
      %v1212 = vld [vmem:[%s2 + $0x38] sm:$0xff]
      %v1213 = vld [vmem:[%s2 + $0x40] sm:$0xff]
      %v1214 = vld [vmem:[%s2 + $0x48] sm:$0xff]
      %v1215 = vld [vmem:[%s2 + $0x50] sm:$0xff]
      %v1216 = vld [vmem:[%s2 + $0x58] sm:$0xff]
      %v1217 = vld [vmem:[%s2 + $0x60] sm:$0xff]
      %v1218 = vld [vmem:[%s2 + $0x68] sm:$0xff]
      %v1219 = vld [vmem:[%s2 + $0x70] sm:$0xff]
      %v1220 = vld [vmem:[%s2 + $0x78] sm:$0xff]
      %v1221 = vld [vmem:[%s2 + $0x80] sm:$0xff]
      %v1222 = vld [vmem:[%s2 + $0x88] sm:$0xff]
      %v1223 = vld [vmem:[%s2 + $0x90] sm:$0xff]
      %v1224 = vld [vmem:[%s2 + $0x98] sm:$0xff]
      %v1225 = vld [vmem:[%s2 + $0xa0] sm:$0xff]
      %v1226 = vld [vmem:[%s2 + $0xa8] sm:$0xff]
      %v1227 = vld [vmem:[%s2 + $0xb0] sm:$0xff]
      %v1228 = vld [vmem:[%s2 + $0xb8] sm:$0xff]
      %v1229 = vld [vmem:[%s2 + $0xc0] sm:$0xff]
      %v1230 = vld [vmem:[%s2 + $0xc8] sm:$0xff]
      %v1231 = vld [vmem:[%s2 + $0xd0] sm:$0xff]
      %v1232 = vld [vmem:[%s2 + $0xd8] sm:$0xff]
      %v1233 = vld [vmem:[%s2 + $0xe0] sm:$0xff]
      %v1234 = vld [vmem:[%s2 + $0xe8] sm:$0xff]
      %v1235 = vld [vmem:[%s2 + $0xf0] sm:$0xff]
      %v1236 = vld [vmem:[%s2 + $0xf8] sm:$0xff]
      %1237 = vmatprep.subr.mxu0 0.0
      %v1238 = vand.u32 %v1220, 4294901760
      %1239 = vmatpush1.msra.mxu0 %v1238
      %1240 = vmatprep.subr.mxu0 0.0
      %v1241 = vand.u32 %v1219, 4294901760
      %1242 = vmatpush1.msra.mxu0 %v1241
      %1243 = vmatprep.subr.mxu0 0.0
      %v1244 = vand.u32 %v1218, 4294901760
      %1245 = vmatpush1.msra.mxu0 %v1244
      %1246 = vmatprep.subr.mxu0 0.0
      %v1247 = vand.u32 %v1217, 4294901760
      %1248 = vmatpush1.msra.mxu0 %v1247
      %1249 = vmatprep.subr.mxu0 0.0
      %v1250 = vand.u32 %v1216, 4294901760
      %1251 = vmatpush1.msra.mxu0 %v1250
      %1252 = vmatprep.subr.mxu0 0.0
      %v1253 = vand.u32 %v1215, 4294901760
      %1254 = vmatpush1.msra.mxu0 %v1253
      %1255 = vmatprep.subr.mxu0 0.0
      %v1256 = vand.u32 %v1214, 4294901760
      %1257 = vmatpush1.msra.mxu0 %v1256
      %1258 = vmatprep.subr.mxu0 0.0
      %v1259 = vand.u32 %v1213, 4294901760
      %1260 = vmatpush1.msra.mxu0 %v1259
      %1261 = vmatprep.subr.mxu0 0.0
      %v1262 = vand.u32 %v1212, 4294901760
      %1263 = vmatpush1.msra.mxu0 %v1262
      %1264 = vmatprep.subr.mxu0 0.0
      %v1265 = vand.u32 %v1211, 4294901760
      %1266 = vmatpush1.msra.mxu0 %v1265
      %1267 = vmatprep.subr.mxu0 0.0
      %v1268 = vand.u32 %v1210, 4294901760
      %1269 = vmatpush1.msra.mxu0 %v1268
      %1270 = vmatprep.subr.mxu0 0.0
      %v1271 = vand.u32 %v1209, 4294901760
      %1272 = vmatpush1.msra.mxu0 %v1271
      %1273 = vmatprep.subr.mxu0 0.0
      %v1274 = vand.u32 %v1208, 4294901760
      %1275 = vmatpush1.msra.mxu0 %v1274
      %1276 = vmatprep.subr.mxu0 0.0
      %v1277 = vand.u32 %v1207, 4294901760
      %1278 = vmatpush1.msra.mxu0 %v1277
      %1279 = vmatprep.subr.mxu0 0.0
      %v1280 = vand.u32 %v1206, 4294901760
      %1281 = vmatpush1.msra.mxu0 %v1280
      %1282 = vmatprep.subr.mxu0 0.0
      %v1283 = vand.u32 %v1205, 4294901760
      %1284 = vmatpush1.msra.mxu0 %v1283
      %1285 = vmatprep.subr.mxu0 0.0
      %v1286 = vand.u32 %v1236, 4294901760
      %1287 = vmatpush2.msra.mxu0 %v1286
      %1288 = vmatprep.subr.mxu0 0.0
      %v1289 = vand.u32 %v1235, 4294901760
      %1290 = vmatpush2.msra.mxu0 %v1289
      %1291 = vmatprep.subr.mxu0 0.0
      %v1292 = vand.u32 %v1234, 4294901760
      %1293 = vmatpush2.msra.mxu0 %v1292
      %1294 = vmatprep.subr.mxu0 0.0
      %v1295 = vand.u32 %v1233, 4294901760
      %1296 = vmatpush2.msra.mxu0 %v1295
      %1297 = vmatprep.subr.mxu0 0.0
      %v1298 = vand.u32 %v1232, 4294901760
      %1299 = vmatpush2.msra.mxu0 %v1298
      %1300 = vmatprep.subr.mxu0 0.0
      %v1301 = vand.u32 %v1231, 4294901760
      %1302 = vmatpush2.msra.mxu0 %v1301
      %1303 = vmatprep.subr.mxu0 0.0
      %v1304 = vand.u32 %v1230, 4294901760
      %1305 = vmatpush2.msra.mxu0 %v1304
      %1306 = vmatprep.subr.mxu0 0.0
      %v1307 = vand.u32 %v1229, 4294901760
      %1308 = vmatpush2.msra.mxu0 %v1307
      %1309 = vmatprep.subr.mxu0 0.0
      %v1310 = vand.u32 %v1228, 4294901760
      %1311 = vmatpush2.msra.mxu0 %v1310
      %1312 = vmatprep.subr.mxu0 0.0
      %v1313 = vand.u32 %v1227, 4294901760
      %1314 = vmatpush2.msra.mxu0 %v1313
      %1315 = vmatprep.subr.mxu0 0.0
      %v1316 = vand.u32 %v1226, 4294901760
      %1317 = vmatpush2.msra.mxu0 %v1316
      %1318 = vmatprep.subr.mxu0 0.0
      %v1319 = vand.u32 %v1225, 4294901760
      %1320 = vmatpush2.msra.mxu0 %v1319
      %1321 = vmatprep.subr.mxu0 0.0
      %v1322 = vand.u32 %v1224, 4294901760
      %1323 = vmatpush2.msra.mxu0 %v1322
      %1324 = vmatprep.subr.mxu0 0.0
      %v1325 = vand.u32 %v1223, 4294901760
      %1326 = vmatpush2.msra.mxu0 %v1325
      %1327 = vmatprep.subr.mxu0 0.0
      %v1328 = vand.u32 %v1222, 4294901760
      %1329 = vmatpush2.msra.mxu0 %v1328
      %1330 = vmatprep.subr.mxu0 0.0
      %v1331 = vand.u32 %v1221, 4294901760
      %1332 = vmatpush2.msra.mxu0 %v1331
      %v1333 = vand.u32 %v340, 4294901760
      %v1334 = vsub.f32 %v340, %v1333
      %v1335 = vand.u32 %v1334, 4294901760
      %v1336 = vsub.f32 %v1334, %v1335
      %v1337 = vand.u32 %v1336, 4294901760
      %1338 = vmatprep.mubr.f32.mxu0 %v1337
      %v1339 = vand.u32 %v306, 4294901760
      %v1340 = vsub.f32 %v306, %v1339
      %v1341 = vand.u32 %v1340, 4294901760
      %v1342 = vsub.f32 %v1340, %v1341
      %v1343 = vand.u32 %v1342, 4294901760
      %1344 = vmatmul.mubr.f32.gmra.mxu0 %v1343
      %v1345 = vpop.f32.mrf.mxu0
      %v1346 = vadd.f32 0.0, %v1345
      %v1347 = vpop.f32.mrf.mxu0
      %1348 = vdwg.mxu0
      %1349 = vmatprep.subr.mxu0 0.0
      %v1350 = vand.u32 %v1220, 4294901760
      %v1351 = vsub.f32 %v1220, %v1350
      %v1352 = vand.u32 %v1351, 4294901760
      %v1353 = vsub.f32 %v1351, %v1352
      %v1354 = vand.u32 %v1353, 4294901760
      %1355 = vmatpush1.msra.mxu0 %v1354
      %1356 = vmatprep.subr.mxu0 0.0
      %v1357 = vand.u32 %v1219, 4294901760
      %v1358 = vsub.f32 %v1219, %v1357
      %v1359 = vand.u32 %v1358, 4294901760
      %v1360 = vsub.f32 %v1358, %v1359
      %v1361 = vand.u32 %v1360, 4294901760
      %1362 = vmatpush1.msra.mxu0 %v1361
      %1363 = vmatprep.subr.mxu0 0.0
      %v1364 = vand.u32 %v1218, 4294901760
      %v1365 = vsub.f32 %v1218, %v1364
      %v1366 = vand.u32 %v1365, 4294901760
      %v1367 = vsub.f32 %v1365, %v1366
      %v1368 = vand.u32 %v1367, 4294901760
      %1369 = vmatpush1.msra.mxu0 %v1368
      %1370 = vmatprep.subr.mxu0 0.0
      %v1371 = vand.u32 %v1217, 4294901760
      %v1372 = vsub.f32 %v1217, %v1371
      %v1373 = vand.u32 %v1372, 4294901760
      %v1374 = vsub.f32 %v1372, %v1373
      %v1375 = vand.u32 %v1374, 4294901760
      %1376 = vmatpush1.msra.mxu0 %v1375
      %1377 = vmatprep.subr.mxu0 0.0
      %v1378 = vand.u32 %v1216, 4294901760
      %v1379 = vsub.f32 %v1216, %v1378
      %v1380 = vand.u32 %v1379, 4294901760
      %v1381 = vsub.f32 %v1379, %v1380
      %v1382 = vand.u32 %v1381, 4294901760
      %1383 = vmatpush1.msra.mxu0 %v1382
      %1384 = vmatprep.subr.mxu0 0.0
      %v1385 = vand.u32 %v1215, 4294901760
      %v1386 = vsub.f32 %v1215, %v1385
      %v1387 = vand.u32 %v1386, 4294901760
      %v1388 = vsub.f32 %v1386, %v1387
      %v1389 = vand.u32 %v1388, 4294901760
      %1390 = vmatpush1.msra.mxu0 %v1389
      %1391 = vmatprep.subr.mxu0 0.0
      %v1392 = vand.u32 %v1214, 4294901760
      %v1393 = vsub.f32 %v1214, %v1392
      %v1394 = vand.u32 %v1393, 4294901760
      %v1395 = vsub.f32 %v1393, %v1394
      %v1396 = vand.u32 %v1395, 4294901760
      %1397 = vmatpush1.msra.mxu0 %v1396
      %1398 = vmatprep.subr.mxu0 0.0
      %v1399 = vand.u32 %v1213, 4294901760
      %v1400 = vsub.f32 %v1213, %v1399
      %v1401 = vand.u32 %v1400, 4294901760
      %v1402 = vsub.f32 %v1400, %v1401
      %v1403 = vand.u32 %v1402, 4294901760
      %1404 = vmatpush1.msra.mxu0 %v1403
      %1405 = vmatprep.subr.mxu0 0.0
      %v1406 = vand.u32 %v1212, 4294901760
      %v1407 = vsub.f32 %v1212, %v1406
      %v1408 = vand.u32 %v1407, 4294901760
      %v1409 = vsub.f32 %v1407, %v1408
      %v1410 = vand.u32 %v1409, 4294901760
      %1411 = vmatpush1.msra.mxu0 %v1410
      %1412 = vmatprep.subr.mxu0 0.0
      %v1413 = vand.u32 %v1211, 4294901760
      %v1414 = vsub.f32 %v1211, %v1413
      %v1415 = vand.u32 %v1414, 4294901760
      %v1416 = vsub.f32 %v1414, %v1415
      %v1417 = vand.u32 %v1416, 4294901760
      %1418 = vmatpush1.msra.mxu0 %v1417
      %1419 = vmatprep.subr.mxu0 0.0
      %v1420 = vand.u32 %v1210, 4294901760
      %v1421 = vsub.f32 %v1210, %v1420
      %v1422 = vand.u32 %v1421, 4294901760
      %v1423 = vsub.f32 %v1421, %v1422
      %v1424 = vand.u32 %v1423, 4294901760
      %1425 = vmatpush1.msra.mxu0 %v1424
      %1426 = vmatprep.subr.mxu0 0.0
      %v1427 = vand.u32 %v1209, 4294901760
      %v1428 = vsub.f32 %v1209, %v1427
      %v1429 = vand.u32 %v1428, 4294901760
      %v1430 = vsub.f32 %v1428, %v1429
      %v1431 = vand.u32 %v1430, 4294901760
      %1432 = vmatpush1.msra.mxu0 %v1431
      %1433 = vmatprep.subr.mxu0 0.0
      %v1434 = vand.u32 %v1208, 4294901760
      %v1435 = vsub.f32 %v1208, %v1434
      %v1436 = vand.u32 %v1435, 4294901760
      %v1437 = vsub.f32 %v1435, %v1436
      %v1438 = vand.u32 %v1437, 4294901760
      %1439 = vmatpush1.msra.mxu0 %v1438
      %1440 = vmatprep.subr.mxu0 0.0
      %v1441 = vand.u32 %v1207, 4294901760
      %v1442 = vsub.f32 %v1207, %v1441
      %v1443 = vand.u32 %v1442, 4294901760
      %v1444 = vsub.f32 %v1442, %v1443
      %v1445 = vand.u32 %v1444, 4294901760
      %1446 = vmatpush1.msra.mxu0 %v1445
      %1447 = vmatprep.subr.mxu0 0.0
      %v1448 = vand.u32 %v1206, 4294901760
      %v1449 = vsub.f32 %v1206, %v1448
      %v1450 = vand.u32 %v1449, 4294901760
      %v1451 = vsub.f32 %v1449, %v1450
      %v1452 = vand.u32 %v1451, 4294901760
      %1453 = vmatpush1.msra.mxu0 %v1452
      %1454 = vmatprep.subr.mxu0 0.0
      %v1455 = vand.u32 %v1205, 4294901760
      %v1456 = vsub.f32 %v1205, %v1455
      %v1457 = vand.u32 %v1456, 4294901760
      %v1458 = vsub.f32 %v1456, %v1457
      %v1459 = vand.u32 %v1458, 4294901760
      %1460 = vmatpush1.msra.mxu0 %v1459
      %1461 = vmatprep.subr.mxu0 0.0
      %v1462 = vand.u32 %v1236, 4294901760
      %v1463 = vsub.f32 %v1236, %v1462
      %v1464 = vand.u32 %v1463, 4294901760
      %v1465 = vsub.f32 %v1463, %v1464
      %v1466 = vand.u32 %v1465, 4294901760
      %1467 = vmatpush2.msra.mxu0 %v1466
      %1468 = vmatprep.subr.mxu0 0.0
      %v1469 = vand.u32 %v1235, 4294901760
      %v1470 = vsub.f32 %v1235, %v1469
      %v1471 = vand.u32 %v1470, 4294901760
      %v1472 = vsub.f32 %v1470, %v1471
      %v1473 = vand.u32 %v1472, 4294901760
      %1474 = vmatpush2.msra.mxu0 %v1473
      %1475 = vmatprep.subr.mxu0 0.0
      %v1476 = vand.u32 %v1234, 4294901760
      %v1477 = vsub.f32 %v1234, %v1476
      %v1478 = vand.u32 %v1477, 4294901760
      %v1479 = vsub.f32 %v1477, %v1478
      %v1480 = vand.u32 %v1479, 4294901760
      %1481 = vmatpush2.msra.mxu0 %v1480
      %1482 = vmatprep.subr.mxu0 0.0
      %v1483 = vand.u32 %v1233, 4294901760
      %v1484 = vsub.f32 %v1233, %v1483
      %v1485 = vand.u32 %v1484, 4294901760
      %v1486 = vsub.f32 %v1484, %v1485
      %v1487 = vand.u32 %v1486, 4294901760
      %1488 = vmatpush2.msra.mxu0 %v1487
      %1489 = vmatprep.subr.mxu0 0.0
      %v1490 = vand.u32 %v1232, 4294901760
      %v1491 = vsub.f32 %v1232, %v1490
      %v1492 = vand.u32 %v1491, 4294901760
      %v1493 = vsub.f32 %v1491, %v1492
      %v1494 = vand.u32 %v1493, 4294901760
      %1495 = vmatpush2.msra.mxu0 %v1494
      %1496 = vmatprep.subr.mxu0 0.0
      %v1497 = vand.u32 %v1231, 4294901760
      %v1498 = vsub.f32 %v1231, %v1497
      %v1499 = vand.u32 %v1498, 4294901760
      %v1500 = vsub.f32 %v1498, %v1499
      %v1501 = vand.u32 %v1500, 4294901760
      %1502 = vmatpush2.msra.mxu0 %v1501
      %1503 = vmatprep.subr.mxu0 0.0
      %v1504 = vand.u32 %v1230, 4294901760
      %v1505 = vsub.f32 %v1230, %v1504
      %v1506 = vand.u32 %v1505, 4294901760
      %v1507 = vsub.f32 %v1505, %v1506
      %v1508 = vand.u32 %v1507, 4294901760
      %1509 = vmatpush2.msra.mxu0 %v1508
      %1510 = vmatprep.subr.mxu0 0.0
      %v1511 = vand.u32 %v1229, 4294901760
      %v1512 = vsub.f32 %v1229, %v1511
      %v1513 = vand.u32 %v1512, 4294901760
      %v1514 = vsub.f32 %v1512, %v1513
      %v1515 = vand.u32 %v1514, 4294901760
      %1516 = vmatpush2.msra.mxu0 %v1515
      %1517 = vmatprep.subr.mxu0 0.0
      %v1518 = vand.u32 %v1228, 4294901760
      %v1519 = vsub.f32 %v1228, %v1518
      %v1520 = vand.u32 %v1519, 4294901760
      %v1521 = vsub.f32 %v1519, %v1520
      %v1522 = vand.u32 %v1521, 4294901760
      %1523 = vmatpush2.msra.mxu0 %v1522
      %1524 = vmatprep.subr.mxu0 0.0
      %v1525 = vand.u32 %v1227, 4294901760
      %v1526 = vsub.f32 %v1227, %v1525
      %v1527 = vand.u32 %v1526, 4294901760
      %v1528 = vsub.f32 %v1526, %v1527
      %v1529 = vand.u32 %v1528, 4294901760
      %1530 = vmatpush2.msra.mxu0 %v1529
      %1531 = vmatprep.subr.mxu0 0.0
      %v1532 = vand.u32 %v1226, 4294901760
      %v1533 = vsub.f32 %v1226, %v1532
      %v1534 = vand.u32 %v1533, 4294901760
      %v1535 = vsub.f32 %v1533, %v1534
      %v1536 = vand.u32 %v1535, 4294901760
      %1537 = vmatpush2.msra.mxu0 %v1536
      %1538 = vmatprep.subr.mxu0 0.0
      %v1539 = vand.u32 %v1225, 4294901760
      %v1540 = vsub.f32 %v1225, %v1539
      %v1541 = vand.u32 %v1540, 4294901760
      %v1542 = vsub.f32 %v1540, %v1541
      %v1543 = vand.u32 %v1542, 4294901760
      %1544 = vmatpush2.msra.mxu0 %v1543
      %1545 = vmatprep.subr.mxu0 0.0
      %v1546 = vand.u32 %v1224, 4294901760
      %v1547 = vsub.f32 %v1224, %v1546
      %v1548 = vand.u32 %v1547, 4294901760
      %v1549 = vsub.f32 %v1547, %v1548
      %v1550 = vand.u32 %v1549, 4294901760
      %1551 = vmatpush2.msra.mxu0 %v1550
      %1552 = vmatprep.subr.mxu0 0.0
      %v1553 = vand.u32 %v1223, 4294901760
      %v1554 = vsub.f32 %v1223, %v1553
      %v1555 = vand.u32 %v1554, 4294901760
      %v1556 = vsub.f32 %v1554, %v1555
      %v1557 = vand.u32 %v1556, 4294901760
      %1558 = vmatpush2.msra.mxu0 %v1557
      %1559 = vmatprep.subr.mxu0 0.0
      %v1560 = vand.u32 %v1222, 4294901760
      %v1561 = vsub.f32 %v1222, %v1560
      %v1562 = vand.u32 %v1561, 4294901760
      %v1563 = vsub.f32 %v1561, %v1562
      %v1564 = vand.u32 %v1563, 4294901760
      %1565 = vmatpush2.msra.mxu0 %v1564
      %1566 = vmatprep.subr.mxu0 0.0
      %v1567 = vand.u32 %v1221, 4294901760
      %v1568 = vsub.f32 %v1221, %v1567
      %v1569 = vand.u32 %v1568, 4294901760
      %v1570 = vsub.f32 %v1568, %v1569
      %v1571 = vand.u32 %v1570, 4294901760
      %1572 = vmatpush2.msra.mxu0 %v1571
      %v1573 = vand.u32 %v340, 4294901760
      %1574 = vmatprep.mubr.f32.mxu0 %v1573
      %v1575 = vand.u32 %v306, 4294901760
      %1576 = vmatmul.mubr.f32.gmra.mxu0 %v1575
      %v1577 = vpop.f32.mrf.mxu0
      %v1578 = vadd.f32 %v1346, %v1577
      %v1579 = vpop.f32.mrf.mxu0
      %1580 = vdwg.mxu0
      %1581 = vmatprep.subr.mxu0 0.0
      %v1582 = vand.u32 %v1220, 4294901760
      %v1583 = vsub.f32 %v1220, %v1582
      %1584 = vmatpush1.msra.mxu0 %v1583
      %1585 = vmatprep.subr.mxu0 0.0
      %v1586 = vand.u32 %v1219, 4294901760
      %v1587 = vsub.f32 %v1219, %v1586
      %1588 = vmatpush1.msra.mxu0 %v1587
      %1589 = vmatprep.subr.mxu0 0.0
      %v1590 = vand.u32 %v1218, 4294901760
      %v1591 = vsub.f32 %v1218, %v1590
      %1592 = vmatpush1.msra.mxu0 %v1591
      %1593 = vmatprep.subr.mxu0 0.0
      %v1594 = vand.u32 %v1217, 4294901760
      %v1595 = vsub.f32 %v1217, %v1594
      %1596 = vmatpush1.msra.mxu0 %v1595
      %1597 = vmatprep.subr.mxu0 0.0
      %v1598 = vand.u32 %v1216, 4294901760
      %v1599 = vsub.f32 %v1216, %v1598
      %1600 = vmatpush1.msra.mxu0 %v1599
      %1601 = vmatprep.subr.mxu0 0.0
      %v1602 = vand.u32 %v1215, 4294901760
      %v1603 = vsub.f32 %v1215, %v1602
      %1604 = vmatpush1.msra.mxu0 %v1603
      %1605 = vmatprep.subr.mxu0 0.0
      %v1606 = vand.u32 %v1214, 4294901760
      %v1607 = vsub.f32 %v1214, %v1606
      %1608 = vmatpush1.msra.mxu0 %v1607
      %1609 = vmatprep.subr.mxu0 0.0
      %v1610 = vand.u32 %v1213, 4294901760
      %v1611 = vsub.f32 %v1213, %v1610
      %1612 = vmatpush1.msra.mxu0 %v1611
      %1613 = vmatprep.subr.mxu0 0.0
      %v1614 = vand.u32 %v1212, 4294901760
      %v1615 = vsub.f32 %v1212, %v1614
      %1616 = vmatpush1.msra.mxu0 %v1615
      %1617 = vmatprep.subr.mxu0 0.0
      %v1618 = vand.u32 %v1211, 4294901760
      %v1619 = vsub.f32 %v1211, %v1618
      %1620 = vmatpush1.msra.mxu0 %v1619
      %1621 = vmatprep.subr.mxu0 0.0
      %v1622 = vand.u32 %v1210, 4294901760
      %v1623 = vsub.f32 %v1210, %v1622
      %1624 = vmatpush1.msra.mxu0 %v1623
      %1625 = vmatprep.subr.mxu0 0.0
      %v1626 = vand.u32 %v1209, 4294901760
      %v1627 = vsub.f32 %v1209, %v1626
      %1628 = vmatpush1.msra.mxu0 %v1627
      %1629 = vmatprep.subr.mxu0 0.0
      %v1630 = vand.u32 %v1208, 4294901760
      %v1631 = vsub.f32 %v1208, %v1630
      %1632 = vmatpush1.msra.mxu0 %v1631
      %1633 = vmatprep.subr.mxu0 0.0
      %v1634 = vand.u32 %v1207, 4294901760
      %v1635 = vsub.f32 %v1207, %v1634
      %1636 = vmatpush1.msra.mxu0 %v1635
      %1637 = vmatprep.subr.mxu0 0.0
      %v1638 = vand.u32 %v1206, 4294901760
      %v1639 = vsub.f32 %v1206, %v1638
      %1640 = vmatpush1.msra.mxu0 %v1639
      %1641 = vmatprep.subr.mxu0 0.0
      %v1642 = vand.u32 %v1205, 4294901760
      %v1643 = vsub.f32 %v1205, %v1642
      %1644 = vmatpush1.msra.mxu0 %v1643
      %1645 = vmatprep.subr.mxu0 0.0
      %v1646 = vand.u32 %v1236, 4294901760
      %v1647 = vsub.f32 %v1236, %v1646
      %1648 = vmatpush2.msra.mxu0 %v1647
      %1649 = vmatprep.subr.mxu0 0.0
      %v1650 = vand.u32 %v1235, 4294901760
      %v1651 = vsub.f32 %v1235, %v1650
      %1652 = vmatpush2.msra.mxu0 %v1651
      %1653 = vmatprep.subr.mxu0 0.0
      %v1654 = vand.u32 %v1234, 4294901760
      %v1655 = vsub.f32 %v1234, %v1654
      %1656 = vmatpush2.msra.mxu0 %v1655
      %1657 = vmatprep.subr.mxu0 0.0
      %v1658 = vand.u32 %v1233, 4294901760
      %v1659 = vsub.f32 %v1233, %v1658
      %1660 = vmatpush2.msra.mxu0 %v1659
      %1661 = vmatprep.subr.mxu0 0.0
      %v1662 = vand.u32 %v1232, 4294901760
      %v1663 = vsub.f32 %v1232, %v1662
      %1664 = vmatpush2.msra.mxu0 %v1663
      %1665 = vmatprep.subr.mxu0 0.0
      %v1666 = vand.u32 %v1231, 4294901760
      %v1667 = vsub.f32 %v1231, %v1666
      %1668 = vmatpush2.msra.mxu0 %v1667
      %1669 = vmatprep.subr.mxu0 0.0
      %v1670 = vand.u32 %v1230, 4294901760
      %v1671 = vsub.f32 %v1230, %v1670
      %1672 = vmatpush2.msra.mxu0 %v1671
      %1673 = vmatprep.subr.mxu0 0.0
      %v1674 = vand.u32 %v1229, 4294901760
      %v1675 = vsub.f32 %v1229, %v1674
      %1676 = vmatpush2.msra.mxu0 %v1675
      %1677 = vmatprep.subr.mxu0 0.0
      %v1678 = vand.u32 %v1228, 4294901760
      %v1679 = vsub.f32 %v1228, %v1678
      %1680 = vmatpush2.msra.mxu0 %v1679
      %1681 = vmatprep.subr.mxu0 0.0
      %v1682 = vand.u32 %v1227, 4294901760
      %v1683 = vsub.f32 %v1227, %v1682
      %1684 = vmatpush2.msra.mxu0 %v1683
      %1685 = vmatprep.subr.mxu0 0.0
      %v1686 = vand.u32 %v1226, 4294901760
      %v1687 = vsub.f32 %v1226, %v1686
      %1688 = vmatpush2.msra.mxu0 %v1687
      %1689 = vmatprep.subr.mxu0 0.0
      %v1690 = vand.u32 %v1225, 4294901760
      %v1691 = vsub.f32 %v1225, %v1690
      %1692 = vmatpush2.msra.mxu0 %v1691
      %1693 = vmatprep.subr.mxu0 0.0
      %v1694 = vand.u32 %v1224, 4294901760
      %v1695 = vsub.f32 %v1224, %v1694
      %1696 = vmatpush2.msra.mxu0 %v1695
      %1697 = vmatprep.subr.mxu0 0.0
      %v1698 = vand.u32 %v1223, 4294901760
      %v1699 = vsub.f32 %v1223, %v1698
      %1700 = vmatpush2.msra.mxu0 %v1699
      %1701 = vmatprep.subr.mxu0 0.0
      %v1702 = vand.u32 %v1222, 4294901760
      %v1703 = vsub.f32 %v1222, %v1702
      %1704 = vmatpush2.msra.mxu0 %v1703
      %1705 = vmatprep.subr.mxu0 0.0
      %v1706 = vand.u32 %v1221, 4294901760
      %v1707 = vsub.f32 %v1221, %v1706
      %1708 = vmatpush2.msra.mxu0 %v1707
      %v1709 = vand.u32 %v340, 4294901760
      %v1710 = vsub.f32 %v340, %v1709
      %1711 = vmatprep.mubr.f32.mxu0 %v1710
      %v1712 = vand.u32 %v306, 4294901760
      %v1713 = vsub.f32 %v306, %v1712
      %1714 = vmatmul.mubr.f32.gmra.mxu0 %v1713
      %v1715 = vpop.f32.mrf.mxu0
      %v1716 = vadd.f32 %v1578, %v1715
      %v1717 = vpop.f32.mrf.mxu0
      %1718 = vdwg.mxu0
      %1719 = vmatprep.subr.mxu0 0.0
      %v1720 = vand.u32 %v1220, 4294901760
      %1721 = vmatpush1.msra.mxu0 %v1720
      %1722 = vmatprep.subr.mxu0 0.0
      %v1723 = vand.u32 %v1219, 4294901760
      %1724 = vmatpush1.msra.mxu0 %v1723
      %1725 = vmatprep.subr.mxu0 0.0
      %v1726 = vand.u32 %v1218, 4294901760
      %1727 = vmatpush1.msra.mxu0 %v1726
      %1728 = vmatprep.subr.mxu0 0.0
      %v1729 = vand.u32 %v1217, 4294901760
      %1730 = vmatpush1.msra.mxu0 %v1729
      %1731 = vmatprep.subr.mxu0 0.0
      %v1732 = vand.u32 %v1216, 4294901760
      %1733 = vmatpush1.msra.mxu0 %v1732
      %1734 = vmatprep.subr.mxu0 0.0
      %v1735 = vand.u32 %v1215, 4294901760
      %1736 = vmatpush1.msra.mxu0 %v1735
      %1737 = vmatprep.subr.mxu0 0.0
      %v1738 = vand.u32 %v1214, 4294901760
      %1739 = vmatpush1.msra.mxu0 %v1738
      %1740 = vmatprep.subr.mxu0 0.0
      %v1741 = vand.u32 %v1213, 4294901760
      %1742 = vmatpush1.msra.mxu0 %v1741
      %1743 = vmatprep.subr.mxu0 0.0
      %v1744 = vand.u32 %v1212, 4294901760
      %1745 = vmatpush1.msra.mxu0 %v1744
      %1746 = vmatprep.subr.mxu0 0.0
      %v1747 = vand.u32 %v1211, 4294901760
      %1748 = vmatpush1.msra.mxu0 %v1747
      %1749 = vmatprep.subr.mxu0 0.0
      %v1750 = vand.u32 %v1210, 4294901760
      %1751 = vmatpush1.msra.mxu0 %v1750
      %1752 = vmatprep.subr.mxu0 0.0
      %v1753 = vand.u32 %v1209, 4294901760
      %1754 = vmatpush1.msra.mxu0 %v1753
      %1755 = vmatprep.subr.mxu0 0.0
      %v1756 = vand.u32 %v1208, 4294901760
      %1757 = vmatpush1.msra.mxu0 %v1756
      %1758 = vmatprep.subr.mxu0 0.0
      %v1759 = vand.u32 %v1207, 4294901760
      %1760 = vmatpush1.msra.mxu0 %v1759
      %1761 = vmatprep.subr.mxu0 0.0
      %v1762 = vand.u32 %v1206, 4294901760
      %1763 = vmatpush1.msra.mxu0 %v1762
      %1764 = vmatprep.subr.mxu0 0.0
      %v1765 = vand.u32 %v1205, 4294901760
      %1766 = vmatpush1.msra.mxu0 %v1765
      %1767 = vmatprep.subr.mxu0 0.0
      %v1768 = vand.u32 %v1236, 4294901760
      %1769 = vmatpush2.msra.mxu0 %v1768
      %1770 = vmatprep.subr.mxu0 0.0
      %v1771 = vand.u32 %v1235, 4294901760
      %1772 = vmatpush2.msra.mxu0 %v1771
      %1773 = vmatprep.subr.mxu0 0.0
      %v1774 = vand.u32 %v1234, 4294901760
      %1775 = vmatpush2.msra.mxu0 %v1774
      %1776 = vmatprep.subr.mxu0 0.0
      %v1777 = vand.u32 %v1233, 4294901760
      %1778 = vmatpush2.msra.mxu0 %v1777
      %1779 = vmatprep.subr.mxu0 0.0
      %v1780 = vand.u32 %v1232, 4294901760
      %1781 = vmatpush2.msra.mxu0 %v1780
      %1782 = vmatprep.subr.mxu0 0.0
      %v1783 = vand.u32 %v1231, 4294901760
      %1784 = vmatpush2.msra.mxu0 %v1783
      %1785 = vmatprep.subr.mxu0 0.0
      %v1786 = vand.u32 %v1230, 4294901760
      %1787 = vmatpush2.msra.mxu0 %v1786
      %1788 = vmatprep.subr.mxu0 0.0
      %v1789 = vand.u32 %v1229, 4294901760
      %1790 = vmatpush2.msra.mxu0 %v1789
      %1791 = vmatprep.subr.mxu0 0.0
      %v1792 = vand.u32 %v1228, 4294901760
      %1793 = vmatpush2.msra.mxu0 %v1792
      %1794 = vmatprep.subr.mxu0 0.0
      %v1795 = vand.u32 %v1227, 4294901760
      %1796 = vmatpush2.msra.mxu0 %v1795
      %1797 = vmatprep.subr.mxu0 0.0
      %v1798 = vand.u32 %v1226, 4294901760
      %1799 = vmatpush2.msra.mxu0 %v1798
      %1800 = vmatprep.subr.mxu0 0.0
      %v1801 = vand.u32 %v1225, 4294901760
      %1802 = vmatpush2.msra.mxu0 %v1801
      %1803 = vmatprep.subr.mxu0 0.0
      %v1804 = vand.u32 %v1224, 4294901760
      %1805 = vmatpush2.msra.mxu0 %v1804
      %1806 = vmatprep.subr.mxu0 0.0
      %v1807 = vand.u32 %v1223, 4294901760
      %1808 = vmatpush2.msra.mxu0 %v1807
      %1809 = vmatprep.subr.mxu0 0.0
      %v1810 = vand.u32 %v1222, 4294901760
      %1811 = vmatpush2.msra.mxu0 %v1810
      %1812 = vmatprep.subr.mxu0 0.0
      %v1813 = vand.u32 %v1221, 4294901760
      %1814 = vmatpush2.msra.mxu0 %v1813
      %v1815 = vand.u32 %v340, 4294901760
      %v1816 = vsub.f32 %v340, %v1815
      %v1817 = vand.u32 %v1816, 4294901760
      %1818 = vmatprep.mubr.f32.mxu0 %v1817
      %v1819 = vand.u32 %v306, 4294901760
      %v1820 = vsub.f32 %v306, %v1819
      %v1821 = vand.u32 %v1820, 4294901760
      %1822 = vmatmul.mubr.f32.gmra.mxu0 %v1821
      %v1823 = vpop.f32.mrf.mxu0
      %v1824 = vadd.f32 %v1716, %v1823
      %v1825 = vpop.f32.mrf.mxu0
      %1826 = vdwg.mxu0
      %1827 = vmatprep.subr.mxu0 0.0
      %v1828 = vand.u32 %v1220, 4294901760
      %v1829 = vsub.f32 %v1220, %v1828
      %v1830 = vand.u32 %v1829, 4294901760
      %1831 = vmatpush1.msra.mxu0 %v1830
      %1832 = vmatprep.subr.mxu0 0.0
      %v1833 = vand.u32 %v1219, 4294901760
      %v1834 = vsub.f32 %v1219, %v1833
      %v1835 = vand.u32 %v1834, 4294901760
      %1836 = vmatpush1.msra.mxu0 %v1835
      %1837 = vmatprep.subr.mxu0 0.0
      %v1838 = vand.u32 %v1218, 4294901760
      %v1839 = vsub.f32 %v1218, %v1838
      %v1840 = vand.u32 %v1839, 4294901760
      %1841 = vmatpush1.msra.mxu0 %v1840
      %1842 = vmatprep.subr.mxu0 0.0
      %v1843 = vand.u32 %v1217, 4294901760
      %v1844 = vsub.f32 %v1217, %v1843
      %v1845 = vand.u32 %v1844, 4294901760
      %1846 = vmatpush1.msra.mxu0 %v1845
      %1847 = vmatprep.subr.mxu0 0.0
      %v1848 = vand.u32 %v1216, 4294901760
      %v1849 = vsub.f32 %v1216, %v1848
      %v1850 = vand.u32 %v1849, 4294901760
      %1851 = vmatpush1.msra.mxu0 %v1850
      %1852 = vmatprep.subr.mxu0 0.0
      %v1853 = vand.u32 %v1215, 4294901760
      %v1854 = vsub.f32 %v1215, %v1853
      %v1855 = vand.u32 %v1854, 4294901760
      %1856 = vmatpush1.msra.mxu0 %v1855
      %1857 = vmatprep.subr.mxu0 0.0
      %v1858 = vand.u32 %v1214, 4294901760
      %v1859 = vsub.f32 %v1214, %v1858
      %v1860 = vand.u32 %v1859, 4294901760
      %1861 = vmatpush1.msra.mxu0 %v1860
      %1862 = vmatprep.subr.mxu0 0.0
      %v1863 = vand.u32 %v1213, 4294901760
      %v1864 = vsub.f32 %v1213, %v1863
      %v1865 = vand.u32 %v1864, 4294901760
      %1866 = vmatpush1.msra.mxu0 %v1865
      %1867 = vmatprep.subr.mxu0 0.0
      %v1868 = vand.u32 %v1212, 4294901760
      %v1869 = vsub.f32 %v1212, %v1868
      %v1870 = vand.u32 %v1869, 4294901760
      %1871 = vmatpush1.msra.mxu0 %v1870
      %1872 = vmatprep.subr.mxu0 0.0
      %v1873 = vand.u32 %v1211, 4294901760
      %v1874 = vsub.f32 %v1211, %v1873
      %v1875 = vand.u32 %v1874, 4294901760
      %1876 = vmatpush1.msra.mxu0 %v1875
      %1877 = vmatprep.subr.mxu0 0.0
      %v1878 = vand.u32 %v1210, 4294901760
      %v1879 = vsub.f32 %v1210, %v1878
      %v1880 = vand.u32 %v1879, 4294901760
      %1881 = vmatpush1.msra.mxu0 %v1880
      %1882 = vmatprep.subr.mxu0 0.0
      %v1883 = vand.u32 %v1209, 4294901760
      %v1884 = vsub.f32 %v1209, %v1883
      %v1885 = vand.u32 %v1884, 4294901760
      %1886 = vmatpush1.msra.mxu0 %v1885
      %1887 = vmatprep.subr.mxu0 0.0
      %v1888 = vand.u32 %v1208, 4294901760
      %v1889 = vsub.f32 %v1208, %v1888
      %v1890 = vand.u32 %v1889, 4294901760
      %1891 = vmatpush1.msra.mxu0 %v1890
      %1892 = vmatprep.subr.mxu0 0.0
      %v1893 = vand.u32 %v1207, 4294901760
      %v1894 = vsub.f32 %v1207, %v1893
      %v1895 = vand.u32 %v1894, 4294901760
      %1896 = vmatpush1.msra.mxu0 %v1895
      %1897 = vmatprep.subr.mxu0 0.0
      %v1898 = vand.u32 %v1206, 4294901760
      %v1899 = vsub.f32 %v1206, %v1898
      %v1900 = vand.u32 %v1899, 4294901760
      %1901 = vmatpush1.msra.mxu0 %v1900
      %1902 = vmatprep.subr.mxu0 0.0
      %v1903 = vand.u32 %v1205, 4294901760
      %v1904 = vsub.f32 %v1205, %v1903
      %v1905 = vand.u32 %v1904, 4294901760
      %1906 = vmatpush1.msra.mxu0 %v1905
      %1907 = vmatprep.subr.mxu0 0.0
      %v1908 = vand.u32 %v1236, 4294901760
      %v1909 = vsub.f32 %v1236, %v1908
      %v1910 = vand.u32 %v1909, 4294901760
      %1911 = vmatpush2.msra.mxu0 %v1910
      %1912 = vmatprep.subr.mxu0 0.0
      %v1913 = vand.u32 %v1235, 4294901760
      %v1914 = vsub.f32 %v1235, %v1913
      %v1915 = vand.u32 %v1914, 4294901760
      %1916 = vmatpush2.msra.mxu0 %v1915
      %1917 = vmatprep.subr.mxu0 0.0
      %v1918 = vand.u32 %v1234, 4294901760
      %v1919 = vsub.f32 %v1234, %v1918
      %v1920 = vand.u32 %v1919, 4294901760
      %1921 = vmatpush2.msra.mxu0 %v1920
      %1922 = vmatprep.subr.mxu0 0.0
      %v1923 = vand.u32 %v1233, 4294901760
      %v1924 = vsub.f32 %v1233, %v1923
      %v1925 = vand.u32 %v1924, 4294901760
      %1926 = vmatpush2.msra.mxu0 %v1925
      %1927 = vmatprep.subr.mxu0 0.0
      %v1928 = vand.u32 %v1232, 4294901760
      %v1929 = vsub.f32 %v1232, %v1928
      %v1930 = vand.u32 %v1929, 4294901760
      %1931 = vmatpush2.msra.mxu0 %v1930
      %1932 = vmatprep.subr.mxu0 0.0
      %v1933 = vand.u32 %v1231, 4294901760
      %v1934 = vsub.f32 %v1231, %v1933
      %v1935 = vand.u32 %v1934, 4294901760
      %1936 = vmatpush2.msra.mxu0 %v1935
      %1937 = vmatprep.subr.mxu0 0.0
      %v1938 = vand.u32 %v1230, 4294901760
      %v1939 = vsub.f32 %v1230, %v1938
      %v1940 = vand.u32 %v1939, 4294901760
      %1941 = vmatpush2.msra.mxu0 %v1940
      %1942 = vmatprep.subr.mxu0 0.0
      %v1943 = vand.u32 %v1229, 4294901760
      %v1944 = vsub.f32 %v1229, %v1943
      %v1945 = vand.u32 %v1944, 4294901760
      %1946 = vmatpush2.msra.mxu0 %v1945
      %1947 = vmatprep.subr.mxu0 0.0
      %v1948 = vand.u32 %v1228, 4294901760
      %v1949 = vsub.f32 %v1228, %v1948
      %v1950 = vand.u32 %v1949, 4294901760
      %1951 = vmatpush2.msra.mxu0 %v1950
      %1952 = vmatprep.subr.mxu0 0.0
      %v1953 = vand.u32 %v1227, 4294901760
      %v1954 = vsub.f32 %v1227, %v1953
      %v1955 = vand.u32 %v1954, 4294901760
      %1956 = vmatpush2.msra.mxu0 %v1955
      %1957 = vmatprep.subr.mxu0 0.0
      %v1958 = vand.u32 %v1226, 4294901760
      %v1959 = vsub.f32 %v1226, %v1958
      %v1960 = vand.u32 %v1959, 4294901760
      %1961 = vmatpush2.msra.mxu0 %v1960
      %1962 = vmatprep.subr.mxu0 0.0
      %v1963 = vand.u32 %v1225, 4294901760
      %v1964 = vsub.f32 %v1225, %v1963
      %v1965 = vand.u32 %v1964, 4294901760
      %1966 = vmatpush2.msra.mxu0 %v1965
      %1967 = vmatprep.subr.mxu0 0.0
      %v1968 = vand.u32 %v1224, 4294901760
      %v1969 = vsub.f32 %v1224, %v1968
      %v1970 = vand.u32 %v1969, 4294901760
      %1971 = vmatpush2.msra.mxu0 %v1970
      %1972 = vmatprep.subr.mxu0 0.0
      %v1973 = vand.u32 %v1223, 4294901760
      %v1974 = vsub.f32 %v1223, %v1973
      %v1975 = vand.u32 %v1974, 4294901760
      %1976 = vmatpush2.msra.mxu0 %v1975
      %1977 = vmatprep.subr.mxu0 0.0
      %v1978 = vand.u32 %v1222, 4294901760
      %v1979 = vsub.f32 %v1222, %v1978
      %v1980 = vand.u32 %v1979, 4294901760
      %1981 = vmatpush2.msra.mxu0 %v1980
      %1982 = vmatprep.subr.mxu0 0.0
      %v1983 = vand.u32 %v1221, 4294901760
      %v1984 = vsub.f32 %v1221, %v1983
      %v1985 = vand.u32 %v1984, 4294901760
      %1986 = vmatpush2.msra.mxu0 %v1985
      %v1987 = vand.u32 %v340, 4294901760
      %1988 = vmatprep.mubr.f32.mxu0 %v1987
      %v1989 = vand.u32 %v306, 4294901760
      %1990 = vmatmul.mubr.f32.gmra.mxu0 %v1989
      %v1991 = vpop.f32.mrf.mxu0
      %v1992 = vadd.f32 %v1824, %v1991
      %v1993 = vpop.f32.mrf.mxu0
      %1994 = vdwg.mxu0
      %1995 = vmatprep.subr.mxu0 0.0
      %v1996 = vand.u32 %v1220, 4294901760
      %1997 = vmatpush1.msra.mxu0 %v1996
      %1998 = vmatprep.subr.mxu0 0.0
      %v1999 = vand.u32 %v1219, 4294901760
      %2000 = vmatpush1.msra.mxu0 %v1999
      %2001 = vmatprep.subr.mxu0 0.0
      %v2002 = vand.u32 %v1218, 4294901760
      %2003 = vmatpush1.msra.mxu0 %v2002
      %2004 = vmatprep.subr.mxu0 0.0
      %v2005 = vand.u32 %v1217, 4294901760
      %2006 = vmatpush1.msra.mxu0 %v2005
      %2007 = vmatprep.subr.mxu0 0.0
      %v2008 = vand.u32 %v1216, 4294901760
      %2009 = vmatpush1.msra.mxu0 %v2008
      %2010 = vmatprep.subr.mxu0 0.0
      %v2011 = vand.u32 %v1215, 4294901760
      %2012 = vmatpush1.msra.mxu0 %v2011
      %2013 = vmatprep.subr.mxu0 0.0
      %v2014 = vand.u32 %v1214, 4294901760
      %2015 = vmatpush1.msra.mxu0 %v2014
      %2016 = vmatprep.subr.mxu0 0.0
      %v2017 = vand.u32 %v1213, 4294901760
      %2018 = vmatpush1.msra.mxu0 %v2017
      %2019 = vmatprep.subr.mxu0 0.0
      %v2020 = vand.u32 %v1212, 4294901760
      %2021 = vmatpush1.msra.mxu0 %v2020
      %2022 = vmatprep.subr.mxu0 0.0
      %v2023 = vand.u32 %v1211, 4294901760
      %2024 = vmatpush1.msra.mxu0 %v2023
      %2025 = vmatprep.subr.mxu0 0.0
      %v2026 = vand.u32 %v1210, 4294901760
      %2027 = vmatpush1.msra.mxu0 %v2026
      %2028 = vmatprep.subr.mxu0 0.0
      %v2029 = vand.u32 %v1209, 4294901760
      %2030 = vmatpush1.msra.mxu0 %v2029
      %2031 = vmatprep.subr.mxu0 0.0
      %v2032 = vand.u32 %v1208, 4294901760
      %2033 = vmatpush1.msra.mxu0 %v2032
      %2034 = vmatprep.subr.mxu0 0.0
      %v2035 = vand.u32 %v1207, 4294901760
      %2036 = vmatpush1.msra.mxu0 %v2035
      %2037 = vmatprep.subr.mxu0 0.0
      %v2038 = vand.u32 %v1206, 4294901760
      %2039 = vmatpush1.msra.mxu0 %v2038
      %2040 = vmatprep.subr.mxu0 0.0
      %v2041 = vand.u32 %v1205, 4294901760
      %2042 = vmatpush1.msra.mxu0 %v2041
      %2043 = vmatprep.subr.mxu0 0.0
      %v2044 = vand.u32 %v1236, 4294901760
      %2045 = vmatpush2.msra.mxu0 %v2044
      %2046 = vmatprep.subr.mxu0 0.0
      %v2047 = vand.u32 %v1235, 4294901760
      %2048 = vmatpush2.msra.mxu0 %v2047
      %2049 = vmatprep.subr.mxu0 0.0
      %v2050 = vand.u32 %v1234, 4294901760
      %2051 = vmatpush2.msra.mxu0 %v2050
      %2052 = vmatprep.subr.mxu0 0.0
      %v2053 = vand.u32 %v1233, 4294901760
      %2054 = vmatpush2.msra.mxu0 %v2053
      %2055 = vmatprep.subr.mxu0 0.0
      %v2056 = vand.u32 %v1232, 4294901760
      %2057 = vmatpush2.msra.mxu0 %v2056
      %2058 = vmatprep.subr.mxu0 0.0
      %v2059 = vand.u32 %v1231, 4294901760
      %2060 = vmatpush2.msra.mxu0 %v2059
      %2061 = vmatprep.subr.mxu0 0.0
      %v2062 = vand.u32 %v1230, 4294901760
      %2063 = vmatpush2.msra.mxu0 %v2062
      %2064 = vmatprep.subr.mxu0 0.0
      %v2065 = vand.u32 %v1229, 4294901760
      %2066 = vmatpush2.msra.mxu0 %v2065
      %2067 = vmatprep.subr.mxu0 0.0
      %v2068 = vand.u32 %v1228, 4294901760
      %2069 = vmatpush2.msra.mxu0 %v2068
      %2070 = vmatprep.subr.mxu0 0.0
      %v2071 = vand.u32 %v1227, 4294901760
      %2072 = vmatpush2.msra.mxu0 %v2071
      %2073 = vmatprep.subr.mxu0 0.0
      %v2074 = vand.u32 %v1226, 4294901760
      %2075 = vmatpush2.msra.mxu0 %v2074
      %2076 = vmatprep.subr.mxu0 0.0
      %v2077 = vand.u32 %v1225, 4294901760
      %2078 = vmatpush2.msra.mxu0 %v2077
      %2079 = vmatprep.subr.mxu0 0.0
      %v2080 = vand.u32 %v1224, 4294901760
      %2081 = vmatpush2.msra.mxu0 %v2080
      %2082 = vmatprep.subr.mxu0 0.0
      %v2083 = vand.u32 %v1223, 4294901760
      %2084 = vmatpush2.msra.mxu0 %v2083
      %2085 = vmatprep.subr.mxu0 0.0
      %v2086 = vand.u32 %v1222, 4294901760
      %2087 = vmatpush2.msra.mxu0 %v2086
      %2088 = vmatprep.subr.mxu0 0.0
      %v2089 = vand.u32 %v1221, 4294901760
      %2090 = vmatpush2.msra.mxu0 %v2089
      %v2091 = vand.u32 %v340, 4294901760
      %2092 = vmatprep.mubr.f32.mxu0 %v2091
      %v2093 = vand.u32 %v306, 4294901760
      %2094 = vmatmul.mubr.f32.gmra.mxu0 %v2093
      %v2095 = vpop.f32.mrf.mxu0
      %v2096 = vadd.f32 %v1992, %v2095
      %v2097 = vpop.f32.mrf.mxu0
      %2098 = vdwg.mxu0
      %v2099 = vld [vmem:[%s3] sm:$0x1]
      %v2101 = vlaneseq
      %v2102 = vshrl.u32 %v2101, 7
      %v2103 = vsub.s32 0, %v2102
      %v2104 = vrot.slane %v2099, %v2103
      %v2106 = vmul.f32 %v2096, %v2104
      %v2107 = vld [vmem:[%s5] sm:$0xff]
      %v2108 = vld [vmem:[%s5 + $0x8] sm:$0xff]
      %v2109 = vld [vmem:[%s4] sm:$0xff]
      %v2110 = vld [vmem:[%s4 + $0x8] sm:$0xff]
      %vm2111 = vcmask 31744
      %v2113 = vsel %vm2111, %v2109, 0
      %v2116 = vsel %vm2111, %v2110, 0
      %vm2118 = vcmask 1043456
      %v2120 = vsel %vm2118, %v1204, 0
      %2122 = vmatprep.subr.mxu0 0.0
      %2123 = vmatpush1.msra.mxu0 0.0
      %2124 = vmatprep.subr.mxu0 0.0
      %2125 = vmatpush1.msra.mxu0 0.0
      %2126 = vmatprep.subr.mxu0 0.0
      %2127 = vmatpush1.msra.mxu0 0.0
      %2128 = vmatprep.subr.mxu0 0.0
      %2129 = vmatpush1.msra.mxu0 0.0
      %2130 = vmatprep.subr.mxu0 0.0
      %2131 = vmatpush1.msra.mxu0 0.0
      %2132 = vmatprep.subr.mxu0 0.0
      %2133 = vmatpush1.msra.mxu0 0.0
      %2134 = vmatprep.subr.mxu0 0.0
      %2135 = vmatpush1.msra.mxu0 0.0
      %2136 = vmatprep.subr.mxu0 0.0
      %2137 = vmatpush1.msra.mxu0 0.0
      %2138 = vmatprep.subr.mxu0 0.0
      %2139 = vmatpush1.msra.mxu0 0.0
      %2140 = vmatprep.subr.mxu0 0.0
      %2141 = vmatpush1.msra.mxu0 0.0
      %2142 = vmatprep.subr.mxu0 0.0
      %2143 = vmatpush1.msra.mxu0 0.0
      %2144 = vmatprep.subr.mxu0 0.0
      %2145 = vmatpush1.msra.mxu0 0.0
      %2146 = vmatprep.subr.mxu0 0.0
      %2147 = vmatpush1.msra.mxu0 0.0
      %2148 = vmatprep.subr.mxu0 0.0
      %2149 = vmatpush1.msra.mxu0 0.0
      %2150 = vmatprep.subr.mxu0 0.0
      %2151 = vmatpush1.msra.mxu0 0.0
      %2152 = vmatprep.subr.mxu0 0.0
      %v2153 = vand.u32 %v2120, 4294901760
      %2154 = vmatpush1.msra.mxu0 %v2153
      %2155 = vmatprep.subr.mxu0 0.0
      %2156 = vmatpush2.msra.mxu0 0.0
      %2157 = vmatprep.subr.mxu0 0.0
      %2158 = vmatpush2.msra.mxu0 0.0
      %2159 = vmatprep.subr.mxu0 0.0
      %2160 = vmatpush2.msra.mxu0 0.0
      %2161 = vmatprep.subr.mxu0 0.0
      %2162 = vmatpush2.msra.mxu0 0.0
      %2163 = vmatprep.subr.mxu0 0.0
      %2164 = vmatpush2.msra.mxu0 0.0
      %2165 = vmatprep.subr.mxu0 0.0
      %2166 = vmatpush2.msra.mxu0 0.0
      %2167 = vmatprep.subr.mxu0 0.0
      %2168 = vmatpush2.msra.mxu0 0.0
      %2169 = vmatprep.subr.mxu0 0.0
      %2170 = vmatpush2.msra.mxu0 0.0
      %2171 = vmatprep.subr.mxu0 0.0
      %2172 = vmatpush2.msra.mxu0 0.0
      %2173 = vmatprep.subr.mxu0 0.0
      %2174 = vmatpush2.msra.mxu0 0.0
      %2175 = vmatprep.subr.mxu0 0.0
      %2176 = vmatpush2.msra.mxu0 0.0
      %2177 = vmatprep.subr.mxu0 0.0
      %2178 = vmatpush2.msra.mxu0 0.0
      %2179 = vmatprep.subr.mxu0 0.0
      %2180 = vmatpush2.msra.mxu0 0.0
      %2181 = vmatprep.subr.mxu0 0.0
      %2182 = vmatpush2.msra.mxu0 0.0
      %2183 = vmatprep.subr.mxu0 0.0
      %2184 = vmatpush2.msra.mxu0 0.0
      %2185 = vmatprep.subr.mxu0 0.0
      %2186 = vmatpush2.msra.mxu0 0.0
      %2187 = vmatprep.mubr.f32.mxu0 0.0
      %v2188 = vand.u32 %v2113, 4294901760
      %v2189 = vsub.f32 %v2113, %v2188
      %v2190 = vand.u32 %v2189, 4294901760
      %v2191 = vsub.f32 %v2189, %v2190
      %v2192 = vand.u32 %v2191, 4294901760
      %2193 = vmatmul.mubr.f32.gmra.mxu0 %v2192
      %v2194 = vpop.f32.mrf.mxu0
      %v2195 = vadd.f32 0.0, %v2194
      %v2196 = vpop.f32.mrf.mxu0
      %2197 = vmatprep.mubr.f32.mxu0 0.0
      %v2198 = vand.u32 %v2116, 4294901760
      %v2199 = vsub.f32 %v2116, %v2198
      %v2200 = vand.u32 %v2199, 4294901760
      %v2201 = vsub.f32 %v2199, %v2200
      %v2202 = vand.u32 %v2201, 4294901760
      %2203 = vmatmul.mubr.f32.gmra.mxu0 %v2202
      %v2204 = vpop.f32.mrf.mxu0
      %v2205 = vadd.f32 0.0, %v2204
      %v2206 = vpop.f32.mrf.mxu0
      %2207 = vdwg.mxu0
      %2208 = vmatprep.subr.mxu0 0.0
      %2209 = vmatpush1.msra.mxu0 0.0
      %2210 = vmatprep.subr.mxu0 0.0
      %2211 = vmatpush1.msra.mxu0 0.0
      %2212 = vmatprep.subr.mxu0 0.0
      %2213 = vmatpush1.msra.mxu0 0.0
      %2214 = vmatprep.subr.mxu0 0.0
      %2215 = vmatpush1.msra.mxu0 0.0
      %2216 = vmatprep.subr.mxu0 0.0
      %2217 = vmatpush1.msra.mxu0 0.0
      %2218 = vmatprep.subr.mxu0 0.0
      %2219 = vmatpush1.msra.mxu0 0.0
      %2220 = vmatprep.subr.mxu0 0.0
      %2221 = vmatpush1.msra.mxu0 0.0
      %2222 = vmatprep.subr.mxu0 0.0
      %2223 = vmatpush1.msra.mxu0 0.0
      %2224 = vmatprep.subr.mxu0 0.0
      %2225 = vmatpush1.msra.mxu0 0.0
      %2226 = vmatprep.subr.mxu0 0.0
      %2227 = vmatpush1.msra.mxu0 0.0
      %2228 = vmatprep.subr.mxu0 0.0
      %2229 = vmatpush1.msra.mxu0 0.0
      %2230 = vmatprep.subr.mxu0 0.0
      %2231 = vmatpush1.msra.mxu0 0.0
      %2232 = vmatprep.subr.mxu0 0.0
      %2233 = vmatpush1.msra.mxu0 0.0
      %2234 = vmatprep.subr.mxu0 0.0
      %2235 = vmatpush1.msra.mxu0 0.0
      %2236 = vmatprep.subr.mxu0 0.0
      %2237 = vmatpush1.msra.mxu0 0.0
      %2238 = vmatprep.subr.mxu0 0.0
      %v2239 = vand.u32 %v2120, 4294901760
      %v2240 = vsub.f32 %v2120, %v2239
      %v2241 = vand.u32 %v2240, 4294901760
      %v2242 = vsub.f32 %v2240, %v2241
      %v2243 = vand.u32 %v2242, 4294901760
      %2244 = vmatpush1.msra.mxu0 %v2243
      %2245 = vmatprep.subr.mxu0 0.0
      %2246 = vmatpush2.msra.mxu0 0.0
      %2247 = vmatprep.subr.mxu0 0.0
      %2248 = vmatpush2.msra.mxu0 0.0
      %2249 = vmatprep.subr.mxu0 0.0
      %2250 = vmatpush2.msra.mxu0 0.0
      %2251 = vmatprep.subr.mxu0 0.0
      %2252 = vmatpush2.msra.mxu0 0.0
      %2253 = vmatprep.subr.mxu0 0.0
      %2254 = vmatpush2.msra.mxu0 0.0
      %2255 = vmatprep.subr.mxu0 0.0
      %2256 = vmatpush2.msra.mxu0 0.0
      %2257 = vmatprep.subr.mxu0 0.0
      %2258 = vmatpush2.msra.mxu0 0.0
      %2259 = vmatprep.subr.mxu0 0.0
      %2260 = vmatpush2.msra.mxu0 0.0
      %2261 = vmatprep.subr.mxu0 0.0
      %2262 = vmatpush2.msra.mxu0 0.0
      %2263 = vmatprep.subr.mxu0 0.0
      %2264 = vmatpush2.msra.mxu0 0.0
      %2265 = vmatprep.subr.mxu0 0.0
      %2266 = vmatpush2.msra.mxu0 0.0
      %2267 = vmatprep.subr.mxu0 0.0
      %2268 = vmatpush2.msra.mxu0 0.0
      %2269 = vmatprep.subr.mxu0 0.0
      %2270 = vmatpush2.msra.mxu0 0.0
      %2271 = vmatprep.subr.mxu0 0.0
      %2272 = vmatpush2.msra.mxu0 0.0
      %2273 = vmatprep.subr.mxu0 0.0
      %2274 = vmatpush2.msra.mxu0 0.0
      %2275 = vmatprep.subr.mxu0 0.0
      %2276 = vmatpush2.msra.mxu0 0.0
      %2277 = vmatprep.mubr.f32.mxu0 0.0
      %v2278 = vand.u32 %v2113, 4294901760
      %2279 = vmatmul.mubr.f32.gmra.mxu0 %v2278
      %v2280 = vpop.f32.mrf.mxu0
      %v2281 = vadd.f32 %v2195, %v2280
      %v2282 = vpop.f32.mrf.mxu0
      %2283 = vmatprep.mubr.f32.mxu0 0.0
      %v2284 = vand.u32 %v2116, 4294901760
      %2285 = vmatmul.mubr.f32.gmra.mxu0 %v2284
      %v2286 = vpop.f32.mrf.mxu0
      %v2287 = vadd.f32 %v2205, %v2286
      %v2288 = vpop.f32.mrf.mxu0
      %2289 = vdwg.mxu0
      %2290 = vmatprep.subr.mxu0 0.0
      %2291 = vmatpush1.msra.mxu0 0.0
      %2292 = vmatprep.subr.mxu0 0.0
      %2293 = vmatpush1.msra.mxu0 0.0
      %2294 = vmatprep.subr.mxu0 0.0
      %2295 = vmatpush1.msra.mxu0 0.0
      %2296 = vmatprep.subr.mxu0 0.0
      %2297 = vmatpush1.msra.mxu0 0.0
      %2298 = vmatprep.subr.mxu0 0.0
      %2299 = vmatpush1.msra.mxu0 0.0
      %2300 = vmatprep.subr.mxu0 0.0
      %2301 = vmatpush1.msra.mxu0 0.0
      %2302 = vmatprep.subr.mxu0 0.0
      %2303 = vmatpush1.msra.mxu0 0.0
      %2304 = vmatprep.subr.mxu0 0.0
      %2305 = vmatpush1.msra.mxu0 0.0
      %2306 = vmatprep.subr.mxu0 0.0
      %2307 = vmatpush1.msra.mxu0 0.0
      %2308 = vmatprep.subr.mxu0 0.0
      %2309 = vmatpush1.msra.mxu0 0.0
      %2310 = vmatprep.subr.mxu0 0.0
      %2311 = vmatpush1.msra.mxu0 0.0
      %2312 = vmatprep.subr.mxu0 0.0
      %2313 = vmatpush1.msra.mxu0 0.0
      %2314 = vmatprep.subr.mxu0 0.0
      %2315 = vmatpush1.msra.mxu0 0.0
      %2316 = vmatprep.subr.mxu0 0.0
      %2317 = vmatpush1.msra.mxu0 0.0
      %2318 = vmatprep.subr.mxu0 0.0
      %2319 = vmatpush1.msra.mxu0 0.0
      %2320 = vmatprep.subr.mxu0 0.0
      %v2321 = vand.u32 %v2120, 4294901760
      %v2322 = vsub.f32 %v2120, %v2321
      %2323 = vmatpush1.msra.mxu0 %v2322
      %2324 = vmatprep.subr.mxu0 0.0
      %2325 = vmatpush2.msra.mxu0 0.0
      %2326 = vmatprep.subr.mxu0 0.0
      %2327 = vmatpush2.msra.mxu0 0.0
      %2328 = vmatprep.subr.mxu0 0.0
      %2329 = vmatpush2.msra.mxu0 0.0
      %2330 = vmatprep.subr.mxu0 0.0
      %2331 = vmatpush2.msra.mxu0 0.0
      %2332 = vmatprep.subr.mxu0 0.0
      %2333 = vmatpush2.msra.mxu0 0.0
      %2334 = vmatprep.subr.mxu0 0.0
      %2335 = vmatpush2.msra.mxu0 0.0
      %2336 = vmatprep.subr.mxu0 0.0
      %2337 = vmatpush2.msra.mxu0 0.0
      %2338 = vmatprep.subr.mxu0 0.0
      %2339 = vmatpush2.msra.mxu0 0.0
      %2340 = vmatprep.subr.mxu0 0.0
      %2341 = vmatpush2.msra.mxu0 0.0
      %2342 = vmatprep.subr.mxu0 0.0
      %2343 = vmatpush2.msra.mxu0 0.0
      %2344 = vmatprep.subr.mxu0 0.0
      %2345 = vmatpush2.msra.mxu0 0.0
      %2346 = vmatprep.subr.mxu0 0.0
      %2347 = vmatpush2.msra.mxu0 0.0
      %2348 = vmatprep.subr.mxu0 0.0
      %2349 = vmatpush2.msra.mxu0 0.0
      %2350 = vmatprep.subr.mxu0 0.0
      %2351 = vmatpush2.msra.mxu0 0.0
      %2352 = vmatprep.subr.mxu0 0.0
      %2353 = vmatpush2.msra.mxu0 0.0
      %2354 = vmatprep.subr.mxu0 0.0
      %2355 = vmatpush2.msra.mxu0 0.0
      %2356 = vmatprep.mubr.f32.mxu0 0.0
      %v2357 = vand.u32 %v2113, 4294901760
      %v2358 = vsub.f32 %v2113, %v2357
      %2359 = vmatmul.mubr.f32.gmra.mxu0 %v2358
      %v2360 = vpop.f32.mrf.mxu0
      %v2361 = vadd.f32 %v2281, %v2360
      %v2362 = vpop.f32.mrf.mxu0
      %2363 = vmatprep.mubr.f32.mxu0 0.0
      %v2364 = vand.u32 %v2116, 4294901760
      %v2365 = vsub.f32 %v2116, %v2364
      %2366 = vmatmul.mubr.f32.gmra.mxu0 %v2365
      %v2367 = vpop.f32.mrf.mxu0
      %v2368 = vadd.f32 %v2287, %v2367
      %v2369 = vpop.f32.mrf.mxu0
      %2370 = vdwg.mxu0
      %2371 = vmatprep.subr.mxu0 0.0
      %2372 = vmatpush1.msra.mxu0 0.0
      %2373 = vmatprep.subr.mxu0 0.0
      %2374 = vmatpush1.msra.mxu0 0.0
      %2375 = vmatprep.subr.mxu0 0.0
      %2376 = vmatpush1.msra.mxu0 0.0
      %2377 = vmatprep.subr.mxu0 0.0
      %2378 = vmatpush1.msra.mxu0 0.0
      %2379 = vmatprep.subr.mxu0 0.0
      %2380 = vmatpush1.msra.mxu0 0.0
      %2381 = vmatprep.subr.mxu0 0.0
      %2382 = vmatpush1.msra.mxu0 0.0
      %2383 = vmatprep.subr.mxu0 0.0
      %2384 = vmatpush1.msra.mxu0 0.0
      %2385 = vmatprep.subr.mxu0 0.0
      %2386 = vmatpush1.msra.mxu0 0.0
      %2387 = vmatprep.subr.mxu0 0.0
      %2388 = vmatpush1.msra.mxu0 0.0
      %2389 = vmatprep.subr.mxu0 0.0
      %2390 = vmatpush1.msra.mxu0 0.0
      %2391 = vmatprep.subr.mxu0 0.0
      %2392 = vmatpush1.msra.mxu0 0.0
      %2393 = vmatprep.subr.mxu0 0.0
      %2394 = vmatpush1.msra.mxu0 0.0
      %2395 = vmatprep.subr.mxu0 0.0
      %2396 = vmatpush1.msra.mxu0 0.0
      %2397 = vmatprep.subr.mxu0 0.0
      %2398 = vmatpush1.msra.mxu0 0.0
      %2399 = vmatprep.subr.mxu0 0.0
      %2400 = vmatpush1.msra.mxu0 0.0
      %2401 = vmatprep.subr.mxu0 0.0
      %v2402 = vand.u32 %v2120, 4294901760
      %2403 = vmatpush1.msra.mxu0 %v2402
      %2404 = vmatprep.subr.mxu0 0.0
      %2405 = vmatpush2.msra.mxu0 0.0
      %2406 = vmatprep.subr.mxu0 0.0
      %2407 = vmatpush2.msra.mxu0 0.0
      %2408 = vmatprep.subr.mxu0 0.0
      %2409 = vmatpush2.msra.mxu0 0.0
      %2410 = vmatprep.subr.mxu0 0.0
      %2411 = vmatpush2.msra.mxu0 0.0
      %2412 = vmatprep.subr.mxu0 0.0
      %2413 = vmatpush2.msra.mxu0 0.0
      %2414 = vmatprep.subr.mxu0 0.0
      %2415 = vmatpush2.msra.mxu0 0.0
      %2416 = vmatprep.subr.mxu0 0.0
      %2417 = vmatpush2.msra.mxu0 0.0
      %2418 = vmatprep.subr.mxu0 0.0
      %2419 = vmatpush2.msra.mxu0 0.0
      %2420 = vmatprep.subr.mxu0 0.0
      %2421 = vmatpush2.msra.mxu0 0.0
      %2422 = vmatprep.subr.mxu0 0.0
      %2423 = vmatpush2.msra.mxu0 0.0
      %2424 = vmatprep.subr.mxu0 0.0
      %2425 = vmatpush2.msra.mxu0 0.0
      %2426 = vmatprep.subr.mxu0 0.0
      %2427 = vmatpush2.msra.mxu0 0.0
      %2428 = vmatprep.subr.mxu0 0.0
      %2429 = vmatpush2.msra.mxu0 0.0
      %2430 = vmatprep.subr.mxu0 0.0
      %2431 = vmatpush2.msra.mxu0 0.0
      %2432 = vmatprep.subr.mxu0 0.0
      %2433 = vmatpush2.msra.mxu0 0.0
      %2434 = vmatprep.subr.mxu0 0.0
      %2435 = vmatpush2.msra.mxu0 0.0
      %2436 = vmatprep.mubr.f32.mxu0 0.0
      %v2437 = vand.u32 %v2113, 4294901760
      %v2438 = vsub.f32 %v2113, %v2437
      %v2439 = vand.u32 %v2438, 4294901760
      %2440 = vmatmul.mubr.f32.gmra.mxu0 %v2439
      %v2441 = vpop.f32.mrf.mxu0
      %v2442 = vadd.f32 %v2361, %v2441
      %v2443 = vpop.f32.mrf.mxu0
      %2444 = vmatprep.mubr.f32.mxu0 0.0
      %v2445 = vand.u32 %v2116, 4294901760
      %v2446 = vsub.f32 %v2116, %v2445
      %v2447 = vand.u32 %v2446, 4294901760
      %2448 = vmatmul.mubr.f32.gmra.mxu0 %v2447
      %v2449 = vpop.f32.mrf.mxu0
      %v2450 = vadd.f32 %v2368, %v2449
      %v2451 = vpop.f32.mrf.mxu0
      %2452 = vdwg.mxu0
      %2453 = vmatprep.subr.mxu0 0.0
      %2454 = vmatpush1.msra.mxu0 0.0
      %2455 = vmatprep.subr.mxu0 0.0
      %2456 = vmatpush1.msra.mxu0 0.0
      %2457 = vmatprep.subr.mxu0 0.0
      %2458 = vmatpush1.msra.mxu0 0.0
      %2459 = vmatprep.subr.mxu0 0.0
      %2460 = vmatpush1.msra.mxu0 0.0
      %2461 = vmatprep.subr.mxu0 0.0
      %2462 = vmatpush1.msra.mxu0 0.0
      %2463 = vmatprep.subr.mxu0 0.0
      %2464 = vmatpush1.msra.mxu0 0.0
      %2465 = vmatprep.subr.mxu0 0.0
      %2466 = vmatpush1.msra.mxu0 0.0
      %2467 = vmatprep.subr.mxu0 0.0
      %2468 = vmatpush1.msra.mxu0 0.0
      %2469 = vmatprep.subr.mxu0 0.0
      %2470 = vmatpush1.msra.mxu0 0.0
      %2471 = vmatprep.subr.mxu0 0.0
      %2472 = vmatpush1.msra.mxu0 0.0
      %2473 = vmatprep.subr.mxu0 0.0
      %2474 = vmatpush1.msra.mxu0 0.0
      %2475 = vmatprep.subr.mxu0 0.0
      %2476 = vmatpush1.msra.mxu0 0.0
      %2477 = vmatprep.subr.mxu0 0.0
      %2478 = vmatpush1.msra.mxu0 0.0
      %2479 = vmatprep.subr.mxu0 0.0
      %2480 = vmatpush1.msra.mxu0 0.0
      %2481 = vmatprep.subr.mxu0 0.0
      %2482 = vmatpush1.msra.mxu0 0.0
      %2483 = vmatprep.subr.mxu0 0.0
      %v2484 = vand.u32 %v2120, 4294901760
      %v2485 = vsub.f32 %v2120, %v2484
      %v2486 = vand.u32 %v2485, 4294901760
      %2487 = vmatpush1.msra.mxu0 %v2486
      %2488 = vmatprep.subr.mxu0 0.0
      %2489 = vmatpush2.msra.mxu0 0.0
      %2490 = vmatprep.subr.mxu0 0.0
      %2491 = vmatpush2.msra.mxu0 0.0
      %2492 = vmatprep.subr.mxu0 0.0
      %2493 = vmatpush2.msra.mxu0 0.0
      %2494 = vmatprep.subr.mxu0 0.0
      %2495 = vmatpush2.msra.mxu0 0.0
      %2496 = vmatprep.subr.mxu0 0.0
      %2497 = vmatpush2.msra.mxu0 0.0
      %2498 = vmatprep.subr.mxu0 0.0
      %2499 = vmatpush2.msra.mxu0 0.0
      %2500 = vmatprep.subr.mxu0 0.0
      %2501 = vmatpush2.msra.mxu0 0.0
      %2502 = vmatprep.subr.mxu0 0.0
      %2503 = vmatpush2.msra.mxu0 0.0
      %2504 = vmatprep.subr.mxu0 0.0
      %2505 = vmatpush2.msra.mxu0 0.0
      %2506 = vmatprep.subr.mxu0 0.0
      %2507 = vmatpush2.msra.mxu0 0.0
      %2508 = vmatprep.subr.mxu0 0.0
      %2509 = vmatpush2.msra.mxu0 0.0
      %2510 = vmatprep.subr.mxu0 0.0
      %2511 = vmatpush2.msra.mxu0 0.0
      %2512 = vmatprep.subr.mxu0 0.0
      %2513 = vmatpush2.msra.mxu0 0.0
      %2514 = vmatprep.subr.mxu0 0.0
      %2515 = vmatpush2.msra.mxu0 0.0
      %2516 = vmatprep.subr.mxu0 0.0
      %2517 = vmatpush2.msra.mxu0 0.0
      %2518 = vmatprep.subr.mxu0 0.0
      %2519 = vmatpush2.msra.mxu0 0.0
      %2520 = vmatprep.mubr.f32.mxu0 0.0
      %v2521 = vand.u32 %v2113, 4294901760
      %2522 = vmatmul.mubr.f32.gmra.mxu0 %v2521
      %v2523 = vpop.f32.mrf.mxu0
      %v2524 = vadd.f32 %v2442, %v2523
      %v2525 = vpop.f32.mrf.mxu0
      %2526 = vmatprep.mubr.f32.mxu0 0.0
      %v2527 = vand.u32 %v2116, 4294901760
      %2528 = vmatmul.mubr.f32.gmra.mxu0 %v2527
      %v2529 = vpop.f32.mrf.mxu0
      %v2530 = vadd.f32 %v2450, %v2529
      %v2531 = vpop.f32.mrf.mxu0
      %2532 = vdwg.mxu0
      %2533 = vmatprep.subr.mxu0 0.0
      %2534 = vmatpush1.msra.mxu0 0.0
      %2535 = vmatprep.subr.mxu0 0.0
      %2536 = vmatpush1.msra.mxu0 0.0
      %2537 = vmatprep.subr.mxu0 0.0
      %2538 = vmatpush1.msra.mxu0 0.0
      %2539 = vmatprep.subr.mxu0 0.0
      %2540 = vmatpush1.msra.mxu0 0.0
      %2541 = vmatprep.subr.mxu0 0.0
      %2542 = vmatpush1.msra.mxu0 0.0
      %2543 = vmatprep.subr.mxu0 0.0
      %2544 = vmatpush1.msra.mxu0 0.0
      %2545 = vmatprep.subr.mxu0 0.0
      %2546 = vmatpush1.msra.mxu0 0.0
      %2547 = vmatprep.subr.mxu0 0.0
      %2548 = vmatpush1.msra.mxu0 0.0
      %2549 = vmatprep.subr.mxu0 0.0
      %2550 = vmatpush1.msra.mxu0 0.0
      %2551 = vmatprep.subr.mxu0 0.0
      %2552 = vmatpush1.msra.mxu0 0.0
      %2553 = vmatprep.subr.mxu0 0.0
      %2554 = vmatpush1.msra.mxu0 0.0
      %2555 = vmatprep.subr.mxu0 0.0
      %2556 = vmatpush1.msra.mxu0 0.0
      %2557 = vmatprep.subr.mxu0 0.0
      %2558 = vmatpush1.msra.mxu0 0.0
      %2559 = vmatprep.subr.mxu0 0.0
      %2560 = vmatpush1.msra.mxu0 0.0
      %2561 = vmatprep.subr.mxu0 0.0
      %2562 = vmatpush1.msra.mxu0 0.0
      %2563 = vmatprep.subr.mxu0 0.0
      %v2564 = vand.u32 %v2120, 4294901760
      %2565 = vmatpush1.msra.mxu0 %v2564
      %2566 = vmatprep.subr.mxu0 0.0
      %2567 = vmatpush2.msra.mxu0 0.0
      %2568 = vmatprep.subr.mxu0 0.0
      %2569 = vmatpush2.msra.mxu0 0.0
      %2570 = vmatprep.subr.mxu0 0.0
      %2571 = vmatpush2.msra.mxu0 0.0
      %2572 = vmatprep.subr.mxu0 0.0
      %2573 = vmatpush2.msra.mxu0 0.0
      %2574 = vmatprep.subr.mxu0 0.0
      %2575 = vmatpush2.msra.mxu0 0.0
      %2576 = vmatprep.subr.mxu0 0.0
      %2577 = vmatpush2.msra.mxu0 0.0
      %2578 = vmatprep.subr.mxu0 0.0
      %2579 = vmatpush2.msra.mxu0 0.0
      %2580 = vmatprep.subr.mxu0 0.0
      %2581 = vmatpush2.msra.mxu0 0.0
      %2582 = vmatprep.subr.mxu0 0.0
      %2583 = vmatpush2.msra.mxu0 0.0
      %2584 = vmatprep.subr.mxu0 0.0
      %2585 = vmatpush2.msra.mxu0 0.0
      %2586 = vmatprep.subr.mxu0 0.0
      %2587 = vmatpush2.msra.mxu0 0.0
      %2588 = vmatprep.subr.mxu0 0.0
      %2589 = vmatpush2.msra.mxu0 0.0
      %2590 = vmatprep.subr.mxu0 0.0
      %2591 = vmatpush2.msra.mxu0 0.0
      %2592 = vmatprep.subr.mxu0 0.0
      %2593 = vmatpush2.msra.mxu0 0.0
      %2594 = vmatprep.subr.mxu0 0.0
      %2595 = vmatpush2.msra.mxu0 0.0
      %2596 = vmatprep.subr.mxu0 0.0
      %2597 = vmatpush2.msra.mxu0 0.0
      %2598 = vmatprep.mubr.f32.mxu0 0.0
      %v2599 = vand.u32 %v2113, 4294901760
      %2600 = vmatmul.mubr.f32.gmra.mxu0 %v2599
      %v2601 = vpop.f32.mrf.mxu0
      %v2602 = vadd.f32 %v2524, %v2601
      %v2603 = vpop.f32.mrf.mxu0
      %2604 = vmatprep.mubr.f32.mxu0 0.0
      %v2605 = vand.u32 %v2116, 4294901760
      %2606 = vmatmul.mubr.f32.gmra.mxu0 %v2605
      %v2607 = vpop.f32.mrf.mxu0
      %v2608 = vadd.f32 %v2530, %v2607
      %v2609 = vpop.f32.mrf.mxu0
      %2610 = vdwg.mxu0
      %2612 = vset.pattern.permute.xlu0 0
      %2613 = vperm.xlu0 %2612, %v2602
      %v2614 = vpop.permute.xlu0 %2613
      %2617 = vset.pattern.permute.xlu0 0
      %2618 = vperm.xlu0 %2617, %v2608
      %v2619 = vpop.permute.xlu0 %2618
      %v2622 = vsel %vm2111, %v2107, 0
      %v2625 = vsel %vm2111, %v2108, 0
      %v2628 = vsel %vm2118, %v2106, 0
      %2630 = vmatprep.subr.mxu0 0.0
      %2631 = vmatpush1.msra.mxu0 0.0
      %2632 = vmatprep.subr.mxu0 0.0
      %2633 = vmatpush1.msra.mxu0 0.0
      %2634 = vmatprep.subr.mxu0 0.0
      %2635 = vmatpush1.msra.mxu0 0.0
      %2636 = vmatprep.subr.mxu0 0.0
      %2637 = vmatpush1.msra.mxu0 0.0
      %2638 = vmatprep.subr.mxu0 0.0
      %2639 = vmatpush1.msra.mxu0 0.0
      %2640 = vmatprep.subr.mxu0 0.0
      %2641 = vmatpush1.msra.mxu0 0.0
      %2642 = vmatprep.subr.mxu0 0.0
      %2643 = vmatpush1.msra.mxu0 0.0
      %2644 = vmatprep.subr.mxu0 0.0
      %2645 = vmatpush1.msra.mxu0 0.0
      %2646 = vmatprep.subr.mxu0 0.0
      %2647 = vmatpush1.msra.mxu0 0.0
      %2648 = vmatprep.subr.mxu0 0.0
      %2649 = vmatpush1.msra.mxu0 0.0
      %2650 = vmatprep.subr.mxu0 0.0
      %2651 = vmatpush1.msra.mxu0 0.0
      %2652 = vmatprep.subr.mxu0 0.0
      %2653 = vmatpush1.msra.mxu0 0.0
      %2654 = vmatprep.subr.mxu0 0.0
      %2655 = vmatpush1.msra.mxu0 0.0
      %2656 = vmatprep.subr.mxu0 0.0
      %2657 = vmatpush1.msra.mxu0 0.0
      %2658 = vmatprep.subr.mxu0 0.0
      %2659 = vmatpush1.msra.mxu0 0.0
      %2660 = vmatprep.subr.mxu0 0.0
      %v2661 = vand.u32 %v2628, 4294901760
      %2662 = vmatpush1.msra.mxu0 %v2661
      %2663 = vmatprep.subr.mxu0 0.0
      %2664 = vmatpush2.msra.mxu0 0.0
      %2665 = vmatprep.subr.mxu0 0.0
      %2666 = vmatpush2.msra.mxu0 0.0
      %2667 = vmatprep.subr.mxu0 0.0
      %2668 = vmatpush2.msra.mxu0 0.0
      %2669 = vmatprep.subr.mxu0 0.0
      %2670 = vmatpush2.msra.mxu0 0.0
      %2671 = vmatprep.subr.mxu0 0.0
      %2672 = vmatpush2.msra.mxu0 0.0
      %2673 = vmatprep.subr.mxu0 0.0
      %2674 = vmatpush2.msra.mxu0 0.0
      %2675 = vmatprep.subr.mxu0 0.0
      %2676 = vmatpush2.msra.mxu0 0.0
      %2677 = vmatprep.subr.mxu0 0.0
      %2678 = vmatpush2.msra.mxu0 0.0
      %2679 = vmatprep.subr.mxu0 0.0
      %2680 = vmatpush2.msra.mxu0 0.0
      %2681 = vmatprep.subr.mxu0 0.0
      %2682 = vmatpush2.msra.mxu0 0.0
      %2683 = vmatprep.subr.mxu0 0.0
      %2684 = vmatpush2.msra.mxu0 0.0
      %2685 = vmatprep.subr.mxu0 0.0
      %2686 = vmatpush2.msra.mxu0 0.0
      %2687 = vmatprep.subr.mxu0 0.0
      %2688 = vmatpush2.msra.mxu0 0.0
      %2689 = vmatprep.subr.mxu0 0.0
      %2690 = vmatpush2.msra.mxu0 0.0
      %2691 = vmatprep.subr.mxu0 0.0
      %2692 = vmatpush2.msra.mxu0 0.0
      %2693 = vmatprep.subr.mxu0 0.0
      %2694 = vmatpush2.msra.mxu0 0.0
      %2695 = vmatprep.mubr.f32.mxu0 0.0
      %v2696 = vand.u32 %v2622, 4294901760
      %v2697 = vsub.f32 %v2622, %v2696
      %v2698 = vand.u32 %v2697, 4294901760
      %v2699 = vsub.f32 %v2697, %v2698
      %v2700 = vand.u32 %v2699, 4294901760
      %2701 = vmatmul.mubr.f32.gmra.mxu0 %v2700
      %v2702 = vpop.f32.mrf.mxu0
      %v2703 = vadd.f32 %v2614, %v2702
      %v2704 = vpop.f32.mrf.mxu0
      %2705 = vmatprep.mubr.f32.mxu0 0.0
      %v2706 = vand.u32 %v2625, 4294901760
      %v2707 = vsub.f32 %v2625, %v2706
      %v2708 = vand.u32 %v2707, 4294901760
      %v2709 = vsub.f32 %v2707, %v2708
      %v2710 = vand.u32 %v2709, 4294901760
      %2711 = vmatmul.mubr.f32.gmra.mxu0 %v2710
      %v2712 = vpop.f32.mrf.mxu0
      %v2713 = vadd.f32 %v2619, %v2712
      %v2714 = vpop.f32.mrf.mxu0
      %2715 = vdwg.mxu0
      %2716 = vmatprep.subr.mxu0 0.0
      %2717 = vmatpush1.msra.mxu0 0.0
      %2718 = vmatprep.subr.mxu0 0.0
      %2719 = vmatpush1.msra.mxu0 0.0
      %2720 = vmatprep.subr.mxu0 0.0
      %2721 = vmatpush1.msra.mxu0 0.0
      %2722 = vmatprep.subr.mxu0 0.0
      %2723 = vmatpush1.msra.mxu0 0.0
      %2724 = vmatprep.subr.mxu0 0.0
      %2725 = vmatpush1.msra.mxu0 0.0
      %2726 = vmatprep.subr.mxu0 0.0
      %2727 = vmatpush1.msra.mxu0 0.0
      %2728 = vmatprep.subr.mxu0 0.0
      %2729 = vmatpush1.msra.mxu0 0.0
      %2730 = vmatprep.subr.mxu0 0.0
      %2731 = vmatpush1.msra.mxu0 0.0
      %2732 = vmatprep.subr.mxu0 0.0
      %2733 = vmatpush1.msra.mxu0 0.0
      %2734 = vmatprep.subr.mxu0 0.0
      %2735 = vmatpush1.msra.mxu0 0.0
      %2736 = vmatprep.subr.mxu0 0.0
      %2737 = vmatpush1.msra.mxu0 0.0
      %2738 = vmatprep.subr.mxu0 0.0
      %2739 = vmatpush1.msra.mxu0 0.0
      %2740 = vmatprep.subr.mxu0 0.0
      %2741 = vmatpush1.msra.mxu0 0.0
      %2742 = vmatprep.subr.mxu0 0.0
      %2743 = vmatpush1.msra.mxu0 0.0
      %2744 = vmatprep.subr.mxu0 0.0
      %2745 = vmatpush1.msra.mxu0 0.0
      %2746 = vmatprep.subr.mxu0 0.0
      %v2747 = vand.u32 %v2628, 4294901760
      %v2748 = vsub.f32 %v2628, %v2747
      %v2749 = vand.u32 %v2748, 4294901760
      %v2750 = vsub.f32 %v2748, %v2749
      %v2751 = vand.u32 %v2750, 4294901760
      %2752 = vmatpush1.msra.mxu0 %v2751
      %2753 = vmatprep.subr.mxu0 0.0
      %2754 = vmatpush2.msra.mxu0 0.0
      %2755 = vmatprep.subr.mxu0 0.0
      %2756 = vmatpush2.msra.mxu0 0.0
      %2757 = vmatprep.subr.mxu0 0.0
      %2758 = vmatpush2.msra.mxu0 0.0
      %2759 = vmatprep.subr.mxu0 0.0
      %2760 = vmatpush2.msra.mxu0 0.0
      %2761 = vmatprep.subr.mxu0 0.0
      %2762 = vmatpush2.msra.mxu0 0.0
      %2763 = vmatprep.subr.mxu0 0.0
      %2764 = vmatpush2.msra.mxu0 0.0
      %2765 = vmatprep.subr.mxu0 0.0
      %2766 = vmatpush2.msra.mxu0 0.0
      %2767 = vmatprep.subr.mxu0 0.0
      %2768 = vmatpush2.msra.mxu0 0.0
      %2769 = vmatprep.subr.mxu0 0.0
      %2770 = vmatpush2.msra.mxu0 0.0
      %2771 = vmatprep.subr.mxu0 0.0
      %2772 = vmatpush2.msra.mxu0 0.0
      %2773 = vmatprep.subr.mxu0 0.0
      %2774 = vmatpush2.msra.mxu0 0.0
      %2775 = vmatprep.subr.mxu0 0.0
      %2776 = vmatpush2.msra.mxu0 0.0
      %2777 = vmatprep.subr.mxu0 0.0
      %2778 = vmatpush2.msra.mxu0 0.0
      %2779 = vmatprep.subr.mxu0 0.0
      %2780 = vmatpush2.msra.mxu0 0.0
      %2781 = vmatprep.subr.mxu0 0.0
      %2782 = vmatpush2.msra.mxu0 0.0
      %2783 = vmatprep.subr.mxu0 0.0
      %2784 = vmatpush2.msra.mxu0 0.0
      %2785 = vmatprep.mubr.f32.mxu0 0.0
      %v2786 = vand.u32 %v2622, 4294901760
      %2787 = vmatmul.mubr.f32.gmra.mxu0 %v2786
      %v2788 = vpop.f32.mrf.mxu0
      %v2789 = vadd.f32 %v2703, %v2788
      %v2790 = vpop.f32.mrf.mxu0
      %2791 = vmatprep.mubr.f32.mxu0 0.0
      %v2792 = vand.u32 %v2625, 4294901760
      %2793 = vmatmul.mubr.f32.gmra.mxu0 %v2792
      %v2794 = vpop.f32.mrf.mxu0
      %v2795 = vadd.f32 %v2713, %v2794
      %v2796 = vpop.f32.mrf.mxu0
      %2797 = vdwg.mxu0
      %2798 = vmatprep.subr.mxu0 0.0
      %2799 = vmatpush1.msra.mxu0 0.0
      %2800 = vmatprep.subr.mxu0 0.0
      %2801 = vmatpush1.msra.mxu0 0.0
      %2802 = vmatprep.subr.mxu0 0.0
      %2803 = vmatpush1.msra.mxu0 0.0
      %2804 = vmatprep.subr.mxu0 0.0
      %2805 = vmatpush1.msra.mxu0 0.0
      %2806 = vmatprep.subr.mxu0 0.0
      %2807 = vmatpush1.msra.mxu0 0.0
      %2808 = vmatprep.subr.mxu0 0.0
      %2809 = vmatpush1.msra.mxu0 0.0
      %2810 = vmatprep.subr.mxu0 0.0
      %2811 = vmatpush1.msra.mxu0 0.0
      %2812 = vmatprep.subr.mxu0 0.0
      %2813 = vmatpush1.msra.mxu0 0.0
      %2814 = vmatprep.subr.mxu0 0.0
      %2815 = vmatpush1.msra.mxu0 0.0
      %2816 = vmatprep.subr.mxu0 0.0
      %2817 = vmatpush1.msra.mxu0 0.0
      %2818 = vmatprep.subr.mxu0 0.0
      %2819 = vmatpush1.msra.mxu0 0.0
      %2820 = vmatprep.subr.mxu0 0.0
      %2821 = vmatpush1.msra.mxu0 0.0
      %2822 = vmatprep.subr.mxu0 0.0
      %2823 = vmatpush1.msra.mxu0 0.0
      %2824 = vmatprep.subr.mxu0 0.0
      %2825 = vmatpush1.msra.mxu0 0.0
      %2826 = vmatprep.subr.mxu0 0.0
      %2827 = vmatpush1.msra.mxu0 0.0
      %2828 = vmatprep.subr.mxu0 0.0
      %v2829 = vand.u32 %v2628, 4294901760
      %v2830 = vsub.f32 %v2628, %v2829
      %2831 = vmatpush1.msra.mxu0 %v2830
      %2832 = vmatprep.subr.mxu0 0.0
      %2833 = vmatpush2.msra.mxu0 0.0
      %2834 = vmatprep.subr.mxu0 0.0
      %2835 = vmatpush2.msra.mxu0 0.0
      %2836 = vmatprep.subr.mxu0 0.0
      %2837 = vmatpush2.msra.mxu0 0.0
      %2838 = vmatprep.subr.mxu0 0.0
      %2839 = vmatpush2.msra.mxu0 0.0
      %2840 = vmatprep.subr.mxu0 0.0
      %2841 = vmatpush2.msra.mxu0 0.0
      %2842 = vmatprep.subr.mxu0 0.0
      %2843 = vmatpush2.msra.mxu0 0.0
      %2844 = vmatprep.subr.mxu0 0.0
      %2845 = vmatpush2.msra.mxu0 0.0
      %2846 = vmatprep.subr.mxu0 0.0
      %2847 = vmatpush2.msra.mxu0 0.0
      %2848 = vmatprep.subr.mxu0 0.0
      %2849 = vmatpush2.msra.mxu0 0.0
      %2850 = vmatprep.subr.mxu0 0.0
      %2851 = vmatpush2.msra.mxu0 0.0
      %2852 = vmatprep.subr.mxu0 0.0
      %2853 = vmatpush2.msra.mxu0 0.0
      %2854 = vmatprep.subr.mxu0 0.0
      %2855 = vmatpush2.msra.mxu0 0.0
      %2856 = vmatprep.subr.mxu0 0.0
      %2857 = vmatpush2.msra.mxu0 0.0
      %2858 = vmatprep.subr.mxu0 0.0
      %2859 = vmatpush2.msra.mxu0 0.0
      %2860 = vmatprep.subr.mxu0 0.0
      %2861 = vmatpush2.msra.mxu0 0.0
      %2862 = vmatprep.subr.mxu0 0.0
      %2863 = vmatpush2.msra.mxu0 0.0
      %2864 = vmatprep.mubr.f32.mxu0 0.0
      %v2865 = vand.u32 %v2622, 4294901760
      %v2866 = vsub.f32 %v2622, %v2865
      %2867 = vmatmul.mubr.f32.gmra.mxu0 %v2866
      %v2868 = vpop.f32.mrf.mxu0
      %v2869 = vadd.f32 %v2789, %v2868
      %v2870 = vpop.f32.mrf.mxu0
      %2871 = vmatprep.mubr.f32.mxu0 0.0
      %v2872 = vand.u32 %v2625, 4294901760
      %v2873 = vsub.f32 %v2625, %v2872
      %2874 = vmatmul.mubr.f32.gmra.mxu0 %v2873
      %v2875 = vpop.f32.mrf.mxu0
      %v2876 = vadd.f32 %v2795, %v2875
      %v2877 = vpop.f32.mrf.mxu0
      %2878 = vdwg.mxu0
      %2879 = vmatprep.subr.mxu0 0.0
      %2880 = vmatpush1.msra.mxu0 0.0
      %2881 = vmatprep.subr.mxu0 0.0
      %2882 = vmatpush1.msra.mxu0 0.0
      %2883 = vmatprep.subr.mxu0 0.0
      %2884 = vmatpush1.msra.mxu0 0.0
      %2885 = vmatprep.subr.mxu0 0.0
      %2886 = vmatpush1.msra.mxu0 0.0
      %2887 = vmatprep.subr.mxu0 0.0
      %2888 = vmatpush1.msra.mxu0 0.0
      %2889 = vmatprep.subr.mxu0 0.0
      %2890 = vmatpush1.msra.mxu0 0.0
      %2891 = vmatprep.subr.mxu0 0.0
      %2892 = vmatpush1.msra.mxu0 0.0
      %2893 = vmatprep.subr.mxu0 0.0
      %2894 = vmatpush1.msra.mxu0 0.0
      %2895 = vmatprep.subr.mxu0 0.0
      %2896 = vmatpush1.msra.mxu0 0.0
      %2897 = vmatprep.subr.mxu0 0.0
      %2898 = vmatpush1.msra.mxu0 0.0
      %2899 = vmatprep.subr.mxu0 0.0
      %2900 = vmatpush1.msra.mxu0 0.0
      %2901 = vmatprep.subr.mxu0 0.0
      %2902 = vmatpush1.msra.mxu0 0.0
      %2903 = vmatprep.subr.mxu0 0.0
      %2904 = vmatpush1.msra.mxu0 0.0
      %2905 = vmatprep.subr.mxu0 0.0
      %2906 = vmatpush1.msra.mxu0 0.0
      %2907 = vmatprep.subr.mxu0 0.0
      %2908 = vmatpush1.msra.mxu0 0.0
      %2909 = vmatprep.subr.mxu0 0.0
      %v2910 = vand.u32 %v2628, 4294901760
      %2911 = vmatpush1.msra.mxu0 %v2910
      %2912 = vmatprep.subr.mxu0 0.0
      %2913 = vmatpush2.msra.mxu0 0.0
      %2914 = vmatprep.subr.mxu0 0.0
      %2915 = vmatpush2.msra.mxu0 0.0
      %2916 = vmatprep.subr.mxu0 0.0
      %2917 = vmatpush2.msra.mxu0 0.0
      %2918 = vmatprep.subr.mxu0 0.0
      %2919 = vmatpush2.msra.mxu0 0.0
      %2920 = vmatprep.subr.mxu0 0.0
      %2921 = vmatpush2.msra.mxu0 0.0
      %2922 = vmatprep.subr.mxu0 0.0
      %2923 = vmatpush2.msra.mxu0 0.0
      %2924 = vmatprep.subr.mxu0 0.0
      %2925 = vmatpush2.msra.mxu0 0.0
      %2926 = vmatprep.subr.mxu0 0.0
      %2927 = vmatpush2.msra.mxu0 0.0
      %2928 = vmatprep.subr.mxu0 0.0
      %2929 = vmatpush2.msra.mxu0 0.0
      %2930 = vmatprep.subr.mxu0 0.0
      %2931 = vmatpush2.msra.mxu0 0.0
      %2932 = vmatprep.subr.mxu0 0.0
      %2933 = vmatpush2.msra.mxu0 0.0
      %2934 = vmatprep.subr.mxu0 0.0
      %2935 = vmatpush2.msra.mxu0 0.0
      %2936 = vmatprep.subr.mxu0 0.0
      %2937 = vmatpush2.msra.mxu0 0.0
      %2938 = vmatprep.subr.mxu0 0.0
      %2939 = vmatpush2.msra.mxu0 0.0
      %2940 = vmatprep.subr.mxu0 0.0
      %2941 = vmatpush2.msra.mxu0 0.0
      %2942 = vmatprep.subr.mxu0 0.0
      %2943 = vmatpush2.msra.mxu0 0.0
      %2944 = vmatprep.mubr.f32.mxu0 0.0
      %v2945 = vand.u32 %v2622, 4294901760
      %v2946 = vsub.f32 %v2622, %v2945
      %v2947 = vand.u32 %v2946, 4294901760
      %2948 = vmatmul.mubr.f32.gmra.mxu0 %v2947
      %v2949 = vpop.f32.mrf.mxu0
      %v2950 = vadd.f32 %v2869, %v2949
      %v2951 = vpop.f32.mrf.mxu0
      %2952 = vmatprep.mubr.f32.mxu0 0.0
      %v2953 = vand.u32 %v2625, 4294901760
      %v2954 = vsub.f32 %v2625, %v2953
      %v2955 = vand.u32 %v2954, 4294901760
      %2956 = vmatmul.mubr.f32.gmra.mxu0 %v2955
      %v2957 = vpop.f32.mrf.mxu0
      %v2958 = vadd.f32 %v2876, %v2957
      %v2959 = vpop.f32.mrf.mxu0
      %2960 = vdwg.mxu0
      %2961 = vmatprep.subr.mxu0 0.0
      %2962 = vmatpush1.msra.mxu0 0.0
      %2963 = vmatprep.subr.mxu0 0.0
      %2964 = vmatpush1.msra.mxu0 0.0
      %2965 = vmatprep.subr.mxu0 0.0
      %2966 = vmatpush1.msra.mxu0 0.0
      %2967 = vmatprep.subr.mxu0 0.0
      %2968 = vmatpush1.msra.mxu0 0.0
      %2969 = vmatprep.subr.mxu0 0.0
      %2970 = vmatpush1.msra.mxu0 0.0
      %2971 = vmatprep.subr.mxu0 0.0
      %2972 = vmatpush1.msra.mxu0 0.0
      %2973 = vmatprep.subr.mxu0 0.0
      %2974 = vmatpush1.msra.mxu0 0.0
      %2975 = vmatprep.subr.mxu0 0.0
      %2976 = vmatpush1.msra.mxu0 0.0
      %2977 = vmatprep.subr.mxu0 0.0
      %2978 = vmatpush1.msra.mxu0 0.0
      %2979 = vmatprep.subr.mxu0 0.0
      %2980 = vmatpush1.msra.mxu0 0.0
      %2981 = vmatprep.subr.mxu0 0.0
      %2982 = vmatpush1.msra.mxu0 0.0
      %2983 = vmatprep.subr.mxu0 0.0
      %2984 = vmatpush1.msra.mxu0 0.0
      %2985 = vmatprep.subr.mxu0 0.0
      %2986 = vmatpush1.msra.mxu0 0.0
      %2987 = vmatprep.subr.mxu0 0.0
      %2988 = vmatpush1.msra.mxu0 0.0
      %2989 = vmatprep.subr.mxu0 0.0
      %2990 = vmatpush1.msra.mxu0 0.0
      %2991 = vmatprep.subr.mxu0 0.0
      %v2992 = vand.u32 %v2628, 4294901760
      %v2993 = vsub.f32 %v2628, %v2992
      %v2994 = vand.u32 %v2993, 4294901760
      %2995 = vmatpush1.msra.mxu0 %v2994
      %2996 = vmatprep.subr.mxu0 0.0
      %2997 = vmatpush2.msra.mxu0 0.0
      %2998 = vmatprep.subr.mxu0 0.0
      %2999 = vmatpush2.msra.mxu0 0.0
      %3000 = vmatprep.subr.mxu0 0.0
      %3001 = vmatpush2.msra.mxu0 0.0
      %3002 = vmatprep.subr.mxu0 0.0
      %3003 = vmatpush2.msra.mxu0 0.0
      %3004 = vmatprep.subr.mxu0 0.0
      %3005 = vmatpush2.msra.mxu0 0.0
      %3006 = vmatprep.subr.mxu0 0.0
      %3007 = vmatpush2.msra.mxu0 0.0
      %3008 = vmatprep.subr.mxu0 0.0
      %3009 = vmatpush2.msra.mxu0 0.0
      %3010 = vmatprep.subr.mxu0 0.0
      %3011 = vmatpush2.msra.mxu0 0.0
      %3012 = vmatprep.subr.mxu0 0.0
      %3013 = vmatpush2.msra.mxu0 0.0
      %3014 = vmatprep.subr.mxu0 0.0
      %3015 = vmatpush2.msra.mxu0 0.0
      %3016 = vmatprep.subr.mxu0 0.0
      %3017 = vmatpush2.msra.mxu0 0.0
      %3018 = vmatprep.subr.mxu0 0.0
      %3019 = vmatpush2.msra.mxu0 0.0
      %3020 = vmatprep.subr.mxu0 0.0
      %3021 = vmatpush2.msra.mxu0 0.0
      %3022 = vmatprep.subr.mxu0 0.0
      %3023 = vmatpush2.msra.mxu0 0.0
      %3024 = vmatprep.subr.mxu0 0.0
      %3025 = vmatpush2.msra.mxu0 0.0
      %3026 = vmatprep.subr.mxu0 0.0
      %3027 = vmatpush2.msra.mxu0 0.0
      %3028 = vmatprep.mubr.f32.mxu0 0.0
      %v3029 = vand.u32 %v2622, 4294901760
      %3030 = vmatmul.mubr.f32.gmra.mxu0 %v3029
      %v3031 = vpop.f32.mrf.mxu0
      %v3032 = vadd.f32 %v2950, %v3031
      %v3033 = vpop.f32.mrf.mxu0
      %3034 = vmatprep.mubr.f32.mxu0 0.0
      %v3035 = vand.u32 %v2625, 4294901760
      %3036 = vmatmul.mubr.f32.gmra.mxu0 %v3035
      %v3037 = vpop.f32.mrf.mxu0
      %v3038 = vadd.f32 %v2958, %v3037
      %v3039 = vpop.f32.mrf.mxu0
      %3040 = vdwg.mxu0
      %3041 = vmatprep.subr.mxu0 0.0
      %3042 = vmatpush1.msra.mxu0 0.0
      %3043 = vmatprep.subr.mxu0 0.0
      %3044 = vmatpush1.msra.mxu0 0.0
      %3045 = vmatprep.subr.mxu0 0.0
      %3046 = vmatpush1.msra.mxu0 0.0
      %3047 = vmatprep.subr.mxu0 0.0
      %3048 = vmatpush1.msra.mxu0 0.0
      %3049 = vmatprep.subr.mxu0 0.0
      %3050 = vmatpush1.msra.mxu0 0.0
      %3051 = vmatprep.subr.mxu0 0.0
      %3052 = vmatpush1.msra.mxu0 0.0
      %3053 = vmatprep.subr.mxu0 0.0
      %3054 = vmatpush1.msra.mxu0 0.0
      %3055 = vmatprep.subr.mxu0 0.0
      %3056 = vmatpush1.msra.mxu0 0.0
      %3057 = vmatprep.subr.mxu0 0.0
      %3058 = vmatpush1.msra.mxu0 0.0
      %3059 = vmatprep.subr.mxu0 0.0
      %3060 = vmatpush1.msra.mxu0 0.0
      %3061 = vmatprep.subr.mxu0 0.0
      %3062 = vmatpush1.msra.mxu0 0.0
      %3063 = vmatprep.subr.mxu0 0.0
      %3064 = vmatpush1.msra.mxu0 0.0
      %3065 = vmatprep.subr.mxu0 0.0
      %3066 = vmatpush1.msra.mxu0 0.0
      %3067 = vmatprep.subr.mxu0 0.0
      %3068 = vmatpush1.msra.mxu0 0.0
      %3069 = vmatprep.subr.mxu0 0.0
      %3070 = vmatpush1.msra.mxu0 0.0
      %3071 = vmatprep.subr.mxu0 0.0
      %v3072 = vand.u32 %v2628, 4294901760
      %3073 = vmatpush1.msra.mxu0 %v3072
      %3074 = vmatprep.subr.mxu0 0.0
      %3075 = vmatpush2.msra.mxu0 0.0
      %3076 = vmatprep.subr.mxu0 0.0
      %3077 = vmatpush2.msra.mxu0 0.0
      %3078 = vmatprep.subr.mxu0 0.0
      %3079 = vmatpush2.msra.mxu0 0.0
      %3080 = vmatprep.subr.mxu0 0.0
      %3081 = vmatpush2.msra.mxu0 0.0
      %3082 = vmatprep.subr.mxu0 0.0
      %3083 = vmatpush2.msra.mxu0 0.0
      %3084 = vmatprep.subr.mxu0 0.0
      %3085 = vmatpush2.msra.mxu0 0.0
      %3086 = vmatprep.subr.mxu0 0.0
      %3087 = vmatpush2.msra.mxu0 0.0
      %3088 = vmatprep.subr.mxu0 0.0
      %3089 = vmatpush2.msra.mxu0 0.0
      %3090 = vmatprep.subr.mxu0 0.0
      %3091 = vmatpush2.msra.mxu0 0.0
      %3092 = vmatprep.subr.mxu0 0.0
      %3093 = vmatpush2.msra.mxu0 0.0
      %3094 = vmatprep.subr.mxu0 0.0
      %3095 = vmatpush2.msra.mxu0 0.0
      %3096 = vmatprep.subr.mxu0 0.0
      %3097 = vmatpush2.msra.mxu0 0.0
      %3098 = vmatprep.subr.mxu0 0.0
      %3099 = vmatpush2.msra.mxu0 0.0
      %3100 = vmatprep.subr.mxu0 0.0
      %3101 = vmatpush2.msra.mxu0 0.0
      %3102 = vmatprep.subr.mxu0 0.0
      %3103 = vmatpush2.msra.mxu0 0.0
      %3104 = vmatprep.subr.mxu0 0.0
      %3105 = vmatpush2.msra.mxu0 0.0
      %3106 = vmatprep.mubr.f32.mxu0 0.0
      %v3107 = vand.u32 %v2622, 4294901760
      %3108 = vmatmul.mubr.f32.gmra.mxu0 %v3107
      %v3109 = vpop.f32.mrf.mxu0
      %v3110 = vadd.f32 %v3032, %v3109
      %v3111 = vpop.f32.mrf.mxu0
      %3112 = vmatprep.mubr.f32.mxu0 0.0
      %v3113 = vand.u32 %v2625, 4294901760
      %3114 = vmatmul.mubr.f32.gmra.mxu0 %v3113
      %v3115 = vpop.f32.mrf.mxu0
      %v3116 = vadd.f32 %v3038, %v3115
      %v3117 = vpop.f32.mrf.mxu0
      %3118 = vdwg.mxu0
      %v3119 = vmax.f32 %v3110, 0.0
      %v3120 = vmax.f32 %v3116, 0.0
      %v3121 = vld [vmem:[%s6] sm:$0xff]
      %v3122 = vld [vmem:[%s6 + $0x8] sm:$0xff]
      %v3123 = vmul.f32 %v3119, %v3121
      %v3124 = vmul.f32 %v3120, %v3122
      %vm3125 = vcmask 72704
      %v3126 = vsel %vm3125, %v3123, 0.0
      %3127 = vadd.xlane.f32.xlu0 %v3126
      %v3128 = vpop.xlane.xlu0 %3127
      %v3129 = vsel %vm3125, %v3124, 0.0
      %3130 = vadd.xlane.f32.xlu0 %v3129
      %v3131 = vpop.xlane.xlu0 %3130
      %v3132 = vmax.f32 %v3128, 0.0
      %v3133 = vmax.f32 %v3131, 0.0
      %v3134 = vld [vmem:[%s7] sm:$0xff]
      %v3135 = vld [vmem:[%s7 + $0x8] sm:$0xf]
      %vm3136 = vcmask 130048
      %v3138 = vsel %vm3136, %v3134, 0
      %v3141 = vsel %vm3136, %v3135, 0
      %3143 = vmatprep.subr.mxu0 0.0
      %3144 = vmatpush1.msra.mxu0 0.0
      %3145 = vmatprep.subr.mxu0 0.0
      %3146 = vmatpush1.msra.mxu0 0.0
      %3147 = vmatprep.subr.mxu0 0.0
      %3148 = vmatpush1.msra.mxu0 0.0
      %3149 = vmatprep.subr.mxu0 0.0
      %3150 = vmatpush1.msra.mxu0 0.0
      %3151 = vmatprep.subr.mxu0 0.0
      %3152 = vmatpush1.msra.mxu0 0.0
      %3153 = vmatprep.subr.mxu0 0.0
      %3154 = vmatpush1.msra.mxu0 0.0
      %3155 = vmatprep.subr.mxu0 0.0
      %3156 = vmatpush1.msra.mxu0 0.0
      %3157 = vmatprep.subr.mxu0 0.0
      %3158 = vmatpush1.msra.mxu0 0.0
      %3159 = vmatprep.subr.mxu0 0.0
      %3160 = vmatpush1.msra.mxu0 0.0
      %3161 = vmatprep.subr.mxu0 0.0
      %3162 = vmatpush1.msra.mxu0 0.0
      %3163 = vmatprep.subr.mxu0 0.0
      %3164 = vmatpush1.msra.mxu0 0.0
      %3165 = vmatprep.subr.mxu0 0.0
      %3166 = vmatpush1.msra.mxu0 0.0
      %3167 = vmatprep.subr.mxu0 0.0
      %3168 = vmatpush1.msra.mxu0 0.0
      %3169 = vmatprep.subr.mxu0 0.0
      %3170 = vmatpush1.msra.mxu0 0.0
      %3171 = vmatprep.subr.mxu0 0.0
      %v3172 = vand.u32 %v3133, 4294901760
      %3173 = vmatpush1.msra.mxu0 %v3172
      %3174 = vmatprep.subr.mxu0 0.0
      %v3175 = vand.u32 %v3132, 4294901760
      %3176 = vmatpush1.msra.mxu0 %v3175
      %3177 = vmatprep.subr.mxu0 0.0
      %3178 = vmatpush2.msra.mxu0 0.0
      %3179 = vmatprep.subr.mxu0 0.0
      %3180 = vmatpush2.msra.mxu0 0.0
      %3181 = vmatprep.subr.mxu0 0.0
      %3182 = vmatpush2.msra.mxu0 0.0
      %3183 = vmatprep.subr.mxu0 0.0
      %3184 = vmatpush2.msra.mxu0 0.0
      %3185 = vmatprep.subr.mxu0 0.0
      %3186 = vmatpush2.msra.mxu0 0.0
      %3187 = vmatprep.subr.mxu0 0.0
      %3188 = vmatpush2.msra.mxu0 0.0
      %3189 = vmatprep.subr.mxu0 0.0
      %3190 = vmatpush2.msra.mxu0 0.0
      %3191 = vmatprep.subr.mxu0 0.0
      %3192 = vmatpush2.msra.mxu0 0.0
      %3193 = vmatprep.subr.mxu0 0.0
      %3194 = vmatpush2.msra.mxu0 0.0
      %3195 = vmatprep.subr.mxu0 0.0
      %3196 = vmatpush2.msra.mxu0 0.0
      %3197 = vmatprep.subr.mxu0 0.0
      %3198 = vmatpush2.msra.mxu0 0.0
      %3199 = vmatprep.subr.mxu0 0.0
      %3200 = vmatpush2.msra.mxu0 0.0
      %3201 = vmatprep.subr.mxu0 0.0
      %3202 = vmatpush2.msra.mxu0 0.0
      %3203 = vmatprep.subr.mxu0 0.0
      %3204 = vmatpush2.msra.mxu0 0.0
      %3205 = vmatprep.subr.mxu0 0.0
      %3206 = vmatpush2.msra.mxu0 0.0
      %3207 = vmatprep.subr.mxu0 0.0
      %3208 = vmatpush2.msra.mxu0 0.0
      %3209 = vmatprep.mubr.f32.mxu0 0.0
      %v3210 = vand.u32 %v3138, 4294901760
      %v3211 = vsub.f32 %v3138, %v3210
      %v3212 = vand.u32 %v3211, 4294901760
      %v3213 = vsub.f32 %v3211, %v3212
      %v3214 = vand.u32 %v3213, 4294901760
      %3215 = vmatmul.mubr.f32.gmra.mxu0 %v3214
      %v3216 = vpop.f32.mrf.mxu0
      %v3217 = vadd.f32 0.0, %v3216
      %v3218 = vpop.f32.mrf.mxu0
      %3219 = vmatprep.mubr.f32.mxu0 0.0
      %v3220 = vand.u32 %v3141, 4294901760
      %v3221 = vsub.f32 %v3141, %v3220
      %v3222 = vand.u32 %v3221, 4294901760
      %v3223 = vsub.f32 %v3221, %v3222
      %v3224 = vand.u32 %v3223, 4294901760
      %3225 = vmatmul.mubr.f32.gmra.mxu0 %v3224
      %v3226 = vpop.f32.mrf.mxu0
      %v3227 = vadd.f32 0.0, %v3226
      %v3228 = vpop.f32.mrf.mxu0
      %3229 = vdwg.mxu0
      %3230 = vmatprep.subr.mxu0 0.0
      %3231 = vmatpush1.msra.mxu0 0.0
      %3232 = vmatprep.subr.mxu0 0.0
      %3233 = vmatpush1.msra.mxu0 0.0
      %3234 = vmatprep.subr.mxu0 0.0
      %3235 = vmatpush1.msra.mxu0 0.0
      %3236 = vmatprep.subr.mxu0 0.0
      %3237 = vmatpush1.msra.mxu0 0.0
      %3238 = vmatprep.subr.mxu0 0.0
      %3239 = vmatpush1.msra.mxu0 0.0
      %3240 = vmatprep.subr.mxu0 0.0
      %3241 = vmatpush1.msra.mxu0 0.0
      %3242 = vmatprep.subr.mxu0 0.0
      %3243 = vmatpush1.msra.mxu0 0.0
      %3244 = vmatprep.subr.mxu0 0.0
      %3245 = vmatpush1.msra.mxu0 0.0
      %3246 = vmatprep.subr.mxu0 0.0
      %3247 = vmatpush1.msra.mxu0 0.0
      %3248 = vmatprep.subr.mxu0 0.0
      %3249 = vmatpush1.msra.mxu0 0.0
      %3250 = vmatprep.subr.mxu0 0.0
      %3251 = vmatpush1.msra.mxu0 0.0
      %3252 = vmatprep.subr.mxu0 0.0
      %3253 = vmatpush1.msra.mxu0 0.0
      %3254 = vmatprep.subr.mxu0 0.0
      %3255 = vmatpush1.msra.mxu0 0.0
      %3256 = vmatprep.subr.mxu0 0.0
      %3257 = vmatpush1.msra.mxu0 0.0
      %3258 = vmatprep.subr.mxu0 0.0
      %v3259 = vand.u32 %v3133, 4294901760
      %v3260 = vsub.f32 %v3133, %v3259
      %v3261 = vand.u32 %v3260, 4294901760
      %v3262 = vsub.f32 %v3260, %v3261
      %v3263 = vand.u32 %v3262, 4294901760
      %3264 = vmatpush1.msra.mxu0 %v3263
      %3265 = vmatprep.subr.mxu0 0.0
      %v3266 = vand.u32 %v3132, 4294901760
      %v3267 = vsub.f32 %v3132, %v3266
      %v3268 = vand.u32 %v3267, 4294901760
      %v3269 = vsub.f32 %v3267, %v3268
      %v3270 = vand.u32 %v3269, 4294901760
      %3271 = vmatpush1.msra.mxu0 %v3270
      %3272 = vmatprep.subr.mxu0 0.0
      %3273 = vmatpush2.msra.mxu0 0.0
      %3274 = vmatprep.subr.mxu0 0.0
      %3275 = vmatpush2.msra.mxu0 0.0
      %3276 = vmatprep.subr.mxu0 0.0
      %3277 = vmatpush2.msra.mxu0 0.0
      %3278 = vmatprep.subr.mxu0 0.0
      %3279 = vmatpush2.msra.mxu0 0.0
      %3280 = vmatprep.subr.mxu0 0.0
      %3281 = vmatpush2.msra.mxu0 0.0
      %3282 = vmatprep.subr.mxu0 0.0
      %3283 = vmatpush2.msra.mxu0 0.0
      %3284 = vmatprep.subr.mxu0 0.0
      %3285 = vmatpush2.msra.mxu0 0.0
      %3286 = vmatprep.subr.mxu0 0.0
      %3287 = vmatpush2.msra.mxu0 0.0
      %3288 = vmatprep.subr.mxu0 0.0
      %3289 = vmatpush2.msra.mxu0 0.0
      %3290 = vmatprep.subr.mxu0 0.0
      %3291 = vmatpush2.msra.mxu0 0.0
      %3292 = vmatprep.subr.mxu0 0.0
      %3293 = vmatpush2.msra.mxu0 0.0
      %3294 = vmatprep.subr.mxu0 0.0
      %3295 = vmatpush2.msra.mxu0 0.0
      %3296 = vmatprep.subr.mxu0 0.0
      %3297 = vmatpush2.msra.mxu0 0.0
      %3298 = vmatprep.subr.mxu0 0.0
      %3299 = vmatpush2.msra.mxu0 0.0
      %3300 = vmatprep.subr.mxu0 0.0
      %3301 = vmatpush2.msra.mxu0 0.0
      %3302 = vmatprep.subr.mxu0 0.0
      %3303 = vmatpush2.msra.mxu0 0.0
      %3304 = vmatprep.mubr.f32.mxu0 0.0
      %v3305 = vand.u32 %v3138, 4294901760
      %3306 = vmatmul.mubr.f32.gmra.mxu0 %v3305
      %v3307 = vpop.f32.mrf.mxu0
      %v3308 = vadd.f32 %v3217, %v3307
      %v3309 = vpop.f32.mrf.mxu0
      %3310 = vmatprep.mubr.f32.mxu0 0.0
      %v3311 = vand.u32 %v3141, 4294901760
      %3312 = vmatmul.mubr.f32.gmra.mxu0 %v3311
      %v3313 = vpop.f32.mrf.mxu0
      %v3314 = vadd.f32 %v3227, %v3313
      %v3315 = vpop.f32.mrf.mxu0
      %3316 = vdwg.mxu0
      %3317 = vmatprep.subr.mxu0 0.0
      %3318 = vmatpush1.msra.mxu0 0.0
      %3319 = vmatprep.subr.mxu0 0.0
      %3320 = vmatpush1.msra.mxu0 0.0
      %3321 = vmatprep.subr.mxu0 0.0
      %3322 = vmatpush1.msra.mxu0 0.0
      %3323 = vmatprep.subr.mxu0 0.0
      %3324 = vmatpush1.msra.mxu0 0.0
      %3325 = vmatprep.subr.mxu0 0.0
      %3326 = vmatpush1.msra.mxu0 0.0
      %3327 = vmatprep.subr.mxu0 0.0
      %3328 = vmatpush1.msra.mxu0 0.0
      %3329 = vmatprep.subr.mxu0 0.0
      %3330 = vmatpush1.msra.mxu0 0.0
      %3331 = vmatprep.subr.mxu0 0.0
      %3332 = vmatpush1.msra.mxu0 0.0
      %3333 = vmatprep.subr.mxu0 0.0
      %3334 = vmatpush1.msra.mxu0 0.0
      %3335 = vmatprep.subr.mxu0 0.0
      %3336 = vmatpush1.msra.mxu0 0.0
      %3337 = vmatprep.subr.mxu0 0.0
      %3338 = vmatpush1.msra.mxu0 0.0
      %3339 = vmatprep.subr.mxu0 0.0
      %3340 = vmatpush1.msra.mxu0 0.0
      %3341 = vmatprep.subr.mxu0 0.0
      %3342 = vmatpush1.msra.mxu0 0.0
      %3343 = vmatprep.subr.mxu0 0.0
      %3344 = vmatpush1.msra.mxu0 0.0
      %3345 = vmatprep.subr.mxu0 0.0
      %v3346 = vand.u32 %v3133, 4294901760
      %v3347 = vsub.f32 %v3133, %v3346
      %3348 = vmatpush1.msra.mxu0 %v3347
      %3349 = vmatprep.subr.mxu0 0.0
      %v3350 = vand.u32 %v3132, 4294901760
      %v3351 = vsub.f32 %v3132, %v3350
      %3352 = vmatpush1.msra.mxu0 %v3351
      %3353 = vmatprep.subr.mxu0 0.0
      %3354 = vmatpush2.msra.mxu0 0.0
      %3355 = vmatprep.subr.mxu0 0.0
      %3356 = vmatpush2.msra.mxu0 0.0
      %3357 = vmatprep.subr.mxu0 0.0
      %3358 = vmatpush2.msra.mxu0 0.0
      %3359 = vmatprep.subr.mxu0 0.0
      %3360 = vmatpush2.msra.mxu0 0.0
      %3361 = vmatprep.subr.mxu0 0.0
      %3362 = vmatpush2.msra.mxu0 0.0
      %3363 = vmatprep.subr.mxu0 0.0
      %3364 = vmatpush2.msra.mxu0 0.0
      %3365 = vmatprep.subr.mxu0 0.0
      %3366 = vmatpush2.msra.mxu0 0.0
      %3367 = vmatprep.subr.mxu0 0.0
      %3368 = vmatpush2.msra.mxu0 0.0
      %3369 = vmatprep.subr.mxu0 0.0
      %3370 = vmatpush2.msra.mxu0 0.0
      %3371 = vmatprep.subr.mxu0 0.0
      %3372 = vmatpush2.msra.mxu0 0.0
      %3373 = vmatprep.subr.mxu0 0.0
      %3374 = vmatpush2.msra.mxu0 0.0
      %3375 = vmatprep.subr.mxu0 0.0
      %3376 = vmatpush2.msra.mxu0 0.0
      %3377 = vmatprep.subr.mxu0 0.0
      %3378 = vmatpush2.msra.mxu0 0.0
      %3379 = vmatprep.subr.mxu0 0.0
      %3380 = vmatpush2.msra.mxu0 0.0
      %3381 = vmatprep.subr.mxu0 0.0
      %3382 = vmatpush2.msra.mxu0 0.0
      %3383 = vmatprep.subr.mxu0 0.0
      %3384 = vmatpush2.msra.mxu0 0.0
      %3385 = vmatprep.mubr.f32.mxu0 0.0
      %v3386 = vand.u32 %v3138, 4294901760
      %v3387 = vsub.f32 %v3138, %v3386
      %3388 = vmatmul.mubr.f32.gmra.mxu0 %v3387
      %v3389 = vpop.f32.mrf.mxu0
      %v3390 = vadd.f32 %v3308, %v3389
      %v3391 = vpop.f32.mrf.mxu0
      %3392 = vmatprep.mubr.f32.mxu0 0.0
      %v3393 = vand.u32 %v3141, 4294901760
      %v3394 = vsub.f32 %v3141, %v3393
      %3395 = vmatmul.mubr.f32.gmra.mxu0 %v3394
      %v3396 = vpop.f32.mrf.mxu0
      %v3397 = vadd.f32 %v3314, %v3396
      %v3398 = vpop.f32.mrf.mxu0
      %3399 = vdwg.mxu0
      %3400 = vmatprep.subr.mxu0 0.0
      %3401 = vmatpush1.msra.mxu0 0.0
      %3402 = vmatprep.subr.mxu0 0.0
      %3403 = vmatpush1.msra.mxu0 0.0
      %3404 = vmatprep.subr.mxu0 0.0
      %3405 = vmatpush1.msra.mxu0 0.0
      %3406 = vmatprep.subr.mxu0 0.0
      %3407 = vmatpush1.msra.mxu0 0.0
      %3408 = vmatprep.subr.mxu0 0.0
      %3409 = vmatpush1.msra.mxu0 0.0
      %3410 = vmatprep.subr.mxu0 0.0
      %3411 = vmatpush1.msra.mxu0 0.0
      %3412 = vmatprep.subr.mxu0 0.0
      %3413 = vmatpush1.msra.mxu0 0.0
      %3414 = vmatprep.subr.mxu0 0.0
      %3415 = vmatpush1.msra.mxu0 0.0
      %3416 = vmatprep.subr.mxu0 0.0
      %3417 = vmatpush1.msra.mxu0 0.0
      %3418 = vmatprep.subr.mxu0 0.0
      %3419 = vmatpush1.msra.mxu0 0.0
      %3420 = vmatprep.subr.mxu0 0.0
      %3421 = vmatpush1.msra.mxu0 0.0
      %3422 = vmatprep.subr.mxu0 0.0
      %3423 = vmatpush1.msra.mxu0 0.0
      %3424 = vmatprep.subr.mxu0 0.0
      %3425 = vmatpush1.msra.mxu0 0.0
      %3426 = vmatprep.subr.mxu0 0.0
      %3427 = vmatpush1.msra.mxu0 0.0
      %3428 = vmatprep.subr.mxu0 0.0
      %v3429 = vand.u32 %v3133, 4294901760
      %3430 = vmatpush1.msra.mxu0 %v3429
      %3431 = vmatprep.subr.mxu0 0.0
      %v3432 = vand.u32 %v3132, 4294901760
      %3433 = vmatpush1.msra.mxu0 %v3432
      %3434 = vmatprep.subr.mxu0 0.0
      %3435 = vmatpush2.msra.mxu0 0.0
      %3436 = vmatprep.subr.mxu0 0.0
      %3437 = vmatpush2.msra.mxu0 0.0
      %3438 = vmatprep.subr.mxu0 0.0
      %3439 = vmatpush2.msra.mxu0 0.0
      %3440 = vmatprep.subr.mxu0 0.0
      %3441 = vmatpush2.msra.mxu0 0.0
      %3442 = vmatprep.subr.mxu0 0.0
      %3443 = vmatpush2.msra.mxu0 0.0
      %3444 = vmatprep.subr.mxu0 0.0
      %3445 = vmatpush2.msra.mxu0 0.0
      %3446 = vmatprep.subr.mxu0 0.0
      %3447 = vmatpush2.msra.mxu0 0.0
      %3448 = vmatprep.subr.mxu0 0.0
      %3449 = vmatpush2.msra.mxu0 0.0
      %3450 = vmatprep.subr.mxu0 0.0
      %3451 = vmatpush2.msra.mxu0 0.0
      %3452 = vmatprep.subr.mxu0 0.0
      %3453 = vmatpush2.msra.mxu0 0.0
      %3454 = vmatprep.subr.mxu0 0.0
      %3455 = vmatpush2.msra.mxu0 0.0
      %3456 = vmatprep.subr.mxu0 0.0
      %3457 = vmatpush2.msra.mxu0 0.0
      %3458 = vmatprep.subr.mxu0 0.0
      %3459 = vmatpush2.msra.mxu0 0.0
      %3460 = vmatprep.subr.mxu0 0.0
      %3461 = vmatpush2.msra.mxu0 0.0
      %3462 = vmatprep.subr.mxu0 0.0
      %3463 = vmatpush2.msra.mxu0 0.0
      %3464 = vmatprep.subr.mxu0 0.0
      %3465 = vmatpush2.msra.mxu0 0.0
      %3466 = vmatprep.mubr.f32.mxu0 0.0
      %v3467 = vand.u32 %v3138, 4294901760
      %v3468 = vsub.f32 %v3138, %v3467
      %v3469 = vand.u32 %v3468, 4294901760
      %3470 = vmatmul.mubr.f32.gmra.mxu0 %v3469
      %v3471 = vpop.f32.mrf.mxu0
      %v3472 = vadd.f32 %v3390, %v3471
      %v3473 = vpop.f32.mrf.mxu0
      %3474 = vmatprep.mubr.f32.mxu0 0.0
      %v3475 = vand.u32 %v3141, 4294901760
      %v3476 = vsub.f32 %v3141, %v3475
      %v3477 = vand.u32 %v3476, 4294901760
      %3478 = vmatmul.mubr.f32.gmra.mxu0 %v3477
      %v3479 = vpop.f32.mrf.mxu0
      %v3480 = vadd.f32 %v3397, %v3479
      %v3481 = vpop.f32.mrf.mxu0
      %3482 = vdwg.mxu0
      %3483 = vmatprep.subr.mxu0 0.0
      %3484 = vmatpush1.msra.mxu0 0.0
      %3485 = vmatprep.subr.mxu0 0.0
      %3486 = vmatpush1.msra.mxu0 0.0
      %3487 = vmatprep.subr.mxu0 0.0
      %3488 = vmatpush1.msra.mxu0 0.0
      %3489 = vmatprep.subr.mxu0 0.0
      %3490 = vmatpush1.msra.mxu0 0.0
      %3491 = vmatprep.subr.mxu0 0.0
      %3492 = vmatpush1.msra.mxu0 0.0
      %3493 = vmatprep.subr.mxu0 0.0
      %3494 = vmatpush1.msra.mxu0 0.0
      %3495 = vmatprep.subr.mxu0 0.0
      %3496 = vmatpush1.msra.mxu0 0.0
      %3497 = vmatprep.subr.mxu0 0.0
      %3498 = vmatpush1.msra.mxu0 0.0
      %3499 = vmatprep.subr.mxu0 0.0
      %3500 = vmatpush1.msra.mxu0 0.0
      %3501 = vmatprep.subr.mxu0 0.0
      %3502 = vmatpush1.msra.mxu0 0.0
      %3503 = vmatprep.subr.mxu0 0.0
      %3504 = vmatpush1.msra.mxu0 0.0
      %3505 = vmatprep.subr.mxu0 0.0
      %3506 = vmatpush1.msra.mxu0 0.0
      %3507 = vmatprep.subr.mxu0 0.0
      %3508 = vmatpush1.msra.mxu0 0.0
      %3509 = vmatprep.subr.mxu0 0.0
      %3510 = vmatpush1.msra.mxu0 0.0
      %3511 = vmatprep.subr.mxu0 0.0
      %v3512 = vand.u32 %v3133, 4294901760
      %v3513 = vsub.f32 %v3133, %v3512
      %v3514 = vand.u32 %v3513, 4294901760
      %3515 = vmatpush1.msra.mxu0 %v3514
      %3516 = vmatprep.subr.mxu0 0.0
      %v3517 = vand.u32 %v3132, 4294901760
      %v3518 = vsub.f32 %v3132, %v3517
      %v3519 = vand.u32 %v3518, 4294901760
      %3520 = vmatpush1.msra.mxu0 %v3519
      %3521 = vmatprep.subr.mxu0 0.0
      %3522 = vmatpush2.msra.mxu0 0.0
      %3523 = vmatprep.subr.mxu0 0.0
      %3524 = vmatpush2.msra.mxu0 0.0
      %3525 = vmatprep.subr.mxu0 0.0
      %3526 = vmatpush2.msra.mxu0 0.0
      %3527 = vmatprep.subr.mxu0 0.0
      %3528 = vmatpush2.msra.mxu0 0.0
      %3529 = vmatprep.subr.mxu0 0.0
      %3530 = vmatpush2.msra.mxu0 0.0
      %3531 = vmatprep.subr.mxu0 0.0
      %3532 = vmatpush2.msra.mxu0 0.0
      %3533 = vmatprep.subr.mxu0 0.0
      %3534 = vmatpush2.msra.mxu0 0.0
      %3535 = vmatprep.subr.mxu0 0.0
      %3536 = vmatpush2.msra.mxu0 0.0
      %3537 = vmatprep.subr.mxu0 0.0
      %3538 = vmatpush2.msra.mxu0 0.0
      %3539 = vmatprep.subr.mxu0 0.0
      %3540 = vmatpush2.msra.mxu0 0.0
      %3541 = vmatprep.subr.mxu0 0.0
      %3542 = vmatpush2.msra.mxu0 0.0
      %3543 = vmatprep.subr.mxu0 0.0
      %3544 = vmatpush2.msra.mxu0 0.0
      %3545 = vmatprep.subr.mxu0 0.0
      %3546 = vmatpush2.msra.mxu0 0.0
      %3547 = vmatprep.subr.mxu0 0.0
      %3548 = vmatpush2.msra.mxu0 0.0
      %3549 = vmatprep.subr.mxu0 0.0
      %3550 = vmatpush2.msra.mxu0 0.0
      %3551 = vmatprep.subr.mxu0 0.0
      %3552 = vmatpush2.msra.mxu0 0.0
      %3553 = vmatprep.mubr.f32.mxu0 0.0
      %v3554 = vand.u32 %v3138, 4294901760
      %3555 = vmatmul.mubr.f32.gmra.mxu0 %v3554
      %v3556 = vpop.f32.mrf.mxu0
      %v3557 = vadd.f32 %v3472, %v3556
      %v3558 = vpop.f32.mrf.mxu0
      %3559 = vmatprep.mubr.f32.mxu0 0.0
      %v3560 = vand.u32 %v3141, 4294901760
      %3561 = vmatmul.mubr.f32.gmra.mxu0 %v3560
      %v3562 = vpop.f32.mrf.mxu0
      %v3563 = vadd.f32 %v3480, %v3562
      %v3564 = vpop.f32.mrf.mxu0
      %3565 = vdwg.mxu0
      %3566 = vmatprep.subr.mxu0 0.0
      %3567 = vmatpush1.msra.mxu0 0.0
      %3568 = vmatprep.subr.mxu0 0.0
      %3569 = vmatpush1.msra.mxu0 0.0
      %3570 = vmatprep.subr.mxu0 0.0
      %3571 = vmatpush1.msra.mxu0 0.0
      %3572 = vmatprep.subr.mxu0 0.0
      %3573 = vmatpush1.msra.mxu0 0.0
      %3574 = vmatprep.subr.mxu0 0.0
      %3575 = vmatpush1.msra.mxu0 0.0
      %3576 = vmatprep.subr.mxu0 0.0
      %3577 = vmatpush1.msra.mxu0 0.0
      %3578 = vmatprep.subr.mxu0 0.0
      %3579 = vmatpush1.msra.mxu0 0.0
      %3580 = vmatprep.subr.mxu0 0.0
      %3581 = vmatpush1.msra.mxu0 0.0
      %3582 = vmatprep.subr.mxu0 0.0
      %3583 = vmatpush1.msra.mxu0 0.0
      %3584 = vmatprep.subr.mxu0 0.0
      %3585 = vmatpush1.msra.mxu0 0.0
      %3586 = vmatprep.subr.mxu0 0.0
      %3587 = vmatpush1.msra.mxu0 0.0
      %3588 = vmatprep.subr.mxu0 0.0
      %3589 = vmatpush1.msra.mxu0 0.0
      %3590 = vmatprep.subr.mxu0 0.0
      %3591 = vmatpush1.msra.mxu0 0.0
      %3592 = vmatprep.subr.mxu0 0.0
      %3593 = vmatpush1.msra.mxu0 0.0
      %3594 = vmatprep.subr.mxu0 0.0
      %v3595 = vand.u32 %v3133, 4294901760
      %3596 = vmatpush1.msra.mxu0 %v3595
      %3597 = vmatprep.subr.mxu0 0.0
      %v3598 = vand.u32 %v3132, 4294901760
      %3599 = vmatpush1.msra.mxu0 %v3598
      %3600 = vmatprep.subr.mxu0 0.0
      %3601 = vmatpush2.msra.mxu0 0.0
      %3602 = vmatprep.subr.mxu0 0.0
      %3603 = vmatpush2.msra.mxu0 0.0
      %3604 = vmatprep.subr.mxu0 0.0
      %3605 = vmatpush2.msra.mxu0 0.0
      %3606 = vmatprep.subr.mxu0 0.0
      %3607 = vmatpush2.msra.mxu0 0.0
      %3608 = vmatprep.subr.mxu0 0.0
      %3609 = vmatpush2.msra.mxu0 0.0
      %3610 = vmatprep.subr.mxu0 0.0
      %3611 = vmatpush2.msra.mxu0 0.0
      %3612 = vmatprep.subr.mxu0 0.0
      %3613 = vmatpush2.msra.mxu0 0.0
      %3614 = vmatprep.subr.mxu0 0.0
      %3615 = vmatpush2.msra.mxu0 0.0
      %3616 = vmatprep.subr.mxu0 0.0
      %3617 = vmatpush2.msra.mxu0 0.0
      %3618 = vmatprep.subr.mxu0 0.0
      %3619 = vmatpush2.msra.mxu0 0.0
      %3620 = vmatprep.subr.mxu0 0.0
      %3621 = vmatpush2.msra.mxu0 0.0
      %3622 = vmatprep.subr.mxu0 0.0
      %3623 = vmatpush2.msra.mxu0 0.0
      %3624 = vmatprep.subr.mxu0 0.0
      %3625 = vmatpush2.msra.mxu0 0.0
      %3626 = vmatprep.subr.mxu0 0.0
      %3627 = vmatpush2.msra.mxu0 0.0
      %3628 = vmatprep.subr.mxu0 0.0
      %3629 = vmatpush2.msra.mxu0 0.0
      %3630 = vmatprep.subr.mxu0 0.0
      %3631 = vmatpush2.msra.mxu0 0.0
      %3632 = vmatprep.mubr.f32.mxu0 0.0
      %v3633 = vand.u32 %v3138, 4294901760
      %3634 = vmatmul.mubr.f32.gmra.mxu0 %v3633
      %v3635 = vpop.f32.mrf.mxu0
      %v3636 = vadd.f32 %v3557, %v3635
      %v3637 = vpop.f32.mrf.mxu0
      %3638 = vmatprep.mubr.f32.mxu0 0.0
      %v3639 = vand.u32 %v3141, 4294901760
      %3640 = vmatmul.mubr.f32.gmra.mxu0 %v3639
      %v3641 = vpop.f32.mrf.mxu0
      %v3642 = vadd.f32 %v3563, %v3641
      %v3643 = vpop.f32.mrf.mxu0
      %3644 = vdwg.mxu0
      %v3645 = vxor.u32 %v3636, 2147483648
      %v3646 = vxor.u32 %v3642, 2147483648
      %v3647 = vmul.f32 %v3645, 1.442695
      %v3648 = vpow.pop %v3647
      %v3649 = vmul.f32 %v3646, 1.442695
      %v3650 = vpow.pop %v3649
      %v3651 = vadd.f32 %v3648, 1.0
      %v3652 = vadd.f32 %v3650, 1.0
      %v3653 = vrcp.pop %v3651
      %v3654 = vmul.f32 1.0, %v3653
      %v3655 = vrcp.pop %v3652
      %v3656 = vmul.f32 1.0, %v3655
      %vm3657 = vcmask 7168
      %3658 = vst.msk [vmem:[%s305] sm:$0xff] %vm3657, %v3654
      %vm3659 = vcmask 3072
      %3660 = vst.msk [vmem:[%s305 + $0x8] sm:$0xf] %vm3659, %v3656
      %p3661 = scmp.lt.s32.totalorder %s19, 1
      %s3662 = scalar_select %p3661, %s19, 1
      %s3663 = smul.addr %s3662, 2
      %s3664 = smul.addr %s3663, 8
      %s3665 = scalar_lea.vmem %s8, %s3664
      // Predicated region
      $region53: #{tpu_custom_call.1} parent=51 // pred_check
        %p3666 = pneg %p210
      $region54: #{tpu_custom_call.1} parent=51 // pred_check_branch
        %3668 = sbr.rel (%p3666) target = $region56
      $region55: #{tpu_custom_call.1} parent=51 // pred_region
        _
      $region56: #{tpu_custom_call.1} parent=51 // pred_fallthru
        _
    $region52: #{tpu_custom_call.1} parent=5 // pred_fallthru
      _
    %p3669 = scmp.le.s32.totalorder 2, %s14
    // Predicated region
    $region57: #{tpu_custom_call.1} parent=5 // pred_check
      %p3670 = pneg %p3669
    $region58: #{tpu_custom_call.1} parent=5 // pred_check_branch
      %3672 = sbr.rel (%p3670) target = $region60
    $region59: #{tpu_custom_call.1} parent=5 // pred_region
      %s3673 = ssub.s32 %s14, 2
      // Predicated region
      $region61: #{tpu_custom_call.1} parent=59 // pred_check
        %p3674 = pneg %p216
      $region62: #{tpu_custom_call.1} parent=59 // pred_check_branch
        %3676 = sbr.rel (%p3674) target = $region64
      $region63: #{tpu_custom_call.1} parent=59 // pred_region
        %p3677 = scmp.lt.s32.totalorder %s20, 1
        %s3678 = scalar_select %p3677, %s20, 1
        %s3679 = smul.addr %s3678, 2
        %s3680 = smul.addr %s3679, 8
        %s3681 = scalar_lea.vmem %s8, %s3680
      $region64: #{tpu_custom_call.1} parent=59 // pred_fallthru
        _
    $region60: #{tpu_custom_call.1} parent=5 // pred_fallthru
      _
  $region6: #{tpu_custom_call.1} parent=0 // loop_footer
    %s18 = sadd.s32 1, %s14
  $region7: #{tpu_custom_call.1} parent=0 // loop_footer_branch
    %13 = sbr.rel target = $region3
  $region8: #{tpu_custom_call.1} parent=0 // loop_exit
    _

</llo_original>
